<compile_context>
chip_gen: v7x
topology: tpu7x:2x2x1
jax: 0.10.0
libtpu: 0.0.40
codegen_flags: <defaults>
</compile_context>

<pallas_src>
import math
import functools

import jax
import jax.numpy as jnp
from jax.experimental import pallas as pl
from jax.experimental.pallas import tpu as pltpu

# ----------------------------- config ---------------------------------------
VOCAB = 100
MAX_POS = 32
HIDDEN = 64
N_HEADS = 4
HEAD_DIM = HIDDEN // N_HEADS
FFN_DIM = 128
N_LAYERS = 2
NUM_LABELS = 3
LN_EPS = 1e-12          # DistilBert layer_norm_eps
OUT_PAD = 128           # lane-dense padded logits width (sliced to NUM_LABELS outside)

# MXU operand dtype. float32 preserves exact PyTorch-f32 numerics at these toy
# shapes; flip to bf16 on v5e/v6e at real sizes (keep vector math in f32).
MXU_DTYPE = jnp.float32

# --- packed weight-slab layout (static, 128-lane-aligned column offsets) ----
MAT_ROWS = max(HIDDEN, FFN_DIM)          # 128
WQKV_OFF = 0                             # (H, 3H)   cols [  0, 192)
WO_OFF = 256                             # (H, H)    cols [256, 320)
W1_OFF = 384                             # (H, FFN)  cols [384, 512)
W2_OFF = 512                             # (FFN, H)  cols [512, 576)
MAT_COLS = 640

V_BQKV, V_BO, V_B1, V_B2, V_SA_G, V_SA_B, V_OUT_G, V_OUT_B = range(8)
VEC_COLS = 3 * HIDDEN                    # 192 >= max(3H, FFN, H)

HEAD_ROW_PRE_W = 0                       # rows [0, H)   cols [0, H)
HEAD_ROW_CLS_W = HIDDEN                  # rows [H, 2H)  cols [0, OUT_PAD) zero-padded
HEAD_ROW_EMB_G = 2 * HIDDEN
HEAD_ROW_EMB_B = 2 * HIDDEN + 1
HEAD_ROW_PRE_B = 2 * HIDDEN + 2
HEAD_ROW_CLS_B = 2 * HIDDEN + 3
HEAD_ROWS = 136                          # padded to a sublane multiple of 8


# ----------------------------- kernel helpers --------------------------------
def _layernorm(h, g, b):
    mean = jnp.mean(h, axis=-1, keepdims=True)
    var = jnp.mean(jnp.square(h - mean), axis=-1, keepdims=True)
    return (h - mean) * jax.lax.rsqrt(var + LN_EPS) * g + b


def _mm(a, b):
    # f32 accumulation on the MXU regardless of operand dtype.
    return jnp.dot(a.astype(MXU_DTYPE), b.astype(MXU_DTYPE),
                   preferred_element_type=jnp.float32)


# ----------------------------- fused kernel ----------------------------------
def _encoder_kernel(emb_ref, mask_ref, mats_ref, vecs_ref, head_ref, logits_ref):
    TB, S, _ = emb_ref.shape
    neg = jnp.finfo(jnp.float32).min
    scale = 1.0 / math.sqrt(HEAD_DIM)

    # Attention-mask bias computed ONCE per block (not per head/layer):
    # masked_fill(mask==0, finfo.min) == add finfo.min on masked key columns.
    bias = jnp.where(mask_ref[...] == 0.0, neg, 0.0)            # (TB, 1, S)

    # --- embeddings LayerNorm (dropout = identity in eval) ---
    emb_g = head_ref[HEAD_ROW_EMB_G:HEAD_ROW_EMB_G + 1, 0:HIDDEN]
    emb_b = head_ref[HEAD_ROW_EMB_B:HEAD_ROW_EMB_B + 1, 0:HIDDEN]
    x = _layernorm(emb_ref[...].reshape(TB * S, HIDDEN), emb_g, emb_b)

    # --- transformer layers (unrolled; slab slices are static & lane-aligned) ---
    for l in range(N_LAYERS):
        wqkv = mats_ref[l, 0:HIDDEN, WQKV_OFF:WQKV_OFF + 3 * HIDDEN]
        wo = mats_ref[l, 0:HIDDEN, WO_OFF:WO_OFF + HIDDEN]
        w1 = mats_ref[l, 0:HIDDEN, W1_OFF:W1_OFF + FFN_DIM]
        w2 = mats_ref[l, 0:FFN_DIM, W2_OFF:W2_OFF + HIDDEN]
        bqkv = vecs_ref[l, V_BQKV:V_BQKV + 1, 0:3 * HIDDEN]
        bo = vecs_ref[l, V_BO:V_BO + 1, 0:HIDDEN]
        b1 = vecs_ref[l, V_B1:V_B1 + 1, 0:FFN_DIM]
        b2 = vecs_ref[l, V_B2:V_B2 + 1, 0:HIDDEN]
        sa_g = vecs_ref[l, V_SA_G:V_SA_G + 1, 0:HIDDEN]
        sa_b = vecs_ref[l, V_SA_B:V_SA_B + 1, 0:HIDDEN]
        out_g = vecs_ref[l, V_OUT_G:V_OUT_G + 1, 0:HIDDEN]
        out_b = vecs_ref[l, V_OUT_B:V_OUT_B + 1, 0:HIDDEN]

        # Fused QKV projection: one lane-dense (TB*S, 3H) matmul, kept in vregs.
        qkv = (_mm(x, wqkv) + bqkv).reshape(TB, S, 3 * HIDDEN)

        # Per-head attention, batched over the TB sequences in this block.
        ctx_heads = []
        for h in range(N_HEADS):
            lo = h * HEAD_DIM
            q = qkv[:, :, lo:lo + HEAD_DIM]                               # (TB, S, Dh)
            k = qkv[:, :, HIDDEN + lo:HIDDEN + lo + HEAD_DIM]
            v = qkv[:, :, 2 * HIDDEN + lo:2 * HIDDEN + lo + HEAD_DIM]
            scores = jnp.einsum(
                'bqd,bkd->bqk',
                (q * scale).astype(MXU_DTYPE), k.astype(MXU_DTYPE),
                preferred_element_type=jnp.float32) + bias                # (TB, S, S)
            # Hand-rolled softmax; divide goes to the EUP via approx reciprocal.
            p = jnp.exp(scores - jnp.max(scores, axis=-1, keepdims=True))
            w = p * pl.reciprocal(jnp.sum(p, axis=-1, keepdims=True), approx=True)
            ctx_heads.append(jnp.einsum(
                'bqk,bkd->bqd', w.astype(MXU_DTYPE), v.astype(MXU_DTYPE),
                preferred_element_type=jnp.float32))                      # (TB, S, Dh)

        # Merge heads with ONE concat per layer (no masked partial-lane stores).
        ctx = jnp.concatenate(ctx_heads, axis=-1).reshape(TB * S, HIDDEN)
        x = _layernorm(_mm(ctx, wo) + bo + x, sa_g, sa_b)

        # FFN with exact (erf) GELU, as in HF DistilBert.
        h1 = _mm(x, w1) + b1
        h1 = 0.5 * h1 * (1.0 + jax.lax.erf(h1 * (1.0 / math.sqrt(2.0))))
        x = _layernorm(_mm(h1, w2) + b2 + x, out_g, out_b)

    # --- CLS pooling for the whole block, one classifier matmul pair ---
    pooled = jnp.concatenate([x[b * S:b * S + 1, :] for b in range(TB)], axis=0)  # (TB, H)
    pre_w = head_ref[HEAD_ROW_PRE_W:HEAD_ROW_PRE_W + HIDDEN, 0:HIDDEN]
    pre_b = head_ref[HEAD_ROW_PRE_B:HEAD_ROW_PRE_B + 1, 0:HIDDEN]
    cls_w = head_ref[HEAD_ROW_CLS_W:HEAD_ROW_CLS_W + HIDDEN, :]   # (H, OUT_PAD) zero-padded
    cls_b = head_ref[HEAD_ROW_CLS_B:HEAD_ROW_CLS_B + 1, :]        # (1, OUT_PAD) zero-padded
    hcls = jnp.maximum(_mm(pooled, pre_w) + pre_b, 0.0)           # ReLU; dropout = identity
    # Lane-dense padded store; wrapper slices off NUM_LABELS columns.
    logits_ref[...] = (_mm(hcls, cls_w) + cls_b).astype(logits_ref.dtype)


# ----------------------------- pallas_call wrapper ---------------------------
def encoder_forward(packed, emb, mask, *, block_seqs=None):
    B, S, H = emb.shape
    assert H == HIDDEN
    if block_seqs is None:
        # >= 2 grid steps at realistic batch sizes so v7x's two TensorCores both
        # get work (dimension_semantics="parallel"); a single step for tiny
        # batches, since the ~0.35us per-step pipeline overhead dominates on
        # single-TC v5e/v6e.
        block_seqs = B // 2 if (B >= 4 and B % 2 == 0) else B
    assert B % block_seqs == 0
    TB = block_seqs
    n_blocks = B // TB

    mats, vecs, head = packed["mats"], packed["vecs"], packed["head"]
    logits_pad = pl.pallas_call(
        _encoder_kernel,
        out_shape=jax.ShapeDtypeStruct((B, OUT_PAD), jnp.float32),
        grid=(n_blocks,),
        in_specs=[
            pl.BlockSpec((TB, S, H), lambda i: (i, 0, 0)),        # embeddings block
            pl.BlockSpec((TB, 1, S), lambda i: (i, 0, 0)),        # attention mask block
            pl.BlockSpec(mats.shape, lambda i: (0, 0, 0)),        # per-layer matrices slab
            pl.BlockSpec(vecs.shape, lambda i: (0, 0, 0)),        # per-layer bias/LN slab
            pl.BlockSpec(head.shape, lambda i: (0, 0)),           # emb-LN + classifier slab
        ],
        out_specs=pl.BlockSpec((TB, OUT_PAD), lambda i: (i, 0)),  # lane-dense padded logits
        compiler_params=pltpu.CompilerParams(
            dimension_semantics=("parallel",)),                   # v7x: blocks across 2 TCs
    )(emb, mask, mats, vecs, head)
    return logits_pad[:, :NUM_LABELS]


# ----------------------------- parameters -----------------------------------
def init_params(key):
    keys = iter(jax.random.split(key, 128))

    def w(shape):
        return 0.02 * jax.random.normal(next(keys), shape, jnp.float32)

    def zeros(shape):
        return jnp.zeros(shape, jnp.float32)

    def ones(shape):
        return jnp.ones(shape, jnp.float32)

    wqkv, bqkv, wo, bo = [], [], [], []
    sa_g, sa_b, w1, b1, w2, b2, out_g, out_b = ([] for _ in range(8))
    for _ in range(N_LAYERS):
        wq, wk, wv = w((HIDDEN, HIDDEN)), w((HIDDEN, HIDDEN)), w((HIDDEN, HIDDEN))
        wqkv.append(jnp.concatenate([wq, wk, wv], axis=1))    # (H, 3H) fused QKV
        bqkv.append(zeros((1, 3 * HIDDEN)))
        wo.append(w((HIDDEN, HIDDEN)))
        bo.append(zeros((1, HIDDEN)))
        sa_g.append(ones((1, HIDDEN)))
        sa_b.append(zeros((1, HIDDEN)))
        w1.append(w((HIDDEN, FFN_DIM)))
        b1.append(zeros((1, FFN_DIM)))
        w2.append(w((FFN_DIM, HIDDEN)))
        b2.append(zeros((1, HIDDEN)))
        out_g.append(ones((1, HIDDEN)))
        out_b.append(zeros((1, HIDDEN)))

    def stack(xs):
        return jnp.stack(xs, axis=0)

    return {
        "word_emb": w((VOCAB, HIDDEN)),
        "pos_emb": w((MAX_POS, HIDDEN)),
        "emb_ln_g": ones((1, HIDDEN)), "emb_ln_b": zeros((1, HIDDEN)),
        "wqkv": stack(wqkv), "bqkv": stack(bqkv),
        "wo": stack(wo), "bo": stack(bo),
        "sa_ln_g": stack(sa_g), "sa_ln_b": stack(sa_b),
        "w1": stack(w1), "b1": stack(b1),
        "w2": stack(w2), "b2": stack(b2),
        "out_ln_g": stack(out_g), "out_ln_b": stack(out_b),
        # classifier head (weights stored as (in, out) == torch weight.T)
        "pre_w": w((HIDDEN, HIDDEN)), "pre_b": zeros((1, HIDDEN)),
        "cls_w": w((HIDDEN, NUM_LABELS)), "cls_b": zeros((1, NUM_LABELS)),
    }


def pack_params(p):
    """Pack the 18 weight tensors into 3 slabs (done once, outside jit)."""
    mats = jnp.zeros((N_LAYERS, MAT_ROWS, MAT_COLS), jnp.float32)
    vecs = jnp.zeros((N_LAYERS, 8, VEC_COLS), jnp.float32)
    for l in range(N_LAYERS):
        mats = mats.at[l, :HIDDEN, WQKV_OFF:WQKV_OFF + 3 * HIDDEN].set(p["wqkv"][l])
        mats = mats.at[l, :HIDDEN, WO_OFF:WO_OFF + HIDDEN].set(p["wo"][l])
        mats = mats.at[l, :HIDDEN, W1_OFF:W1_OFF + FFN_DIM].set(p["w1"][l])
        mats = mats.at[l, :FFN_DIM, W2_OFF:W2_OFF + HIDDEN].set(p["w2"][l])
        vecs = vecs.at[l, V_BQKV, 0:3 * HIDDEN].set(p["bqkv"][l][0])
        vecs = vecs.at[l, V_BO, 0:HIDDEN].set(p["bo"][l][0])
        vecs = vecs.at[l, V_B1, 0:FFN_DIM].set(p["b1"][l][0])
        vecs = vecs.at[l, V_B2, 0:HIDDEN].set(p["b2"][l][0])
        vecs = vecs.at[l, V_SA_G, 0:HIDDEN].set(p["sa_ln_g"][l][0])
        vecs = vecs.at[l, V_SA_B, 0:HIDDEN].set(p["sa_ln_b"][l][0])
        vecs = vecs.at[l, V_OUT_G, 0:HIDDEN].set(p["out_ln_g"][l][0])
        vecs = vecs.at[l, V_OUT_B, 0:HIDDEN].set(p["out_ln_b"][l][0])
    head = jnp.zeros((HEAD_ROWS, OUT_PAD), jnp.float32)
    head = head.at[HEAD_ROW_PRE_W:HEAD_ROW_PRE_W + HIDDEN, 0:HIDDEN].set(p["pre_w"])
    head = head.at[HEAD_ROW_CLS_W:HEAD_ROW_CLS_W + HIDDEN, 0:NUM_LABELS].set(p["cls_w"])
    head = head.at[HEAD_ROW_EMB_G, 0:HIDDEN].set(p["emb_ln_g"][0])
    head = head.at[HEAD_ROW_EMB_B, 0:HIDDEN].set(p["emb_ln_b"][0])
    head = head.at[HEAD_ROW_PRE_B, 0:HIDDEN].set(p["pre_b"][0])
    head = head.at[HEAD_ROW_CLS_B, 0:NUM_LABELS].set(p["cls_b"][0])
    return {"word_emb": p["word_emb"], "pos_emb": p["pos_emb"],
            "mats": mats, "vecs": vecs, "head": head}


# ----------------------------- forward --------------------------------------
def distilbert_router_forward(packed, input_ids, attention_mask):
    B, S = input_ids.shape
    # Embedding gathers are data-dependent -> plain-JAX glue; everything else
    # (LayerNorms, attention, FFN, head) runs inside the single fused kernel.
    we = packed["word_emb"][input_ids]                     # (B, S, H)
    pe = packed["pos_emb"][:S][None]                       # (1, S, H)
    emb = (we + pe).astype(jnp.float32)
    mask = attention_mask.astype(jnp.float32).reshape(B, 1, S)
    logits = encoder_forward(packed, emb, mask)            # (B, NUM_LABELS)
    # TODO(synk): CrossEntropyLoss branch (labels is None in this synthetic run).
    return {"logits": logits}


# ----------------------------- main ------------------------------------------
if __name__ == "__main__":
    key = jax.random.PRNGKey(0)
    k_param, k_ids = jax.random.split(key)

    params = init_params(k_param)
    packed = pack_params(params)

    B, S = 2, 8
    input_ids = jax.random.randint(k_ids, (B, S), 0, VOCAB, dtype=jnp.int32)
    attention_mask = jnp.ones((B, S), jnp.int32).at[1, -2:].set(0)  # pad last 2 of row 1

    fwd = jax.jit(functools.partial(distilbert_router_forward, packed))
    out = fwd(input_ids, attention_mask)
    logits = jax.block_until_ready(out["logits"])

    assert logits.shape == (B, NUM_LABELS)
    assert bool(jnp.all(jnp.isfinite(logits)))
    print("KERNEL_OK")
</pallas_src>

<mosaic_0001>
module attributes {stable_mosaic.version = 11 : i64} {
  func.func @_encoder_kernel(%arg0: i32, %arg1: memref<2x8x64xf32, #tpu.memory_space<vmem>>, %arg2: memref<2x1x8xf32, #tpu.memory_space<vmem>>, %arg3: memref<2x128x640xf32, #tpu.memory_space<vmem>>, %arg4: memref<2x8x192xf32, #tpu.memory_space<vmem>>, %arg5: memref<136x128xf32, #tpu.memory_space<vmem>>, %arg6: memref<2x128xf32, #tpu.memory_space<vmem>>) attributes {dimension_semantics = [#tpu.dimension_semantics<parallel>], iteration_bounds = array<i64: 1>, scalar_prefetch = 0 : i64, scratch_operands = 0 : i64, tpu.core_type = #tpu.core_type<tc>, window_params = [{transform_indices = @transform_0, window_bounds = array<i64: 2, 8, 64>}, {transform_indices = @transform_1, window_bounds = array<i64: 2, 1, 8>}, {pipeline_mode = #tpu.pipeline_mode<synchronous>, transform_indices = @transform_2, window_bounds = array<i64: 2, 128, 640>}, {pipeline_mode = #tpu.pipeline_mode<synchronous>, transform_indices = @transform_3, window_bounds = array<i64: 2, 8, 192>}, {pipeline_mode = #tpu.pipeline_mode<synchronous>, transform_indices = @transform_4, window_bounds = array<i64: 136, 128>}, {transform_indices = @transform_5, window_bounds = array<i64: 2, 128>}]} {
    %c0 = arith.constant 0 : index
    %c0_0 = arith.constant 0 : index
    %c0_1 = arith.constant 0 : index
    %0 = vector.load %arg2[%c0, %c0_0, %c0_1] : memref<2x1x8xf32, #tpu.memory_space<vmem>>, vector<2x1x8xf32>
    %cst = arith.constant 0.000000e+00 : f32
    %1 = vector.broadcast %cst : f32 to vector<2x1x8xf32>
    %2 = arith.cmpf oeq, %0, %1 : vector<2x1x8xf32>
    %cst_2 = arith.constant -3.40282347E+38 : f32
    %cst_3 = arith.constant 0.000000e+00 : f32
    %3 = vector.broadcast %cst_2 : f32 to vector<2x1x8xf32>
    %4 = vector.broadcast %cst_3 : f32 to vector<2x1x8xf32>
    %5 = arith.select %2, %3, %4 : vector<2x1x8xi1>, vector<2x1x8xf32>
    %c128 = arith.constant 128 : index
    %c0_4 = arith.constant 0 : index
    %6 = vector.load %arg5[%c128, %c0_4] : memref<136x128xf32, #tpu.memory_space<vmem>>, vector<1x64xf32>
    %c129 = arith.constant 129 : index
    %c0_5 = arith.constant 0 : index
    %7 = vector.load %arg5[%c129, %c0_5] : memref<136x128xf32, #tpu.memory_space<vmem>>, vector<1x64xf32>
    %c0_6 = arith.constant 0 : index
    %c0_7 = arith.constant 0 : index
    %c0_8 = arith.constant 0 : index
    %8 = vector.load %arg1[%c0_6, %c0_7, %c0_8] : memref<2x8x64xf32, #tpu.memory_space<vmem>>, vector<2x8x64xf32>
    %9 = vector.shape_cast %8 : vector<2x8x64xf32> to vector<16x64xf32>
    %cst_9 = arith.constant dense<0.000000e+00> : vector<16xf32>
    %10 = vector.multi_reduction <add>, %9, %cst_9 [1] : vector<16x64xf32> to vector<16xf32>
    %11 = vector.shape_cast %10 : vector<16xf32> to vector<16x1xf32>
    %cst_10 = arith.constant 6.400000e+01 : f32
    %12 = vector.broadcast %cst_10 : f32 to vector<16x1xf32>
    %13 = arith.divf %11, %12 : vector<16x1xf32>
    %14 = vector.broadcast %13 : vector<16x1xf32> to vector<16x64xf32>
    %15 = arith.subf %9, %14 : vector<16x64xf32>
    %16 = arith.mulf %15, %15 : vector<16x64xf32>
    %cst_11 = arith.constant dense<0.000000e+00> : vector<16xf32>
    %17 = vector.multi_reduction <add>, %16, %cst_11 [1] : vector<16x64xf32> to vector<16xf32>
    %18 = vector.shape_cast %17 : vector<16xf32> to vector<16x1xf32>
    %cst_12 = arith.constant 6.400000e+01 : f32
    %19 = vector.broadcast %cst_12 : f32 to vector<16x1xf32>
    %20 = arith.divf %18, %19 : vector<16x1xf32>
    %21 = vector.broadcast %13 : vector<16x1xf32> to vector<16x64xf32>
    %22 = arith.subf %9, %21 : vector<16x64xf32>
    %cst_13 = arith.constant 9.99999996E-13 : f32
    %23 = vector.broadcast %cst_13 : f32 to vector<16x1xf32>
    %24 = arith.addf %20, %23 : vector<16x1xf32>
    %25 = math.rsqrt %24 : vector<16x1xf32>
    %26 = vector.broadcast %25 : vector<16x1xf32> to vector<16x64xf32>
    %27 = arith.mulf %22, %26 : vector<16x64xf32>
    %28 = vector.broadcast %6 : vector<1x64xf32> to vector<16x64xf32>
    %29 = arith.mulf %27, %28 : vector<16x64xf32>
    %30 = vector.broadcast %7 : vector<1x64xf32> to vector<16x64xf32>
    %31 = arith.addf %29, %30 : vector<16x64xf32>
    %c0_14 = arith.constant 0 : index
    %c0_15 = arith.constant 0 : index
    %c0_16 = arith.constant 0 : index
    %32 = vector.load %arg3[%c0_14, %c0_15, %c0_16] : memref<2x128x640xf32, #tpu.memory_space<vmem>>, vector<1x64x192xf32>
    %33 = vector.shape_cast %32 : vector<1x64x192xf32> to vector<64x192xf32>
    %c0_17 = arith.constant 0 : index
    %c0_18 = arith.constant 0 : index
    %c256 = arith.constant 256 : index
    %34 = vector.load %arg3[%c0_17, %c0_18, %c256] : memref<2x128x640xf32, #tpu.memory_space<vmem>>, vector<1x64x64xf32>
    %35 = vector.shape_cast %34 : vector<1x64x64xf32> to vector<64x64xf32>
    %c0_19 = arith.constant 0 : index
    %c0_20 = arith.constant 0 : index
    %c384 = arith.constant 384 : index
    %36 = vector.load %arg3[%c0_19, %c0_20, %c384] : memref<2x128x640xf32, #tpu.memory_space<vmem>>, vector<1x64x128xf32>
    %37 = vector.shape_cast %36 : vector<1x64x128xf32> to vector<64x128xf32>
    %c0_21 = arith.constant 0 : index
    %c0_22 = arith.constant 0 : index
    %c512 = arith.constant 512 : index
    %38 = vector.load %arg3[%c0_21, %c0_22, %c512] : memref<2x128x640xf32, #tpu.memory_space<vmem>>, vector<1x128x64xf32>
    %39 = vector.shape_cast %38 : vector<1x128x64xf32> to vector<128x64xf32>
    %c0_23 = arith.constant 0 : index
    %c0_24 = arith.constant 0 : index
    %c0_25 = arith.constant 0 : index
    %40 = vector.load %arg4[%c0_23, %c0_24, %c0_25] : memref<2x8x192xf32, #tpu.memory_space<vmem>>, vector<1x1x192xf32>
    %41 = vector.shape_cast %40 : vector<1x1x192xf32> to vector<1x192xf32>
    %c0_26 = arith.constant 0 : index
    %c1 = arith.constant 1 : index
    %c0_27 = arith.constant 0 : index
    %42 = vector.load %arg4[%c0_26, %c1, %c0_27] : memref<2x8x192xf32, #tpu.memory_space<vmem>>, vector<1x1x64xf32>
    %43 = vector.shape_cast %42 : vector<1x1x64xf32> to vector<1x64xf32>
    %c0_28 = arith.constant 0 : index
    %c2 = arith.constant 2 : index
    %c0_29 = arith.constant 0 : index
    %44 = vector.load %arg4[%c0_28, %c2, %c0_29] : memref<2x8x192xf32, #tpu.memory_space<vmem>>, vector<1x1x128xf32>
    %45 = vector.shape_cast %44 : vector<1x1x128xf32> to vector<1x128xf32>
    %c0_30 = arith.constant 0 : index
    %c3 = arith.constant 3 : index
    %c0_31 = arith.constant 0 : index
    %46 = vector.load %arg4[%c0_30, %c3, %c0_31] : memref<2x8x192xf32, #tpu.memory_space<vmem>>, vector<1x1x64xf32>
    %47 = vector.shape_cast %46 : vector<1x1x64xf32> to vector<1x64xf32>
    %c0_32 = arith.constant 0 : index
    %c4 = arith.constant 4 : index
    %c0_33 = arith.constant 0 : index
    %48 = vector.load %arg4[%c0_32, %c4, %c0_33] : memref<2x8x192xf32, #tpu.memory_space<vmem>>, vector<1x1x64xf32>
    %49 = vector.shape_cast %48 : vector<1x1x64xf32> to vector<1x64xf32>
    %c0_34 = arith.constant 0 : index
    %c5 = arith.constant 5 : index
    %c0_35 = arith.constant 0 : index
    %50 = vector.load %arg4[%c0_34, %c5, %c0_35] : memref<2x8x192xf32, #tpu.memory_space<vmem>>, vector<1x1x64xf32>
    %51 = vector.shape_cast %50 : vector<1x1x64xf32> to vector<1x64xf32>
    %c0_36 = arith.constant 0 : index
    %c6 = arith.constant 6 : index
    %c0_37 = arith.constant 0 : index
    %52 = vector.load %arg4[%c0_36, %c6, %c0_37] : memref<2x8x192xf32, #tpu.memory_space<vmem>>, vector<1x1x64xf32>
    %53 = vector.shape_cast %52 : vector<1x1x64xf32> to vector<1x64xf32>
    %c0_38 = arith.constant 0 : index
    %c7 = arith.constant 7 : index
    %c0_39 = arith.constant 0 : index
    %54 = vector.load %arg4[%c0_38, %c7, %c0_39] : memref<2x8x192xf32, #tpu.memory_space<vmem>>, vector<1x1x64xf32>
    %55 = vector.shape_cast %54 : vector<1x1x64xf32> to vector<1x64xf32>
    %cst_40 = arith.constant dense<0.000000e+00> : vector<16x192xf32>
    %56 = tpu.matmul %31, %33, %cst_40 {dimension_numbers = #tpu.dot_dimension_numbers<[1], [0], [0], [1], [0, 0, 1, 1], [], []>} : vector<16x64xf32>, vector<64x192xf32>, vector<16x192xf32> -> vector<16x192xf32>
    %57 = vector.broadcast %41 : vector<1x192xf32> to vector<16x192xf32>
    %58 = arith.addf %56, %57 : vector<16x192xf32>
    %59 = vector.shape_cast %58 : vector<16x192xf32> to vector<2x8x192xf32>
    %60 = vector.extract_strided_slice %59 {offsets = [0, 0, 0], sizes = [2, 8, 16], strides = [1, 1, 1]} : vector<2x8x192xf32> to vector<2x8x16xf32>
    %61 = vector.extract_strided_slice %59 {offsets = [0, 0, 64], sizes = [2, 8, 16], strides = [1, 1, 1]} : vector<2x8x192xf32> to vector<2x8x16xf32>
    %62 = vector.extract_strided_slice %59 {offsets = [0, 0, 128], sizes = [2, 8, 16], strides = [1, 1, 1]} : vector<2x8x192xf32> to vector<2x8x16xf32>
    %cst_41 = arith.constant 2.500000e-01 : f32
    %63 = vector.broadcast %cst_41 : f32 to vector<2x8x16xf32>
    %64 = arith.mulf %60, %63 : vector<2x8x16xf32>
    "tpu.trace_start"() <{level = 10 : i32, message = "bqd,bkd->bqk"}> : () -> ()
    %cst_42 = arith.constant dense<0.000000e+00> : vector<2x8x8xf32>
    %65 = tpu.matmul %64, %61, %cst_42 {dimension_numbers = #tpu.dot_dimension_numbers<[2], [2], [1], [1], [0, 0, 0, 1, 1, 1], [0], [0]>} : vector<2x8x16xf32>, vector<2x8x16xf32>, vector<2x8x8xf32> -> vector<2x8x8xf32>
    "tpu.trace_stop"() : () -> ()
    %66 = vector.broadcast %5 : vector<2x1x8xf32> to vector<2x8x8xf32>
    %67 = arith.addf %65, %66 : vector<2x8x8xf32>
    %cst_43 = arith.constant dense<0xFF800000> : vector<2x8xf32>
    %68 = vector.multi_reduction <maximumf>, %67, %cst_43 [2] : vector<2x8x8xf32> to vector<2x8xf32>
    %69 = vector.shape_cast %68 : vector<2x8xf32> to vector<2x8x1xf32>
    %70 = vector.broadcast %69 : vector<2x8x1xf32> to vector<2x8x8xf32>
    %71 = arith.subf %67, %70 : vector<2x8x8xf32>
    %72 = math.exp %71 : vector<2x8x8xf32>
    %cst_44 = arith.constant dense<0.000000e+00> : vector<2x8xf32>
    %73 = vector.multi_reduction <add>, %72, %cst_44 [2] : vector<2x8x8xf32> to vector<2x8xf32>
    %74 = vector.shape_cast %73 : vector<2x8xf32> to vector<2x8x1xf32>
    %75 = tpu.reciprocal %74 {approx = true} : vector<2x8x1xf32> -> vector<2x8x1xf32>
    %76 = vector.broadcast %75 : vector<2x8x1xf32> to vector<2x8x8xf32>
    %77 = arith.mulf %72, %76 : vector<2x8x8xf32>
    "tpu.trace_start"() <{level = 10 : i32, message = "bqk,bkd->bqd"}> : () -> ()
    %cst_45 = arith.constant dense<0.000000e+00> : vector<2x8x16xf32>
    %78 = tpu.matmul %77, %62, %cst_45 {dimension_numbers = #tpu.dot_dimension_numbers<[2], [1], [1], [2], [0, 0, 0, 1, 1, 2], [0], [0]>} : vector<2x8x8xf32>, vector<2x8x16xf32>, vector<2x8x16xf32> -> vector<2x8x16xf32>
    "tpu.trace_stop"() : () -> ()
    %79 = vector.extract_strided_slice %59 {offsets = [0, 0, 16], sizes = [2, 8, 16], strides = [1, 1, 1]} : vector<2x8x192xf32> to vector<2x8x16xf32>
    %80 = vector.extract_strided_slice %59 {offsets = [0, 0, 80], sizes = [2, 8, 16], strides = [1, 1, 1]} : vector<2x8x192xf32> to vector<2x8x16xf32>
    %81 = vector.extract_strided_slice %59 {offsets = [0, 0, 144], sizes = [2, 8, 16], strides = [1, 1, 1]} : vector<2x8x192xf32> to vector<2x8x16xf32>
    %cst_46 = arith.constant 2.500000e-01 : f32
    %82 = vector.broadcast %cst_46 : f32 to vector<2x8x16xf32>
    %83 = arith.mulf %79, %82 : vector<2x8x16xf32>
    "tpu.trace_start"() <{level = 10 : i32, message = "bqd,bkd->bqk"}> : () -> ()
    %cst_47 = arith.constant dense<0.000000e+00> : vector<2x8x8xf32>
    %84 = tpu.matmul %83, %80, %cst_47 {dimension_numbers = #tpu.dot_dimension_numbers<[2], [2], [1], [1], [0, 0, 0, 1, 1, 1], [0], [0]>} : vector<2x8x16xf32>, vector<2x8x16xf32>, vector<2x8x8xf32> -> vector<2x8x8xf32>
    "tpu.trace_stop"() : () -> ()
    %85 = vector.broadcast %5 : vector<2x1x8xf32> to vector<2x8x8xf32>
    %86 = arith.addf %84, %85 : vector<2x8x8xf32>
    %cst_48 = arith.constant dense<0xFF800000> : vector<2x8xf32>
    %87 = vector.multi_reduction <maximumf>, %86, %cst_48 [2] : vector<2x8x8xf32> to vector<2x8xf32>
    %88 = vector.shape_cast %87 : vector<2x8xf32> to vector<2x8x1xf32>
    %89 = vector.broadcast %88 : vector<2x8x1xf32> to vector<2x8x8xf32>
    %90 = arith.subf %86, %89 : vector<2x8x8xf32>
    %91 = math.exp %90 : vector<2x8x8xf32>
    %cst_49 = arith.constant dense<0.000000e+00> : vector<2x8xf32>
    %92 = vector.multi_reduction <add>, %91, %cst_49 [2] : vector<2x8x8xf32> to vector<2x8xf32>
    %93 = vector.shape_cast %92 : vector<2x8xf32> to vector<2x8x1xf32>
    %94 = tpu.reciprocal %93 {approx = true} : vector<2x8x1xf32> -> vector<2x8x1xf32>
    %95 = vector.broadcast %94 : vector<2x8x1xf32> to vector<2x8x8xf32>
    %96 = arith.mulf %91, %95 : vector<2x8x8xf32>
    "tpu.trace_start"() <{level = 10 : i32, message = "bqk,bkd->bqd"}> : () -> ()
    %cst_50 = arith.constant dense<0.000000e+00> : vector<2x8x16xf32>
    %97 = tpu.matmul %96, %81, %cst_50 {dimension_numbers = #tpu.dot_dimension_numbers<[2], [1], [1], [2], [0, 0, 0, 1, 1, 2], [0], [0]>} : vector<2x8x8xf32>, vector<2x8x16xf32>, vector<2x8x16xf32> -> vector<2x8x16xf32>
    "tpu.trace_stop"() : () -> ()
    %98 = vector.extract_strided_slice %59 {offsets = [0, 0, 32], sizes = [2, 8, 16], strides = [1, 1, 1]} : vector<2x8x192xf32> to vector<2x8x16xf32>
    %99 = vector.extract_strided_slice %59 {offsets = [0, 0, 96], sizes = [2, 8, 16], strides = [1, 1, 1]} : vector<2x8x192xf32> to vector<2x8x16xf32>
    %100 = vector.extract_strided_slice %59 {offsets = [0, 0, 160], sizes = [2, 8, 16], strides = [1, 1, 1]} : vector<2x8x192xf32> to vector<2x8x16xf32>
    %cst_51 = arith.constant 2.500000e-01 : f32
    %101 = vector.broadcast %cst_51 : f32 to vector<2x8x16xf32>
    %102 = arith.mulf %98, %101 : vector<2x8x16xf32>
    "tpu.trace_start"() <{level = 10 : i32, message = "bqd,bkd->bqk"}> : () -> ()
    %cst_52 = arith.constant dense<0.000000e+00> : vector<2x8x8xf32>
    %103 = tpu.matmul %102, %99, %cst_52 {dimension_numbers = #tpu.dot_dimension_numbers<[2], [2], [1], [1], [0, 0, 0, 1, 1, 1], [0], [0]>} : vector<2x8x16xf32>, vector<2x8x16xf32>, vector<2x8x8xf32> -> vector<2x8x8xf32>
    "tpu.trace_stop"() : () -> ()
    %104 = vector.broadcast %5 : vector<2x1x8xf32> to vector<2x8x8xf32>
    %105 = arith.addf %103, %104 : vector<2x8x8xf32>
    %cst_53 = arith.constant dense<0xFF800000> : vector<2x8xf32>
    %106 = vector.multi_reduction <maximumf>, %105, %cst_53 [2] : vector<2x8x8xf32> to vector<2x8xf32>
    %107 = vector.shape_cast %106 : vector<2x8xf32> to vector<2x8x1xf32>
    %108 = vector.broadcast %107 : vector<2x8x1xf32> to vector<2x8x8xf32>
    %109 = arith.subf %105, %108 : vector<2x8x8xf32>
    %110 = math.exp %109 : vector<2x8x8xf32>
    %cst_54 = arith.constant dense<0.000000e+00> : vector<2x8xf32>
    %111 = vector.multi_reduction <add>, %110, %cst_54 [2] : vector<2x8x8xf32> to vector<2x8xf32>
    %112 = vector.shape_cast %111 : vector<2x8xf32> to vector<2x8x1xf32>
    %113 = tpu.reciprocal %112 {approx = true} : vector<2x8x1xf32> -> vector<2x8x1xf32>
    %114 = vector.broadcast %113 : vector<2x8x1xf32> to vector<2x8x8xf32>
    %115 = arith.mulf %110, %114 : vector<2x8x8xf32>
    "tpu.trace_start"() <{level = 10 : i32, message = "bqk,bkd->bqd"}> : () -> ()
    %cst_55 = arith.constant dense<0.000000e+00> : vector<2x8x16xf32>
    %116 = tpu.matmul %115, %100, %cst_55 {dimension_numbers = #tpu.dot_dimension_numbers<[2], [1], [1], [2], [0, 0, 0, 1, 1, 2], [0], [0]>} : vector<2x8x8xf32>, vector<2x8x16xf32>, vector<2x8x16xf32> -> vector<2x8x16xf32>
    "tpu.trace_stop"() : () -> ()
    %117 = vector.extract_strided_slice %59 {offsets = [0, 0, 48], sizes = [2, 8, 16], strides = [1, 1, 1]} : vector<2x8x192xf32> to vector<2x8x16xf32>
    %118 = vector.extract_strided_slice %59 {offsets = [0, 0, 112], sizes = [2, 8, 16], strides = [1, 1, 1]} : vector<2x8x192xf32> to vector<2x8x16xf32>
    %119 = vector.extract_strided_slice %59 {offsets = [0, 0, 176], sizes = [2, 8, 16], strides = [1, 1, 1]} : vector<2x8x192xf32> to vector<2x8x16xf32>
    %cst_56 = arith.constant 2.500000e-01 : f32
    %120 = vector.broadcast %cst_56 : f32 to vector<2x8x16xf32>
    %121 = arith.mulf %117, %120 : vector<2x8x16xf32>
    "tpu.trace_start"() <{level = 10 : i32, message = "bqd,bkd->bqk"}> : () -> ()
    %cst_57 = arith.constant dense<0.000000e+00> : vector<2x8x8xf32>
    %122 = tpu.matmul %121, %118, %cst_57 {dimension_numbers = #tpu.dot_dimension_numbers<[2], [2], [1], [1], [0, 0, 0, 1, 1, 1], [0], [0]>} : vector<2x8x16xf32>, vector<2x8x16xf32>, vector<2x8x8xf32> -> vector<2x8x8xf32>
    "tpu.trace_stop"() : () -> ()
    %123 = vector.broadcast %5 : vector<2x1x8xf32> to vector<2x8x8xf32>
    %124 = arith.addf %122, %123 : vector<2x8x8xf32>
    %cst_58 = arith.constant dense<0xFF800000> : vector<2x8xf32>
    %125 = vector.multi_reduction <maximumf>, %124, %cst_58 [2] : vector<2x8x8xf32> to vector<2x8xf32>
    %126 = vector.shape_cast %125 : vector<2x8xf32> to vector<2x8x1xf32>
    %127 = vector.broadcast %126 : vector<2x8x1xf32> to vector<2x8x8xf32>
    %128 = arith.subf %124, %127 : vector<2x8x8xf32>
    %129 = math.exp %128 : vector<2x8x8xf32>
    %cst_59 = arith.constant dense<0.000000e+00> : vector<2x8xf32>
    %130 = vector.multi_reduction <add>, %129, %cst_59 [2] : vector<2x8x8xf32> to vector<2x8xf32>
    %131 = vector.shape_cast %130 : vector<2x8xf32> to vector<2x8x1xf32>
    %132 = tpu.reciprocal %131 {approx = true} : vector<2x8x1xf32> -> vector<2x8x1xf32>
    %133 = vector.broadcast %132 : vector<2x8x1xf32> to vector<2x8x8xf32>
    %134 = arith.mulf %129, %133 : vector<2x8x8xf32>
    "tpu.trace_start"() <{level = 10 : i32, message = "bqk,bkd->bqd"}> : () -> ()
    %cst_60 = arith.constant dense<0.000000e+00> : vector<2x8x16xf32>
    %135 = tpu.matmul %134, %119, %cst_60 {dimension_numbers = #tpu.dot_dimension_numbers<[2], [1], [1], [2], [0, 0, 0, 1, 1, 2], [0], [0]>} : vector<2x8x8xf32>, vector<2x8x16xf32>, vector<2x8x16xf32> -> vector<2x8x16xf32>
    "tpu.trace_stop"() : () -> ()
    %136 = tpu.concatenate %78, %97, %116, %135 in 2 : vector<2x8x16xf32>, vector<2x8x16xf32>, vector<2x8x16xf32>, vector<2x8x16xf32> -> vector<2x8x64xf32>
    %137 = vector.shape_cast %136 : vector<2x8x64xf32> to vector<16x64xf32>
    %cst_61 = arith.constant dense<0.000000e+00> : vector<16x64xf32>
    %138 = tpu.matmul %137, %35, %cst_61 {dimension_numbers = #tpu.dot_dimension_numbers<[1], [0], [0], [1], [0, 0, 1, 1], [], []>} : vector<16x64xf32>, vector<64x64xf32>, vector<16x64xf32> -> vector<16x64xf32>
    %139 = vector.broadcast %43 : vector<1x64xf32> to vector<16x64xf32>
    %140 = arith.addf %138, %139 : vector<16x64xf32>
    %141 = arith.addf %140, %31 : vector<16x64xf32>
    %cst_62 = arith.constant dense<0.000000e+00> : vector<16xf32>
    %142 = vector.multi_reduction <add>, %141, %cst_62 [1] : vector<16x64xf32> to vector<16xf32>
    %143 = vector.shape_cast %142 : vector<16xf32> to vector<16x1xf32>
    %cst_63 = arith.constant 6.400000e+01 : f32
    %144 = vector.broadcast %cst_63 : f32 to vector<16x1xf32>
    %145 = arith.divf %143, %144 : vector<16x1xf32>
    %146 = vector.broadcast %145 : vector<16x1xf32> to vector<16x64xf32>
    %147 = arith.subf %141, %146 : vector<16x64xf32>
    %148 = arith.mulf %147, %147 : vector<16x64xf32>
    %cst_64 = arith.constant dense<0.000000e+00> : vector<16xf32>
    %149 = vector.multi_reduction <add>, %148, %cst_64 [1] : vector<16x64xf32> to vector<16xf32>
    %150 = vector.shape_cast %149 : vector<16xf32> to vector<16x1xf32>
    %cst_65 = arith.constant 6.400000e+01 : f32
    %151 = vector.broadcast %cst_65 : f32 to vector<16x1xf32>
    %152 = arith.divf %150, %151 : vector<16x1xf32>
    %153 = vector.broadcast %145 : vector<16x1xf32> to vector<16x64xf32>
    %154 = arith.subf %141, %153 : vector<16x64xf32>
    %cst_66 = arith.constant 9.99999996E-13 : f32
    %155 = vector.broadcast %cst_66 : f32 to vector<16x1xf32>
    %156 = arith.addf %152, %155 : vector<16x1xf32>
    %157 = math.rsqrt %156 : vector<16x1xf32>
    %158 = vector.broadcast %157 : vector<16x1xf32> to vector<16x64xf32>
    %159 = arith.mulf %154, %158 : vector<16x64xf32>
    %160 = vector.broadcast %49 : vector<1x64xf32> to vector<16x64xf32>
    %161 = arith.mulf %159, %160 : vector<16x64xf32>
    %162 = vector.broadcast %51 : vector<1x64xf32> to vector<16x64xf32>
    %163 = arith.addf %161, %162 : vector<16x64xf32>
    %cst_67 = arith.constant dense<0.000000e+00> : vector<16x128xf32>
    %164 = tpu.matmul %163, %37, %cst_67 {dimension_numbers = #tpu.dot_dimension_numbers<[1], [0], [0], [1], [0, 0, 1, 1], [], []>} : vector<16x64xf32>, vector<64x128xf32>, vector<16x128xf32> -> vector<16x128xf32>
    %165 = vector.broadcast %45 : vector<1x128xf32> to vector<16x128xf32>
    %166 = arith.addf %164, %165 : vector<16x128xf32>
    %cst_68 = arith.constant 5.000000e-01 : f32
    %167 = vector.broadcast %cst_68 : f32 to vector<16x128xf32>
    %168 = arith.mulf %167, %166 : vector<16x128xf32>
    %cst_69 = arith.constant 0.707106769 : f32
    %169 = vector.broadcast %cst_69 : f32 to vector<16x128xf32>
    %170 = arith.mulf %166, %169 : vector<16x128xf32>
    %171 = math.erf %170 : vector<16x128xf32>
    %cst_70 = arith.constant 1.000000e+00 : f32
    %172 = vector.broadcast %cst_70 : f32 to vector<16x128xf32>
    %173 = arith.addf %172, %171 : vector<16x128xf32>
    %174 = arith.mulf %168, %173 : vector<16x128xf32>
    %cst_71 = arith.constant dense<0.000000e+00> : vector<16x64xf32>
    %175 = tpu.matmul %174, %39, %cst_71 {dimension_numbers = #tpu.dot_dimension_numbers<[1], [0], [0], [1], [0, 0, 1, 1], [], []>} : vector<16x128xf32>, vector<128x64xf32>, vector<16x64xf32> -> vector<16x64xf32>
    %176 = vector.broadcast %47 : vector<1x64xf32> to vector<16x64xf32>
    %177 = arith.addf %175, %176 : vector<16x64xf32>
    %178 = arith.addf %177, %163 : vector<16x64xf32>
    %cst_72 = arith.constant dense<0.000000e+00> : vector<16xf32>
    %179 = vector.multi_reduction <add>, %178, %cst_72 [1] : vector<16x64xf32> to vector<16xf32>
    %180 = vector.shape_cast %179 : vector<16xf32> to vector<16x1xf32>
    %cst_73 = arith.constant 6.400000e+01 : f32
    %181 = vector.broadcast %cst_73 : f32 to vector<16x1xf32>
    %182 = arith.divf %180, %181 : vector<16x1xf32>
    %183 = vector.broadcast %182 : vector<16x1xf32> to vector<16x64xf32>
    %184 = arith.subf %178, %183 : vector<16x64xf32>
    %185 = arith.mulf %184, %184 : vector<16x64xf32>
    %cst_74 = arith.constant dense<0.000000e+00> : vector<16xf32>
    %186 = vector.multi_reduction <add>, %185, %cst_74 [1] : vector<16x64xf32> to vector<16xf32>
    %187 = vector.shape_cast %186 : vector<16xf32> to vector<16x1xf32>
    %cst_75 = arith.constant 6.400000e+01 : f32
    %188 = vector.broadcast %cst_75 : f32 to vector<16x1xf32>
    %189 = arith.divf %187, %188 : vector<16x1xf32>
    %190 = vector.broadcast %182 : vector<16x1xf32> to vector<16x64xf32>
    %191 = arith.subf %178, %190 : vector<16x64xf32>
    %cst_76 = arith.constant 9.99999996E-13 : f32
    %192 = vector.broadcast %cst_76 : f32 to vector<16x1xf32>
    %193 = arith.addf %189, %192 : vector<16x1xf32>
    %194 = math.rsqrt %193 : vector<16x1xf32>
    %195 = vector.broadcast %194 : vector<16x1xf32> to vector<16x64xf32>
    %196 = arith.mulf %191, %195 : vector<16x64xf32>
    %197 = vector.broadcast %53 : vector<1x64xf32> to vector<16x64xf32>
    %198 = arith.mulf %196, %197 : vector<16x64xf32>
    %199 = vector.broadcast %55 : vector<1x64xf32> to vector<16x64xf32>
    %200 = arith.addf %198, %199 : vector<16x64xf32>
    %c1_77 = arith.constant 1 : index
    %c0_78 = arith.constant 0 : index
    %c0_79 = arith.constant 0 : index
    %201 = vector.load %arg3[%c1_77, %c0_78, %c0_79] : memref<2x128x640xf32, #tpu.memory_space<vmem>>, vector<1x64x192xf32>
    %202 = vector.shape_cast %201 : vector<1x64x192xf32> to vector<64x192xf32>
    %c1_80 = arith.constant 1 : index
    %c0_81 = arith.constant 0 : index
    %c256_82 = arith.constant 256 : index
    %203 = vector.load %arg3[%c1_80, %c0_81, %c256_82] : memref<2x128x640xf32, #tpu.memory_space<vmem>>, vector<1x64x64xf32>
    %204 = vector.shape_cast %203 : vector<1x64x64xf32> to vector<64x64xf32>
    %c1_83 = arith.constant 1 : index
    %c0_84 = arith.constant 0 : index
    %c384_85 = arith.constant 384 : index
    %205 = vector.load %arg3[%c1_83, %c0_84, %c384_85] : memref<2x128x640xf32, #tpu.memory_space<vmem>>, vector<1x64x128xf32>
    %206 = vector.shape_cast %205 : vector<1x64x128xf32> to vector<64x128xf32>
    %c1_86 = arith.constant 1 : index
    %c0_87 = arith.constant 0 : index
    %c512_88 = arith.constant 512 : index
    %207 = vector.load %arg3[%c1_86, %c0_87, %c512_88] : memref<2x128x640xf32, #tpu.memory_space<vmem>>, vector<1x128x64xf32>
    %208 = vector.shape_cast %207 : vector<1x128x64xf32> to vector<128x64xf32>
    %c1_89 = arith.constant 1 : index
    %c0_90 = arith.constant 0 : index
    %c0_91 = arith.constant 0 : index
    %209 = vector.load %arg4[%c1_89, %c0_90, %c0_91] : memref<2x8x192xf32, #tpu.memory_space<vmem>>, vector<1x1x192xf32>
    %210 = vector.shape_cast %209 : vector<1x1x192xf32> to vector<1x192xf32>
    %c1_92 = arith.constant 1 : index
    %c1_93 = arith.constant 1 : index
    %c0_94 = arith.constant 0 : index
    %211 = vector.load %arg4[%c1_92, %c1_93, %c0_94] : memref<2x8x192xf32, #tpu.memory_space<vmem>>, vector<1x1x64xf32>
    %212 = vector.shape_cast %211 : vector<1x1x64xf32> to vector<1x64xf32>
    %c1_95 = arith.constant 1 : index
    %c2_96 = arith.constant 2 : index
    %c0_97 = arith.constant 0 : index
    %213 = vector.load %arg4[%c1_95, %c2_96, %c0_97] : memref<2x8x192xf32, #tpu.memory_space<vmem>>, vector<1x1x128xf32>
    %214 = vector.shape_cast %213 : vector<1x1x128xf32> to vector<1x128xf32>
    %c1_98 = arith.constant 1 : index
    %c3_99 = arith.constant 3 : index
    %c0_100 = arith.constant 0 : index
    %215 = vector.load %arg4[%c1_98, %c3_99, %c0_100] : memref<2x8x192xf32, #tpu.memory_space<vmem>>, vector<1x1x64xf32>
    %216 = vector.shape_cast %215 : vector<1x1x64xf32> to vector<1x64xf32>
    %c1_101 = arith.constant 1 : index
    %c4_102 = arith.constant 4 : index
    %c0_103 = arith.constant 0 : index
    %217 = vector.load %arg4[%c1_101, %c4_102, %c0_103] : memref<2x8x192xf32, #tpu.memory_space<vmem>>, vector<1x1x64xf32>
    %218 = vector.shape_cast %217 : vector<1x1x64xf32> to vector<1x64xf32>
    %c1_104 = arith.constant 1 : index
    %c5_105 = arith.constant 5 : index
    %c0_106 = arith.constant 0 : index
    %219 = vector.load %arg4[%c1_104, %c5_105, %c0_106] : memref<2x8x192xf32, #tpu.memory_space<vmem>>, vector<1x1x64xf32>
    %220 = vector.shape_cast %219 : vector<1x1x64xf32> to vector<1x64xf32>
    %c1_107 = arith.constant 1 : index
    %c6_108 = arith.constant 6 : index
    %c0_109 = arith.constant 0 : index
    %221 = vector.load %arg4[%c1_107, %c6_108, %c0_109] : memref<2x8x192xf32, #tpu.memory_space<vmem>>, vector<1x1x64xf32>
    %222 = vector.shape_cast %221 : vector<1x1x64xf32> to vector<1x64xf32>
    %c1_110 = arith.constant 1 : index
    %c7_111 = arith.constant 7 : index
    %c0_112 = arith.constant 0 : index
    %223 = vector.load %arg4[%c1_110, %c7_111, %c0_112] : memref<2x8x192xf32, #tpu.memory_space<vmem>>, vector<1x1x64xf32>
    %224 = vector.shape_cast %223 : vector<1x1x64xf32> to vector<1x64xf32>
    %cst_113 = arith.constant dense<0.000000e+00> : vector<16x192xf32>
    %225 = tpu.matmul %200, %202, %cst_113 {dimension_numbers = #tpu.dot_dimension_numbers<[1], [0], [0], [1], [0, 0, 1, 1], [], []>} : vector<16x64xf32>, vector<64x192xf32>, vector<16x192xf32> -> vector<16x192xf32>
    %226 = vector.broadcast %210 : vector<1x192xf32> to vector<16x192xf32>
    %227 = arith.addf %225, %226 : vector<16x192xf32>
    %228 = vector.shape_cast %227 : vector<16x192xf32> to vector<2x8x192xf32>
    %229 = vector.extract_strided_slice %228 {offsets = [0, 0, 0], sizes = [2, 8, 16], strides = [1, 1, 1]} : vector<2x8x192xf32> to vector<2x8x16xf32>
    %230 = vector.extract_strided_slice %228 {offsets = [0, 0, 64], sizes = [2, 8, 16], strides = [1, 1, 1]} : vector<2x8x192xf32> to vector<2x8x16xf32>
    %231 = vector.extract_strided_slice %228 {offsets = [0, 0, 128], sizes = [2, 8, 16], strides = [1, 1, 1]} : vector<2x8x192xf32> to vector<2x8x16xf32>
    %cst_114 = arith.constant 2.500000e-01 : f32
    %232 = vector.broadcast %cst_114 : f32 to vector<2x8x16xf32>
    %233 = arith.mulf %229, %232 : vector<2x8x16xf32>
    "tpu.trace_start"() <{level = 10 : i32, message = "bqd,bkd->bqk"}> : () -> ()
    %cst_115 = arith.constant dense<0.000000e+00> : vector<2x8x8xf32>
    %234 = tpu.matmul %233, %230, %cst_115 {dimension_numbers = #tpu.dot_dimension_numbers<[2], [2], [1], [1], [0, 0, 0, 1, 1, 1], [0], [0]>} : vector<2x8x16xf32>, vector<2x8x16xf32>, vector<2x8x8xf32> -> vector<2x8x8xf32>
    "tpu.trace_stop"() : () -> ()
    %235 = vector.broadcast %5 : vector<2x1x8xf32> to vector<2x8x8xf32>
    %236 = arith.addf %234, %235 : vector<2x8x8xf32>
    %cst_116 = arith.constant dense<0xFF800000> : vector<2x8xf32>
    %237 = vector.multi_reduction <maximumf>, %236, %cst_116 [2] : vector<2x8x8xf32> to vector<2x8xf32>
    %238 = vector.shape_cast %237 : vector<2x8xf32> to vector<2x8x1xf32>
    %239 = vector.broadcast %238 : vector<2x8x1xf32> to vector<2x8x8xf32>
    %240 = arith.subf %236, %239 : vector<2x8x8xf32>
    %241 = math.exp %240 : vector<2x8x8xf32>
    %cst_117 = arith.constant dense<0.000000e+00> : vector<2x8xf32>
    %242 = vector.multi_reduction <add>, %241, %cst_117 [2] : vector<2x8x8xf32> to vector<2x8xf32>
    %243 = vector.shape_cast %242 : vector<2x8xf32> to vector<2x8x1xf32>
    %244 = tpu.reciprocal %243 {approx = true} : vector<2x8x1xf32> -> vector<2x8x1xf32>
    %245 = vector.broadcast %244 : vector<2x8x1xf32> to vector<2x8x8xf32>
    %246 = arith.mulf %241, %245 : vector<2x8x8xf32>
    "tpu.trace_start"() <{level = 10 : i32, message = "bqk,bkd->bqd"}> : () -> ()
    %cst_118 = arith.constant dense<0.000000e+00> : vector<2x8x16xf32>
    %247 = tpu.matmul %246, %231, %cst_118 {dimension_numbers = #tpu.dot_dimension_numbers<[2], [1], [1], [2], [0, 0, 0, 1, 1, 2], [0], [0]>} : vector<2x8x8xf32>, vector<2x8x16xf32>, vector<2x8x16xf32> -> vector<2x8x16xf32>
    "tpu.trace_stop"() : () -> ()
    %248 = vector.extract_strided_slice %228 {offsets = [0, 0, 16], sizes = [2, 8, 16], strides = [1, 1, 1]} : vector<2x8x192xf32> to vector<2x8x16xf32>
    %249 = vector.extract_strided_slice %228 {offsets = [0, 0, 80], sizes = [2, 8, 16], strides = [1, 1, 1]} : vector<2x8x192xf32> to vector<2x8x16xf32>
    %250 = vector.extract_strided_slice %228 {offsets = [0, 0, 144], sizes = [2, 8, 16], strides = [1, 1, 1]} : vector<2x8x192xf32> to vector<2x8x16xf32>
    %cst_119 = arith.constant 2.500000e-01 : f32
    %251 = vector.broadcast %cst_119 : f32 to vector<2x8x16xf32>
    %252 = arith.mulf %248, %251 : vector<2x8x16xf32>
    "tpu.trace_start"() <{level = 10 : i32, message = "bqd,bkd->bqk"}> : () -> ()
    %cst_120 = arith.constant dense<0.000000e+00> : vector<2x8x8xf32>
    %253 = tpu.matmul %252, %249, %cst_120 {dimension_numbers = #tpu.dot_dimension_numbers<[2], [2], [1], [1], [0, 0, 0, 1, 1, 1], [0], [0]>} : vector<2x8x16xf32>, vector<2x8x16xf32>, vector<2x8x8xf32> -> vector<2x8x8xf32>
    "tpu.trace_stop"() : () -> ()
    %254 = vector.broadcast %5 : vector<2x1x8xf32> to vector<2x8x8xf32>
    %255 = arith.addf %253, %254 : vector<2x8x8xf32>
    %cst_121 = arith.constant dense<0xFF800000> : vector<2x8xf32>
    %256 = vector.multi_reduction <maximumf>, %255, %cst_121 [2] : vector<2x8x8xf32> to vector<2x8xf32>
    %257 = vector.shape_cast %256 : vector<2x8xf32> to vector<2x8x1xf32>
    %258 = vector.broadcast %257 : vector<2x8x1xf32> to vector<2x8x8xf32>
    %259 = arith.subf %255, %258 : vector<2x8x8xf32>
    %260 = math.exp %259 : vector<2x8x8xf32>
    %cst_122 = arith.constant dense<0.000000e+00> : vector<2x8xf32>
    %261 = vector.multi_reduction <add>, %260, %cst_122 [2] : vector<2x8x8xf32> to vector<2x8xf32>
    %262 = vector.shape_cast %261 : vector<2x8xf32> to vector<2x8x1xf32>
    %263 = tpu.reciprocal %262 {approx = true} : vector<2x8x1xf32> -> vector<2x8x1xf32>
    %264 = vector.broadcast %263 : vector<2x8x1xf32> to vector<2x8x8xf32>
    %265 = arith.mulf %260, %264 : vector<2x8x8xf32>
    "tpu.trace_start"() <{level = 10 : i32, message = "bqk,bkd->bqd"}> : () -> ()
    %cst_123 = arith.constant dense<0.000000e+00> : vector<2x8x16xf32>
    %266 = tpu.matmul %265, %250, %cst_123 {dimension_numbers = #tpu.dot_dimension_numbers<[2], [1], [1], [2], [0, 0, 0, 1, 1, 2], [0], [0]>} : vector<2x8x8xf32>, vector<2x8x16xf32>, vector<2x8x16xf32> -> vector<2x8x16xf32>
    "tpu.trace_stop"() : () -> ()
    %267 = vector.extract_strided_slice %228 {offsets = [0, 0, 32], sizes = [2, 8, 16], strides = [1, 1, 1]} : vector<2x8x192xf32> to vector<2x8x16xf32>
    %268 = vector.extract_strided_slice %228 {offsets = [0, 0, 96], sizes = [2, 8, 16], strides = [1, 1, 1]} : vector<2x8x192xf32> to vector<2x8x16xf32>
    %269 = vector.extract_strided_slice %228 {offsets = [0, 0, 160], sizes = [2, 8, 16], strides = [1, 1, 1]} : vector<2x8x192xf32> to vector<2x8x16xf32>
    %cst_124 = arith.constant 2.500000e-01 : f32
    %270 = vector.broadcast %cst_124 : f32 to vector<2x8x16xf32>
    %271 = arith.mulf %267, %270 : vector<2x8x16xf32>
    "tpu.trace_start"() <{level = 10 : i32, message = "bqd,bkd->bqk"}> : () -> ()
    %cst_125 = arith.constant dense<0.000000e+00> : vector<2x8x8xf32>
    %272 = tpu.matmul %271, %268, %cst_125 {dimension_numbers = #tpu.dot_dimension_numbers<[2], [2], [1], [1], [0, 0, 0, 1, 1, 1], [0], [0]>} : vector<2x8x16xf32>, vector<2x8x16xf32>, vector<2x8x8xf32> -> vector<2x8x8xf32>
    "tpu.trace_stop"() : () -> ()
    %273 = vector.broadcast %5 : vector<2x1x8xf32> to vector<2x8x8xf32>
    %274 = arith.addf %272, %273 : vector<2x8x8xf32>
    %cst_126 = arith.constant dense<0xFF800000> : vector<2x8xf32>
    %275 = vector.multi_reduction <maximumf>, %274, %cst_126 [2] : vector<2x8x8xf32> to vector<2x8xf32>
    %276 = vector.shape_cast %275 : vector<2x8xf32> to vector<2x8x1xf32>
    %277 = vector.broadcast %276 : vector<2x8x1xf32> to vector<2x8x8xf32>
    %278 = arith.subf %274, %277 : vector<2x8x8xf32>
    %279 = math.exp %278 : vector<2x8x8xf32>
    %cst_127 = arith.constant dense<0.000000e+00> : vector<2x8xf32>
    %280 = vector.multi_reduction <add>, %279, %cst_127 [2] : vector<2x8x8xf32> to vector<2x8xf32>
    %281 = vector.shape_cast %280 : vector<2x8xf32> to vector<2x8x1xf32>
    %282 = tpu.reciprocal %281 {approx = true} : vector<2x8x1xf32> -> vector<2x8x1xf32>
    %283 = vector.broadcast %282 : vector<2x8x1xf32> to vector<2x8x8xf32>
    %284 = arith.mulf %279, %283 : vector<2x8x8xf32>
    "tpu.trace_start"() <{level = 10 : i32, message = "bqk,bkd->bqd"}> : () -> ()
    %cst_128 = arith.constant dense<0.000000e+00> : vector<2x8x16xf32>
    %285 = tpu.matmul %284, %269, %cst_128 {dimension_numbers = #tpu.dot_dimension_numbers<[2], [1], [1], [2], [0, 0, 0, 1, 1, 2], [0], [0]>} : vector<2x8x8xf32>, vector<2x8x16xf32>, vector<2x8x16xf32> -> vector<2x8x16xf32>
    "tpu.trace_stop"() : () -> ()
    %286 = vector.extract_strided_slice %228 {offsets = [0, 0, 48], sizes = [2, 8, 16], strides = [1, 1, 1]} : vector<2x8x192xf32> to vector<2x8x16xf32>
    %287 = vector.extract_strided_slice %228 {offsets = [0, 0, 112], sizes = [2, 8, 16], strides = [1, 1, 1]} : vector<2x8x192xf32> to vector<2x8x16xf32>
    %288 = vector.extract_strided_slice %228 {offsets = [0, 0, 176], sizes = [2, 8, 16], strides = [1, 1, 1]} : vector<2x8x192xf32> to vector<2x8x16xf32>
    %cst_129 = arith.constant 2.500000e-01 : f32
    %289 = vector.broadcast %cst_129 : f32 to vector<2x8x16xf32>
    %290 = arith.mulf %286, %289 : vector<2x8x16xf32>
    "tpu.trace_start"() <{level = 10 : i32, message = "bqd,bkd->bqk"}> : () -> ()
    %cst_130 = arith.constant dense<0.000000e+00> : vector<2x8x8xf32>
    %291 = tpu.matmul %290, %287, %cst_130 {dimension_numbers = #tpu.dot_dimension_numbers<[2], [2], [1], [1], [0, 0, 0, 1, 1, 1], [0], [0]>} : vector<2x8x16xf32>, vector<2x8x16xf32>, vector<2x8x8xf32> -> vector<2x8x8xf32>
    "tpu.trace_stop"() : () -> ()
    %292 = vector.broadcast %5 : vector<2x1x8xf32> to vector<2x8x8xf32>
    %293 = arith.addf %291, %292 : vector<2x8x8xf32>
    %cst_131 = arith.constant dense<0xFF800000> : vector<2x8xf32>
    %294 = vector.multi_reduction <maximumf>, %293, %cst_131 [2] : vector<2x8x8xf32> to vector<2x8xf32>
    %295 = vector.shape_cast %294 : vector<2x8xf32> to vector<2x8x1xf32>
    %296 = vector.broadcast %295 : vector<2x8x1xf32> to vector<2x8x8xf32>
    %297 = arith.subf %293, %296 : vector<2x8x8xf32>
    %298 = math.exp %297 : vector<2x8x8xf32>
    %cst_132 = arith.constant dense<0.000000e+00> : vector<2x8xf32>
    %299 = vector.multi_reduction <add>, %298, %cst_132 [2] : vector<2x8x8xf32> to vector<2x8xf32>
    %300 = vector.shape_cast %299 : vector<2x8xf32> to vector<2x8x1xf32>
    %301 = tpu.reciprocal %300 {approx = true} : vector<2x8x1xf32> -> vector<2x8x1xf32>
    %302 = vector.broadcast %301 : vector<2x8x1xf32> to vector<2x8x8xf32>
    %303 = arith.mulf %298, %302 : vector<2x8x8xf32>
    "tpu.trace_start"() <{level = 10 : i32, message = "bqk,bkd->bqd"}> : () -> ()
    %cst_133 = arith.constant dense<0.000000e+00> : vector<2x8x16xf32>
    %304 = tpu.matmul %303, %288, %cst_133 {dimension_numbers = #tpu.dot_dimension_numbers<[2], [1], [1], [2], [0, 0, 0, 1, 1, 2], [0], [0]>} : vector<2x8x8xf32>, vector<2x8x16xf32>, vector<2x8x16xf32> -> vector<2x8x16xf32>
    "tpu.trace_stop"() : () -> ()
    %305 = tpu.concatenate %247, %266, %285, %304 in 2 : vector<2x8x16xf32>, vector<2x8x16xf32>, vector<2x8x16xf32>, vector<2x8x16xf32> -> vector<2x8x64xf32>
    %306 = vector.shape_cast %305 : vector<2x8x64xf32> to vector<16x64xf32>
    %cst_134 = arith.constant dense<0.000000e+00> : vector<16x64xf32>
    %307 = tpu.matmul %306, %204, %cst_134 {dimension_numbers = #tpu.dot_dimension_numbers<[1], [0], [0], [1], [0, 0, 1, 1], [], []>} : vector<16x64xf32>, vector<64x64xf32>, vector<16x64xf32> -> vector<16x64xf32>
    %308 = vector.broadcast %212 : vector<1x64xf32> to vector<16x64xf32>
    %309 = arith.addf %307, %308 : vector<16x64xf32>
    %310 = arith.addf %309, %200 : vector<16x64xf32>
    %cst_135 = arith.constant dense<0.000000e+00> : vector<16xf32>
    %311 = vector.multi_reduction <add>, %310, %cst_135 [1] : vector<16x64xf32> to vector<16xf32>
    %312 = vector.shape_cast %311 : vector<16xf32> to vector<16x1xf32>
    %cst_136 = arith.constant 6.400000e+01 : f32
    %313 = vector.broadcast %cst_136 : f32 to vector<16x1xf32>
    %314 = arith.divf %312, %313 : vector<16x1xf32>
    %315 = vector.broadcast %314 : vector<16x1xf32> to vector<16x64xf32>
    %316 = arith.subf %310, %315 : vector<16x64xf32>
    %317 = arith.mulf %316, %316 : vector<16x64xf32>
    %cst_137 = arith.constant dense<0.000000e+00> : vector<16xf32>
    %318 = vector.multi_reduction <add>, %317, %cst_137 [1] : vector<16x64xf32> to vector<16xf32>
    %319 = vector.shape_cast %318 : vector<16xf32> to vector<16x1xf32>
    %cst_138 = arith.constant 6.400000e+01 : f32
    %320 = vector.broadcast %cst_138 : f32 to vector<16x1xf32>
    %321 = arith.divf %319, %320 : vector<16x1xf32>
    %322 = vector.broadcast %314 : vector<16x1xf32> to vector<16x64xf32>
    %323 = arith.subf %310, %322 : vector<16x64xf32>
    %cst_139 = arith.constant 9.99999996E-13 : f32
    %324 = vector.broadcast %cst_139 : f32 to vector<16x1xf32>
    %325 = arith.addf %321, %324 : vector<16x1xf32>
    %326 = math.rsqrt %325 : vector<16x1xf32>
    %327 = vector.broadcast %326 : vector<16x1xf32> to vector<16x64xf32>
    %328 = arith.mulf %323, %327 : vector<16x64xf32>
    %329 = vector.broadcast %218 : vector<1x64xf32> to vector<16x64xf32>
    %330 = arith.mulf %328, %329 : vector<16x64xf32>
    %331 = vector.broadcast %220 : vector<1x64xf32> to vector<16x64xf32>
    %332 = arith.addf %330, %331 : vector<16x64xf32>
    %cst_140 = arith.constant dense<0.000000e+00> : vector<16x128xf32>
    %333 = tpu.matmul %332, %206, %cst_140 {dimension_numbers = #tpu.dot_dimension_numbers<[1], [0], [0], [1], [0, 0, 1, 1], [], []>} : vector<16x64xf32>, vector<64x128xf32>, vector<16x128xf32> -> vector<16x128xf32>
    %334 = vector.broadcast %214 : vector<1x128xf32> to vector<16x128xf32>
    %335 = arith.addf %333, %334 : vector<16x128xf32>
    %cst_141 = arith.constant 5.000000e-01 : f32
    %336 = vector.broadcast %cst_141 : f32 to vector<16x128xf32>
    %337 = arith.mulf %336, %335 : vector<16x128xf32>
    %cst_142 = arith.constant 0.707106769 : f32
    %338 = vector.broadcast %cst_142 : f32 to vector<16x128xf32>
    %339 = arith.mulf %335, %338 : vector<16x128xf32>
    %340 = math.erf %339 : vector<16x128xf32>
    %cst_143 = arith.constant 1.000000e+00 : f32
    %341 = vector.broadcast %cst_143 : f32 to vector<16x128xf32>
    %342 = arith.addf %341, %340 : vector<16x128xf32>
    %343 = arith.mulf %337, %342 : vector<16x128xf32>
    %cst_144 = arith.constant dense<0.000000e+00> : vector<16x64xf32>
    %344 = tpu.matmul %343, %208, %cst_144 {dimension_numbers = #tpu.dot_dimension_numbers<[1], [0], [0], [1], [0, 0, 1, 1], [], []>} : vector<16x128xf32>, vector<128x64xf32>, vector<16x64xf32> -> vector<16x64xf32>
    %345 = vector.broadcast %216 : vector<1x64xf32> to vector<16x64xf32>
    %346 = arith.addf %344, %345 : vector<16x64xf32>
    %347 = arith.addf %346, %332 : vector<16x64xf32>
    %cst_145 = arith.constant dense<0.000000e+00> : vector<16xf32>
    %348 = vector.multi_reduction <add>, %347, %cst_145 [1] : vector<16x64xf32> to vector<16xf32>
    %349 = vector.shape_cast %348 : vector<16xf32> to vector<16x1xf32>
    %cst_146 = arith.constant 6.400000e+01 : f32
    %350 = vector.broadcast %cst_146 : f32 to vector<16x1xf32>
    %351 = arith.divf %349, %350 : vector<16x1xf32>
    %352 = vector.broadcast %351 : vector<16x1xf32> to vector<16x64xf32>
    %353 = arith.subf %347, %352 : vector<16x64xf32>
    %354 = arith.mulf %353, %353 : vector<16x64xf32>
    %cst_147 = arith.constant dense<0.000000e+00> : vector<16xf32>
    %355 = vector.multi_reduction <add>, %354, %cst_147 [1] : vector<16x64xf32> to vector<16xf32>
    %356 = vector.shape_cast %355 : vector<16xf32> to vector<16x1xf32>
    %cst_148 = arith.constant 6.400000e+01 : f32
    %357 = vector.broadcast %cst_148 : f32 to vector<16x1xf32>
    %358 = arith.divf %356, %357 : vector<16x1xf32>
    %359 = vector.broadcast %351 : vector<16x1xf32> to vector<16x64xf32>
    %360 = arith.subf %347, %359 : vector<16x64xf32>
    %cst_149 = arith.constant 9.99999996E-13 : f32
    %361 = vector.broadcast %cst_149 : f32 to vector<16x1xf32>
    %362 = arith.addf %358, %361 : vector<16x1xf32>
    %363 = math.rsqrt %362 : vector<16x1xf32>
    %364 = vector.broadcast %363 : vector<16x1xf32> to vector<16x64xf32>
    %365 = arith.mulf %360, %364 : vector<16x64xf32>
    %366 = vector.broadcast %222 : vector<1x64xf32> to vector<16x64xf32>
    %367 = arith.mulf %365, %366 : vector<16x64xf32>
    %368 = vector.broadcast %224 : vector<1x64xf32> to vector<16x64xf32>
    %369 = arith.addf %367, %368 : vector<16x64xf32>
    %370 = vector.extract_strided_slice %369 {offsets = [0, 0], sizes = [1, 64], strides = [1, 1]} : vector<16x64xf32> to vector<1x64xf32>
    %371 = vector.extract_strided_slice %369 {offsets = [8, 0], sizes = [1, 64], strides = [1, 1]} : vector<16x64xf32> to vector<1x64xf32>
    %372 = tpu.concatenate %370, %371 in 0 : vector<1x64xf32>, vector<1x64xf32> -> vector<2x64xf32>
    %c0_150 = arith.constant 0 : index
    %c0_151 = arith.constant 0 : index
    %373 = vector.load %arg5[%c0_150, %c0_151] : memref<136x128xf32, #tpu.memory_space<vmem>>, vector<64x64xf32>
    %c130 = arith.constant 130 : index
    %c0_152 = arith.constant 0 : index
    %374 = vector.load %arg5[%c130, %c0_152] : memref<136x128xf32, #tpu.memory_space<vmem>>, vector<1x64xf32>
    %c64 = arith.constant 64 : index
    %c0_153 = arith.constant 0 : index
    %375 = vector.load %arg5[%c64, %c0_153] : memref<136x128xf32, #tpu.memory_space<vmem>>, vector<64x128xf32>
    %c131 = arith.constant 131 : index
    %c0_154 = arith.constant 0 : index
    %376 = vector.load %arg5[%c131, %c0_154] : memref<136x128xf32, #tpu.memory_space<vmem>>, vector<1x128xf32>
    %cst_155 = arith.constant dense<0.000000e+00> : vector<2x64xf32>
    %377 = tpu.matmul %372, %373, %cst_155 {dimension_numbers = #tpu.dot_dimension_numbers<[1], [0], [0], [1], [0, 0, 1, 1], [], []>} : vector<2x64xf32>, vector<64x64xf32>, vector<2x64xf32> -> vector<2x64xf32>
    %378 = vector.broadcast %374 : vector<1x64xf32> to vector<2x64xf32>
    %379 = arith.addf %377, %378 : vector<2x64xf32>
    %cst_156 = arith.constant 0.000000e+00 : f32
    %380 = vector.broadcast %cst_156 : f32 to vector<2x64xf32>
    %381 = arith.maximumf %379, %380 : vector<2x64xf32>
    %cst_157 = arith.constant dense<0.000000e+00> : vector<2x128xf32>
    %382 = tpu.matmul %381, %375, %cst_157 {dimension_numbers = #tpu.dot_dimension_numbers<[1], [0], [0], [1], [0, 0, 1, 1], [], []>} : vector<2x64xf32>, vector<64x128xf32>, vector<2x128xf32> -> vector<2x128xf32>
    %383 = vector.broadcast %376 : vector<1x128xf32> to vector<2x128xf32>
    %384 = arith.addf %382, %383 : vector<2x128xf32>
    %c0_158 = arith.constant 0 : index
    %c0_159 = arith.constant 0 : index
    %385 = vector.load %arg6[%c0_158, %c0_159] : memref<2x128xf32, #tpu.memory_space<vmem>>, vector<2x128xf32>
    tpu.vector_store %arg6[%c0_158, %c0_159], %384 {strides = array<i32>} : memref<2x128xf32, #tpu.memory_space<vmem>>, vector<2x128xf32>,
    return
  }
  func.func @transform_0(%arg0: i32) -> (i32, i32, i32) {
    %c0_i32 = arith.constant 0 : i32
    %c0_i32_0 = arith.constant 0 : i32
    %c0_i32_1 = arith.constant 0 : i32
    return %arg0, %c0_i32, %c0_i32_0 : i32, i32, i32
  }
  func.func @transform_1(%arg0: i32) -> (i32, i32, i32) {
    %c0_i32 = arith.constant 0 : i32
    %c0_i32_0 = arith.constant 0 : i32
    %c0_i32_1 = arith.constant 0 : i32
    return %arg0, %c0_i32, %c0_i32_0 : i32, i32, i32
  }
  func.func @transform_2(%arg0: i32) -> (i32, i32, i32) {
    %c0_i32 = arith.constant 0 : i32
    %c0_i32_0 = arith.constant 0 : i32
    %c0_i32_1 = arith.constant 0 : i32
    %c0_i32_2 = arith.constant 0 : i32
    return %c0_i32, %c0_i32_0, %c0_i32_1 : i32, i32, i32
  }
  func.func @transform_3(%arg0: i32) -> (i32, i32, i32) {
    %c0_i32 = arith.constant 0 : i32
    %c0_i32_0 = arith.constant 0 : i32
    %c0_i32_1 = arith.constant 0 : i32
    %c0_i32_2 = arith.constant 0 : i32
    return %c0_i32, %c0_i32_0, %c0_i32_1 : i32, i32, i32
  }
  func.func @transform_4(%arg0: i32) -> (i32, i32) {
    %c0_i32 = arith.constant 0 : i32
    %c0_i32_0 = arith.constant 0 : i32
    %c0_i32_1 = arith.constant 0 : i32
    return %c0_i32, %c0_i32_0 : i32, i32
  }
  func.func @transform_5(%arg0: i32) -> (i32, i32) {
    %c0_i32 = arith.constant 0 : i32
    %c0_i32_0 = arith.constant 0 : i32
    return %arg0, %c0_i32 : i32, i32
  }
}

</mosaic_0001>

<llo_original>
// kernel: distilbert_router_forward.1
$region0: #{distilbert_router_forward.1}
  #allocation0 [shape = 'u32[]', space=smem, size = 0x4, offset = 0x4, fixed_abs, tag = 'smem constant byte address 0x4 - core index']
  #allocation1 [shape = 'u32[144,128]{1,0:T(1,128)}', space=vmem, size = 0x12000, scoped, tag = 'internal scratch']
  %s0 = inlined_call_operand.vmem [shape: f32[2,8,64], index: 0, kind: input, shape index: {}]
  %s1 = inlined_call_operand.vmem [shape: f32[2,1,8], index: 1, kind: input, shape index: {}]
  %s2 = inlined_call_operand.hbm [shape: f32[2,128,640], index: 2, kind: input, shape index: {}]
  %s3 = inlined_call_operand.vmem [shape: f32[2,8,192], index: 3, kind: input, shape index: {}]
  %s4 = inlined_call_operand.vmem [shape: f32[136,128], index: 4, kind: input, shape index: {}]
  %s5 = inlined_call_operand.hbm [shape: f32[2,128], index: 5, kind: output, shape index: {}]
  %s6 = sld [smem:[#allocation0]]
  $region34: #{distilbert_router_forward.1} parent=0
    _
  %s8 = ssub.s32 1, %s6
  %s9 = scalar_select 0, %s8, %s6
  $region1: #{distilbert_router_forward.1} parent=0
    #allocation2 [shape = 'u8[655360]{0}', space=vmem, size = 0xa0000, scoped, tag = 'input window, operand 2, single buffered']
    #allocation3 [shape = 's32[1]{0}', space=sflag, size = 0x4, scoped, tag = 'scoped memory for distilbert_router_forward.1']
    #allocation4 [shape = 's32[1]{0}', space=sflag, size = 0x4, scoped, tag = 'scoped memory for distilbert_router_forward.1']
    #allocation5 [shape = 'u8[1024]{0}', space=vmem, size = 0x400, scoped, tag = 'output window, operand 0, single buffered']
    %10 = vsyncpa [#allocation3], 0
    %11 = vsyncpa [#allocation4], 0
    // Predicated region
    $region2: #{distilbert_router_forward.1} parent=1 // pred_check
      _
    $region3: #{distilbert_router_forward.1} parent=1 // pred_check_branch
      %13 = sbr.rel (0) target = $region5
    $region4: #{distilbert_router_forward.1} parent=1 // pred_region
      _
    $region5: #{distilbert_router_forward.1} parent=1 // pred_fallthru
      _
    // Predicated region
    $region6: #{distilbert_router_forward.1} parent=1 // pred_check
      _
    $region7: #{distilbert_router_forward.1} parent=1 // pred_check_branch
      %15 = sbr.rel (0) target = $region9
    $region8: #{distilbert_router_forward.1} parent=1 // pred_region
      _
    $region9: #{distilbert_router_forward.1} parent=1 // pred_fallthru
      _
    // Predicated region
    $region10: #{distilbert_router_forward.1} parent=1 // pred_check
      _
    $region11: #{distilbert_router_forward.1} parent=1 // pred_check_branch
      %17 = sbr.rel (0) target = $region13
    $region12: #{distilbert_router_forward.1} parent=1 // pred_region
      %s19 = ssub.s32 20480, 20480
      %20 = vsyncadd [#allocation3], %s19
      %s21 = sshll.u32 [#allocation2], 4
      %s22 = int_to_ptr.vmem [resolvable:$true] %s21
      %27 = dma.hbm_to_vmem [thread:$0]  %s2, 20480, %s22, [#allocation3], 640, 640, 40
    $region13: #{distilbert_router_forward.1} parent=1 // pred_fallthru
      _
    // Predicated region
    $region14: #{distilbert_router_forward.1} parent=1 // pred_check
      _
    $region15: #{distilbert_router_forward.1} parent=1 // pred_check_branch
      %29 = sbr.rel (0) target = $region17
    $region16: #{distilbert_router_forward.1} parent=1 // pred_region
      _
    $region17: #{distilbert_router_forward.1} parent=1 // pred_fallthru
      _
    // Predicated region
    $region18: #{distilbert_router_forward.1} parent=1 // pred_check
      _
    $region19: #{distilbert_router_forward.1} parent=1 // pred_check_branch
      %31 = sbr.rel (0) target = $region21
    $region20: #{distilbert_router_forward.1} parent=1 // pred_region
      _
    $region21: #{distilbert_router_forward.1} parent=1 // pred_fallthru
      _
    // Predicated region
    $region22: #{distilbert_router_forward.1} parent=1 // pred_check
      _
    $region23: #{distilbert_router_forward.1} parent=1 // pred_check_branch
      %33 = sbr.rel (0) target = $region25
    $region24: #{distilbert_router_forward.1} parent=1 // pred_region
      %34 = dma.done [#allocation3], 20480
    $region25: #{distilbert_router_forward.1} parent=1 // pred_fallthru
      _
    %v35 = vld [vmem:[%s1] sm:$0x1]
    %v36 = vld [vmem:[%s1 + $0x1] sm:$0x1]
    %vm37 = vcmp.eq.f32.partialorder %v35, 0.0
    %vm38 = vcmp.eq.f32.partialorder %v36, 0.0
    %v39 = vsel %vm37, -3.4028235e+38, 0.0
    %v40 = vsel %vm38, -3.4028235e+38, 0.0
    %v41 = vld [vmem:[%s4 + $0x80] sm:$0x1]
    %v42 = vld [vmem:[%s4 + $0x81] sm:$0x1]
    %v43 = vld [vmem:[%s0] sm:$0xff]
    %v44 = vld [vmem:[%s0 + $0x8] sm:$0xff]
    %vm45 = vcmask 523264
    %v46 = vsel %vm45, %v43, 0.0
    %47 = vadd.xlane.f32.xlu0 %v46
    %v48 = vpop.xlane.xlu0 %47
    %v49 = vsel %vm45, %v44, 0.0
    %50 = vadd.xlane.f32.xlu0 %v49
    %v51 = vpop.xlane.xlu0 %50
    %v52 = vrcp.pop 64.0
    %v53 = vmul.f32 %v48, %v52
    %v54 = vmul.f32 %v51, %v52
    %v55 = vsub.f32 %v43, %v53
    %v56 = vsub.f32 %v44, %v54
    %v57 = vmul.f32 %v55, %v55
    %v58 = vmul.f32 %v56, %v56
    %v59 = vsel %vm45, %v57, 0.0
    %60 = vadd.xlane.f32.xlu0 %v59
    %v61 = vpop.xlane.xlu0 %60
    %v62 = vsel %vm45, %v58, 0.0
    %63 = vadd.xlane.f32.xlu0 %v62
    %v64 = vpop.xlane.xlu0 %63
    %v65 = vmul.f32 %v61, %v52
    %v66 = vmul.f32 %v64, %v52
    %v67 = vadd.f32 %v65, 1e-12
    %v68 = vadd.f32 %v66, 1e-12
    %v69 = vrsqrt.pop %v67
    %v70 = vrsqrt.pop %v68
    %v71 = vmul.f32 %v55, %v69
    %v72 = vmul.f32 %v56, %v70
    %v73 = vlaneseq
    %v74 = vshrl.u32 %v73, 7
    %v75 = vsub.s32 0, %v74
    %v76 = vrot.slane %v41, %v75
    %v77 = vmul.f32 %v71, %v76
    %v78 = vmul.f32 %v72, %v76
    %v79 = vlaneseq
    %v80 = vshrl.u32 %v79, 7
    %v81 = vsub.s32 0, %v80
    %v82 = vrot.slane %v42, %v81
    %v83 = vadd.f32 %v77, %v82
    %v84 = vadd.f32 %v78, %v82
    %v85 = vld [vmem:[#allocation2] sm:$0xff]
    %v86 = vld [vmem:[#allocation2 + $0x8] sm:$0xff]
    %v87 = vld [vmem:[#allocation2 + $0x28] sm:$0xff]
    %v88 = vld [vmem:[#allocation2 + $0x30] sm:$0xff]
    %v89 = vld [vmem:[#allocation2 + $0x50] sm:$0xff]
    %v90 = vld [vmem:[#allocation2 + $0x58] sm:$0xff]
    %v91 = vld [vmem:[#allocation2 + $0x78] sm:$0xff]
    %v92 = vld [vmem:[#allocation2 + $0x80] sm:$0xff]
    %v93 = vld [vmem:[#allocation2 + $0xa0] sm:$0xff]
    %v94 = vld [vmem:[#allocation2 + $0xa8] sm:$0xff]
    %v95 = vld [vmem:[#allocation2 + $0xc8] sm:$0xff]
    %v96 = vld [vmem:[#allocation2 + $0xd0] sm:$0xff]
    %v97 = vld [vmem:[#allocation2 + $0xf0] sm:$0xff]
    %v98 = vld [vmem:[#allocation2 + $0xf8] sm:$0xff]
    %v99 = vld [vmem:[#allocation2 + $0x118] sm:$0xff]
    %v100 = vld [vmem:[#allocation2 + $0x120] sm:$0xff]
    %v101 = vld [vmem:[#allocation2 + $0x10] sm:$0xff]
    %v102 = vld [vmem:[#allocation2 + $0x38] sm:$0xff]
    %v103 = vld [vmem:[#allocation2 + $0x60] sm:$0xff]
    %v104 = vld [vmem:[#allocation2 + $0x88] sm:$0xff]
    %v105 = vld [vmem:[#allocation2 + $0xb0] sm:$0xff]
    %v106 = vld [vmem:[#allocation2 + $0xd8] sm:$0xff]
    %v107 = vld [vmem:[#allocation2 + $0x100] sm:$0xff]
    %v108 = vld [vmem:[#allocation2 + $0x128] sm:$0xff]
    %v109 = vld [vmem:[#allocation2 + $0x18] sm:$0xff]
    %v110 = vld [vmem:[#allocation2 + $0x40] sm:$0xff]
    %v111 = vld [vmem:[#allocation2 + $0x68] sm:$0xff]
    %v112 = vld [vmem:[#allocation2 + $0x90] sm:$0xff]
    %v113 = vld [vmem:[#allocation2 + $0xb8] sm:$0xff]
    %v114 = vld [vmem:[#allocation2 + $0xe0] sm:$0xff]
    %v115 = vld [vmem:[#allocation2 + $0x108] sm:$0xff]
    %v116 = vld [vmem:[#allocation2 + $0x130] sm:$0xff]
    %v117 = vld [vmem:[#allocation2 + $0x20] sm:$0xff]
    %v118 = vld [vmem:[#allocation2 + $0x48] sm:$0xff]
    %v119 = vld [vmem:[#allocation2 + $0x70] sm:$0xff]
    %v120 = vld [vmem:[#allocation2 + $0x98] sm:$0xff]
    %v121 = vld [vmem:[#allocation2 + $0xc0] sm:$0xff]
    %v122 = vld [vmem:[#allocation2 + $0xe8] sm:$0xff]
    %v123 = vld [vmem:[#allocation2 + $0x110] sm:$0xff]
    %v124 = vld [vmem:[#allocation2 + $0x138] sm:$0xff]
    %v125 = vld [vmem:[#allocation2 + $0x160] sm:$0xff]
    %v126 = vld [vmem:[#allocation2 + $0x188] sm:$0xff]
    %v127 = vld [vmem:[#allocation2 + $0x1b0] sm:$0xff]
    %v128 = vld [vmem:[#allocation2 + $0x1d8] sm:$0xff]
    %v129 = vld [vmem:[#allocation2 + $0x200] sm:$0xff]
    %v130 = vld [vmem:[#allocation2 + $0x228] sm:$0xff]
    %v131 = vld [vmem:[#allocation2 + $0x250] sm:$0xff]
    %v132 = vld [vmem:[#allocation2 + $0x278] sm:$0xff]
    %v133 = vld [vmem:[%s3] ss:$8 sm:$0x3]
    %v134 = vld [vmem:[%s3 + $0x1] ss:$0 sm:$0xff]
    %v135 = vld [vmem:[%s3 + $0x2] ss:$0 sm:$0xff]
    %v136 = vld [vmem:[%s3 + $0x3] ss:$0 sm:$0xff]
    %v137 = vld [vmem:[%s3 + $0x4] ss:$0 sm:$0xff]
    %v138 = vld [vmem:[%s3 + $0x5] ss:$0 sm:$0xff]
    %v139 = vld [vmem:[%s3 + $0x6] ss:$0 sm:$0xff]
    %v140 = vld [vmem:[%s3 + $0x7] ss:$0 sm:$0xff]
    %v142 = vlaneseq
    %v143 = vshrl.u32 %v142, 7
    %v144 = vsub.s32 0, %v143
    %v145 = vrot.slane %v133, %v144
    %v146 = vlaneseq
    %v147 = vshrl.u32 %v146, 7
    %v148 = vsub.s32 1, %v147
    %v149 = vrot.slane %v133, %v148
    %v153 = vsel %vm45, %v83, 0
    %v156 = vsel %vm45, %v84, 0
    %158 = vmatprep.subr.mxu0 %v86
    %159 = vmatpush1.msra.mxu0 %v85
    %160 = vmatprep.subr.mxu0 %v88
    %161 = vmatpush1.msra.mxu0 %v87
    %162 = vmatprep.subr.mxu0 %v90
    %163 = vmatpush1.msra.mxu0 %v89
    %164 = vmatprep.subr.mxu0 %v92
    %165 = vmatpush1.msra.mxu0 %v91
    %166 = vmatprep.subr.mxu0 %v94
    %167 = vmatpush1.msra.mxu0 %v93
    %168 = vmatprep.subr.mxu0 %v96
    %169 = vmatpush1.msra.mxu0 %v95
    %170 = vmatprep.subr.mxu0 %v98
    %171 = vmatpush1.msra.mxu0 %v97
    %172 = vmatprep.subr.mxu0 %v100
    %173 = vmatpush1.msra.mxu0 %v99
    %174 = vmatprep.subr.mxu0 0.0
    %175 = vmatpush1.msra.mxu0 0.0
    %176 = vmatprep.subr.mxu0 0.0
    %177 = vmatpush1.msra.mxu0 0.0
    %178 = vmatprep.subr.mxu0 0.0
    %179 = vmatpush1.msra.mxu0 0.0
    %180 = vmatprep.subr.mxu0 0.0
    %181 = vmatpush1.msra.mxu0 0.0
    %182 = vmatprep.subr.mxu0 0.0
    %183 = vmatpush1.msra.mxu0 0.0
    %184 = vmatprep.subr.mxu0 0.0
    %185 = vmatpush1.msra.mxu0 0.0
    %186 = vmatprep.subr.mxu0 0.0
    %187 = vmatpush1.msra.mxu0 0.0
    %188 = vmatprep.subr.mxu0 0.0
    %189 = vmatpush1.msra.mxu0 0.0
    %190 = vmatprep.subr.mxu0 0.0
    %191 = vmatpush1.msra.mxu0 0.0
    %192 = vmatprep.subr.mxu0 0.0
    %193 = vmatpush1.msra.mxu0 0.0
    %194 = vmatprep.subr.mxu0 0.0
    %195 = vmatpush1.msra.mxu0 0.0
    %196 = vmatprep.subr.mxu0 0.0
    %197 = vmatpush1.msra.mxu0 0.0
    %198 = vmatprep.subr.mxu0 0.0
    %199 = vmatpush1.msra.mxu0 0.0
    %200 = vmatprep.subr.mxu0 0.0
    %201 = vmatpush1.msra.mxu0 0.0
    %202 = vmatprep.subr.mxu0 0.0
    %203 = vmatpush1.msra.mxu0 0.0
    %204 = vmatprep.subr.mxu0 0.0
    %205 = vmatpush1.msra.mxu0 0.0
    %206 = vmatprep.subr.mxu0 0.0
    %207 = vmatpush1.msra.mxu0 0.0
    %208 = vmatprep.subr.mxu0 0.0
    %209 = vmatpush1.msra.mxu0 0.0
    %210 = vmatprep.subr.mxu0 0.0
    %211 = vmatpush1.msra.mxu0 0.0
    %212 = vmatprep.subr.mxu0 0.0
    %213 = vmatpush1.msra.mxu0 0.0
    %214 = vmatprep.subr.mxu0 0.0
    %215 = vmatpush1.msra.mxu0 0.0
    %216 = vmatprep.subr.mxu0 0.0
    %217 = vmatpush1.msra.mxu0 0.0
    %218 = vmatprep.subr.mxu0 0.0
    %219 = vmatpush1.msra.mxu0 0.0
    %220 = vmatprep.subr.mxu0 0.0
    %221 = vmatpush1.msra.mxu0 0.0
    %222 = vmatprep.mubr.f32.mxu0 0.0
    %223 = vmatmul.mubr.f32.gmra.mrb[0].mxu0 %v153
    %v224 = vpop.f32.mrb[0].mxu0
    %v225 = vadd.f32 %v145, %v224
    %v226 = vpop.f32.mrb[0].mxu0
    %v227 = vadd.f32 %v149, %v226
    %228 = vmatprep.mubr.f32.mxu0 0.0
    %229 = vmatmul.mubr.f32.gmra.mrb[0].mxu0 %v156
    %v230 = vpop.f32.mrb[0].mxu0
    %v231 = vadd.f32 %v145, %v230
    %v232 = vpop.f32.mrb[0].mxu0
    %v233 = vadd.f32 %v149, %v232
    %234 = vdwg.mxu0
    %v235 = vmul.f32 %v225, 0.25
    %v236 = vmul.f32 %v231, 0.25
    %v239 = vlaneseq
    %v240 = vshrl.u32 %v239, 7
    %v241 = vsub.s32 0, %v240
    %v242 = vrot.slane %v39, %v241
    %v243 = vlaneseq
    %v244 = vshrl.u32 %v243, 7
    %v245 = vsub.s32 0, %v244
    %v246 = vrot.slane %v40, %v245
    %250 = vrot.lane.b32.xlu0 %v225, 64
    %v251 = vpop.permute.xlu0 %250
    %vm252 = vcmask 130048
    %v254 = vsel %vm252, %v235, 0
    %v256 = vsel %vm252, %v251, 0
    %258 = vmatprep.subr.mxu0 0.0
    %259 = vmatpush1.xpose.msra.mxu0 %v256
    %260 = vmatprep.subr.mxu0 0.0
    %261 = vmatpush1.xpose.msra.mxu0 0.0
    %262 = vmatprep.subr.mxu0 0.0
    %263 = vmatpush1.xpose.msra.mxu0 0.0
    %264 = vmatprep.subr.mxu0 0.0
    %265 = vmatpush1.xpose.msra.mxu0 0.0
    %266 = vmatprep.subr.mxu0 0.0
    %267 = vmatpush1.xpose.msra.mxu0 0.0
    %268 = vmatprep.subr.mxu0 0.0
    %269 = vmatpush1.xpose.msra.mxu0 0.0
    %270 = vmatprep.subr.mxu0 0.0
    %271 = vmatpush1.xpose.msra.mxu0 0.0
    %272 = vmatprep.subr.mxu0 0.0
    %273 = vmatpush1.xpose.msra.mxu0 0.0
    %274 = vmatprep.subr.mxu0 0.0
    %275 = vmatpush1.xpose.msra.mxu0 0.0
    %276 = vmatprep.subr.mxu0 0.0
    %277 = vmatpush1.xpose.msra.mxu0 0.0
    %278 = vmatprep.subr.mxu0 0.0
    %279 = vmatpush1.xpose.msra.mxu0 0.0
    %280 = vmatprep.subr.mxu0 0.0
    %281 = vmatpush1.xpose.msra.mxu0 0.0
    %282 = vmatprep.subr.mxu0 0.0
    %283 = vmatpush1.xpose.msra.mxu0 0.0
    %284 = vmatprep.subr.mxu0 0.0
    %285 = vmatpush1.xpose.msra.mxu0 0.0
    %286 = vmatprep.subr.mxu0 0.0
    %287 = vmatpush1.xpose.msra.mxu0 0.0
    %288 = vmatprep.subr.mxu0 0.0
    %289 = vmatpush1.xpose.msra.mxu0 0.0
    %290 = vmatprep.subr.mxu0 0.0
    %291 = vmatpush1.xpose.msra.mxu0 0.0
    %292 = vmatprep.subr.mxu0 0.0
    %293 = vmatpush1.xpose.msra.mxu0 0.0
    %294 = vmatprep.subr.mxu0 0.0
    %295 = vmatpush1.xpose.msra.mxu0 0.0
    %296 = vmatprep.subr.mxu0 0.0
    %297 = vmatpush1.xpose.msra.mxu0 0.0
    %298 = vmatprep.subr.mxu0 0.0
    %299 = vmatpush1.xpose.msra.mxu0 0.0
    %300 = vmatprep.subr.mxu0 0.0
    %301 = vmatpush1.xpose.msra.mxu0 0.0
    %302 = vmatprep.subr.mxu0 0.0
    %303 = vmatpush1.xpose.msra.mxu0 0.0
    %304 = vmatprep.subr.mxu0 0.0
    %305 = vmatpush1.xpose.msra.mxu0 0.0
    %306 = vmatprep.subr.mxu0 0.0
    %307 = vmatpush1.xpose.msra.mxu0 0.0
    %308 = vmatprep.subr.mxu0 0.0
    %309 = vmatpush1.xpose.msra.mxu0 0.0
    %310 = vmatprep.subr.mxu0 0.0
    %311 = vmatpush1.xpose.msra.mxu0 0.0
    %312 = vmatprep.subr.mxu0 0.0
    %313 = vmatpush1.xpose.msra.mxu0 0.0
    %314 = vmatprep.subr.mxu0 0.0
    %315 = vmatpush1.xpose.msra.mxu0 0.0
    %316 = vmatprep.subr.mxu0 0.0
    %317 = vmatpush1.xpose.msra.mxu0 0.0
    %318 = vmatprep.subr.mxu0 0.0
    %319 = vmatpush1.xpose.msra.mxu0 0.0
    %320 = vmatprep.subr.mxu0 0.0
    %321 = vmatpush1.xpose.msra.mxu0 0.0
    %322 = vmatprep.mubr.f32.mxu0 0.0
    %323 = vmatmul.mubr.f32.gmra.mrb[0].mxu0 %v254
    %v324 = vpop.f32.mrb[0].mxu0
    %v325 = vadd.f32 %v242, %v324
    %v326 = vpop.f32.mrb[0].mxu0
    %327 = vdwg.mxu0
    %329 = vrot.lane.b32.xlu0 %v231, 64
    %v330 = vpop.permute.xlu0 %329
    %v332 = vsel %vm252, %v236, 0
    %v334 = vsel %vm252, %v330, 0
    %336 = vmatprep.subr.mxu0 0.0
    %337 = vmatpush1.xpose.msra.mxu0 %v334
    %338 = vmatprep.subr.mxu0 0.0
    %339 = vmatpush1.xpose.msra.mxu0 0.0
    %340 = vmatprep.subr.mxu0 0.0
    %341 = vmatpush1.xpose.msra.mxu0 0.0
    %342 = vmatprep.subr.mxu0 0.0
    %343 = vmatpush1.xpose.msra.mxu0 0.0
    %344 = vmatprep.subr.mxu0 0.0
    %345 = vmatpush1.xpose.msra.mxu0 0.0
    %346 = vmatprep.subr.mxu0 0.0
    %347 = vmatpush1.xpose.msra.mxu0 0.0
    %348 = vmatprep.subr.mxu0 0.0
    %349 = vmatpush1.xpose.msra.mxu0 0.0
    %350 = vmatprep.subr.mxu0 0.0
    %351 = vmatpush1.xpose.msra.mxu0 0.0
    %352 = vmatprep.subr.mxu0 0.0
    %353 = vmatpush1.xpose.msra.mxu0 0.0
    %354 = vmatprep.subr.mxu0 0.0
    %355 = vmatpush1.xpose.msra.mxu0 0.0
    %356 = vmatprep.subr.mxu0 0.0
    %357 = vmatpush1.xpose.msra.mxu0 0.0
    %358 = vmatprep.subr.mxu0 0.0
    %359 = vmatpush1.xpose.msra.mxu0 0.0
    %360 = vmatprep.subr.mxu0 0.0
    %361 = vmatpush1.xpose.msra.mxu0 0.0
    %362 = vmatprep.subr.mxu0 0.0
    %363 = vmatpush1.xpose.msra.mxu0 0.0
    %364 = vmatprep.subr.mxu0 0.0
    %365 = vmatpush1.xpose.msra.mxu0 0.0
    %366 = vmatprep.subr.mxu0 0.0
    %367 = vmatpush1.xpose.msra.mxu0 0.0
    %368 = vmatprep.subr.mxu0 0.0
    %369 = vmatpush1.xpose.msra.mxu0 0.0
    %370 = vmatprep.subr.mxu0 0.0
    %371 = vmatpush1.xpose.msra.mxu0 0.0
    %372 = vmatprep.subr.mxu0 0.0
    %373 = vmatpush1.xpose.msra.mxu0 0.0
    %374 = vmatprep.subr.mxu0 0.0
    %375 = vmatpush1.xpose.msra.mxu0 0.0
    %376 = vmatprep.subr.mxu0 0.0
    %377 = vmatpush1.xpose.msra.mxu0 0.0
    %378 = vmatprep.subr.mxu0 0.0
    %379 = vmatpush1.xpose.msra.mxu0 0.0
    %380 = vmatprep.subr.mxu0 0.0
    %381 = vmatpush1.xpose.msra.mxu0 0.0
    %382 = vmatprep.subr.mxu0 0.0
    %383 = vmatpush1.xpose.msra.mxu0 0.0
    %384 = vmatprep.subr.mxu0 0.0
    %385 = vmatpush1.xpose.msra.mxu0 0.0
    %386 = vmatprep.subr.mxu0 0.0
    %387 = vmatpush1.xpose.msra.mxu0 0.0
    %388 = vmatprep.subr.mxu0 0.0
    %389 = vmatpush1.xpose.msra.mxu0 0.0
    %390 = vmatprep.subr.mxu0 0.0
    %391 = vmatpush1.xpose.msra.mxu0 0.0
    %392 = vmatprep.subr.mxu0 0.0
    %393 = vmatpush1.xpose.msra.mxu0 0.0
    %394 = vmatprep.subr.mxu0 0.0
    %395 = vmatpush1.xpose.msra.mxu0 0.0
    %396 = vmatprep.subr.mxu0 0.0
    %397 = vmatpush1.xpose.msra.mxu0 0.0
    %398 = vmatprep.subr.mxu0 0.0
    %399 = vmatpush1.xpose.msra.mxu0 0.0
    %400 = vmatprep.mubr.f32.mxu0 0.0
    %401 = vmatmul.mubr.f32.gmra.mrb[0].mxu0 %v332
    %v402 = vpop.f32.mrb[0].mxu0
    %v403 = vadd.f32 %v246, %v402
    %v404 = vpop.f32.mrb[0].mxu0
    %405 = vdwg.mxu0
    %vm406 = vcmask 64512
    %v407 = vsel %vm406, %v325, -inf
    %408 = vmax.xlane.f32.xlu0 %v407
    %v409 = vpop.xlane.xlu0 %408
    %v410 = vsel %vm406, %v403, -inf
    %411 = vmax.xlane.f32.xlu0 %v410
    %v412 = vpop.xlane.xlu0 %411
    %v413 = vsub.f32 %v325, %v409
    %v414 = vsub.f32 %v403, %v412
    %v415 = vmul.f32 %v413, 1.442695
    %v416 = vpow.pop %v415
    %v417 = vmul.f32 %v414, 1.442695
    %v418 = vpow.pop %v417
    %v419 = vsel %vm406, %v416, 0.0
    %420 = vadd.xlane.f32.xlu0 %v419
    %v421 = vpop.xlane.xlu0 %420
    %v422 = vsel %vm406, %v418, 0.0
    %423 = vadd.xlane.f32.xlu0 %v422
    %v424 = vpop.xlane.xlu0 %423
    %v425 = vrcp.pop %v421
    %v426 = vrcp.pop %v424
    %v427 = vmul.f32 %v416, %v425
    %v428 = vmul.f32 %v418, %v426
    %v430 = vsel %vm406, %v427, 0
    %432 = vmatprep.subr.mxu0 0.0
    %433 = vmatpush1.msra.mxu0 %v227
    %434 = vmatprep.subr.mxu0 0.0
    %435 = vmatpush1.msra.mxu0 0.0
    %436 = vmatprep.subr.mxu0 0.0
    %437 = vmatpush1.msra.mxu0 0.0
    %438 = vmatprep.subr.mxu0 0.0
    %439 = vmatpush1.msra.mxu0 0.0
    %440 = vmatprep.subr.mxu0 0.0
    %441 = vmatpush1.msra.mxu0 0.0
    %442 = vmatprep.subr.mxu0 0.0
    %443 = vmatpush1.msra.mxu0 0.0
    %444 = vmatprep.subr.mxu0 0.0
    %445 = vmatpush1.msra.mxu0 0.0
    %446 = vmatprep.subr.mxu0 0.0
    %447 = vmatpush1.msra.mxu0 0.0
    %448 = vmatprep.subr.mxu0 0.0
    %449 = vmatpush1.msra.mxu0 0.0
    %450 = vmatprep.subr.mxu0 0.0
    %451 = vmatpush1.msra.mxu0 0.0
    %452 = vmatprep.subr.mxu0 0.0
    %453 = vmatpush1.msra.mxu0 0.0
    %454 = vmatprep.subr.mxu0 0.0
    %455 = vmatpush1.msra.mxu0 0.0
    %456 = vmatprep.subr.mxu0 0.0
    %457 = vmatpush1.msra.mxu0 0.0
    %458 = vmatprep.subr.mxu0 0.0
    %459 = vmatpush1.msra.mxu0 0.0
    %460 = vmatprep.subr.mxu0 0.0
    %461 = vmatpush1.msra.mxu0 0.0
    %462 = vmatprep.subr.mxu0 0.0
    %463 = vmatpush1.msra.mxu0 0.0
    %464 = vmatprep.subr.mxu0 0.0
    %465 = vmatpush1.msra.mxu0 0.0
    %466 = vmatprep.subr.mxu0 0.0
    %467 = vmatpush1.msra.mxu0 0.0
    %468 = vmatprep.subr.mxu0 0.0
    %469 = vmatpush1.msra.mxu0 0.0
    %470 = vmatprep.subr.mxu0 0.0
    %471 = vmatpush1.msra.mxu0 0.0
    %472 = vmatprep.subr.mxu0 0.0
    %473 = vmatpush1.msra.mxu0 0.0
    %474 = vmatprep.subr.mxu0 0.0
    %475 = vmatpush1.msra.mxu0 0.0
    %476 = vmatprep.subr.mxu0 0.0
    %477 = vmatpush1.msra.mxu0 0.0
    %478 = vmatprep.subr.mxu0 0.0
    %479 = vmatpush1.msra.mxu0 0.0
    %480 = vmatprep.subr.mxu0 0.0
    %481 = vmatpush1.msra.mxu0 0.0
    %482 = vmatprep.subr.mxu0 0.0
    %483 = vmatpush1.msra.mxu0 0.0
    %484 = vmatprep.subr.mxu0 0.0
    %485 = vmatpush1.msra.mxu0 0.0
    %486 = vmatprep.subr.mxu0 0.0
    %487 = vmatpush1.msra.mxu0 0.0
    %488 = vmatprep.subr.mxu0 0.0
    %489 = vmatpush1.msra.mxu0 0.0
    %490 = vmatprep.subr.mxu0 0.0
    %491 = vmatpush1.msra.mxu0 0.0
    %492 = vmatprep.subr.mxu0 0.0
    %493 = vmatpush1.msra.mxu0 0.0
    %494 = vmatprep.subr.mxu0 0.0
    %495 = vmatpush1.msra.mxu0 0.0
    %496 = vmatprep.mubr.f32.mxu0 0.0
    %497 = vmatmul.mubr.f32.gmra.mrb[0].mxu0 %v430
    %v498 = vpop.f32.mrb[0].mxu0
    %v499 = vadd.f32 0.0, %v498
    %v500 = vpop.f32.mrb[0].mxu0
    %501 = vdwg.mxu0
    %v503 = vsel %vm406, %v428, 0
    %505 = vmatprep.subr.mxu0 0.0
    %506 = vmatpush1.msra.mxu0 %v233
    %507 = vmatprep.subr.mxu0 0.0
    %508 = vmatpush1.msra.mxu0 0.0
    %509 = vmatprep.subr.mxu0 0.0
    %510 = vmatpush1.msra.mxu0 0.0
    %511 = vmatprep.subr.mxu0 0.0
    %512 = vmatpush1.msra.mxu0 0.0
    %513 = vmatprep.subr.mxu0 0.0
    %514 = vmatpush1.msra.mxu0 0.0
    %515 = vmatprep.subr.mxu0 0.0
    %516 = vmatpush1.msra.mxu0 0.0
    %517 = vmatprep.subr.mxu0 0.0
    %518 = vmatpush1.msra.mxu0 0.0
    %519 = vmatprep.subr.mxu0 0.0
    %520 = vmatpush1.msra.mxu0 0.0
    %521 = vmatprep.subr.mxu0 0.0
    %522 = vmatpush1.msra.mxu0 0.0
    %523 = vmatprep.subr.mxu0 0.0
    %524 = vmatpush1.msra.mxu0 0.0
    %525 = vmatprep.subr.mxu0 0.0
    %526 = vmatpush1.msra.mxu0 0.0
    %527 = vmatprep.subr.mxu0 0.0
    %528 = vmatpush1.msra.mxu0 0.0
    %529 = vmatprep.subr.mxu0 0.0
    %530 = vmatpush1.msra.mxu0 0.0
    %531 = vmatprep.subr.mxu0 0.0
    %532 = vmatpush1.msra.mxu0 0.0
    %533 = vmatprep.subr.mxu0 0.0
    %534 = vmatpush1.msra.mxu0 0.0
    %535 = vmatprep.subr.mxu0 0.0
    %536 = vmatpush1.msra.mxu0 0.0
    %537 = vmatprep.subr.mxu0 0.0
    %538 = vmatpush1.msra.mxu0 0.0
    %539 = vmatprep.subr.mxu0 0.0
    %540 = vmatpush1.msra.mxu0 0.0
    %541 = vmatprep.subr.mxu0 0.0
    %542 = vmatpush1.msra.mxu0 0.0
    %543 = vmatprep.subr.mxu0 0.0
    %544 = vmatpush1.msra.mxu0 0.0
    %545 = vmatprep.subr.mxu0 0.0
    %546 = vmatpush1.msra.mxu0 0.0
    %547 = vmatprep.subr.mxu0 0.0
    %548 = vmatpush1.msra.mxu0 0.0
    %549 = vmatprep.subr.mxu0 0.0
    %550 = vmatpush1.msra.mxu0 0.0
    %551 = vmatprep.subr.mxu0 0.0
    %552 = vmatpush1.msra.mxu0 0.0
    %553 = vmatprep.subr.mxu0 0.0
    %554 = vmatpush1.msra.mxu0 0.0
    %555 = vmatprep.subr.mxu0 0.0
    %556 = vmatpush1.msra.mxu0 0.0
    %557 = vmatprep.subr.mxu0 0.0
    %558 = vmatpush1.msra.mxu0 0.0
    %559 = vmatprep.subr.mxu0 0.0
    %560 = vmatpush1.msra.mxu0 0.0
    %561 = vmatprep.subr.mxu0 0.0
    %562 = vmatpush1.msra.mxu0 0.0
    %563 = vmatprep.subr.mxu0 0.0
    %564 = vmatpush1.msra.mxu0 0.0
    %565 = vmatprep.subr.mxu0 0.0
    %566 = vmatpush1.msra.mxu0 0.0
    %567 = vmatprep.subr.mxu0 0.0
    %568 = vmatpush1.msra.mxu0 0.0
    %569 = vmatprep.mubr.f32.mxu0 0.0
    %570 = vmatmul.mubr.f32.gmra.mrb[0].mxu0 %v503
    %v571 = vpop.f32.mrb[0].mxu0
    %v572 = vadd.f32 0.0, %v571
    %v573 = vpop.f32.mrb[0].mxu0
    %574 = vdwg.mxu0
    %575 = vrot.lane.b32.xlu0 %v235, 112
    %v576 = vpop.permute.xlu0 %575
    %577 = vrot.lane.b32.xlu0 %v225, 48
    %v578 = vpop.permute.xlu0 %577
    %v579 = vsel %vm252, %v576, 0
    %v581 = vsel %vm252, %v578, 0
    %583 = vmatprep.subr.mxu0 0.0
    %584 = vmatpush1.xpose.msra.mxu0 %v581
    %585 = vmatprep.subr.mxu0 0.0
    %586 = vmatpush1.xpose.msra.mxu0 0.0
    %587 = vmatprep.subr.mxu0 0.0
    %588 = vmatpush1.xpose.msra.mxu0 0.0
    %589 = vmatprep.subr.mxu0 0.0
    %590 = vmatpush1.xpose.msra.mxu0 0.0
    %591 = vmatprep.subr.mxu0 0.0
    %592 = vmatpush1.xpose.msra.mxu0 0.0
    %593 = vmatprep.subr.mxu0 0.0
    %594 = vmatpush1.xpose.msra.mxu0 0.0
    %595 = vmatprep.subr.mxu0 0.0
    %596 = vmatpush1.xpose.msra.mxu0 0.0
    %597 = vmatprep.subr.mxu0 0.0
    %598 = vmatpush1.xpose.msra.mxu0 0.0
    %599 = vmatprep.subr.mxu0 0.0
    %600 = vmatpush1.xpose.msra.mxu0 0.0
    %601 = vmatprep.subr.mxu0 0.0
    %602 = vmatpush1.xpose.msra.mxu0 0.0
    %603 = vmatprep.subr.mxu0 0.0
    %604 = vmatpush1.xpose.msra.mxu0 0.0
    %605 = vmatprep.subr.mxu0 0.0
    %606 = vmatpush1.xpose.msra.mxu0 0.0
    %607 = vmatprep.subr.mxu0 0.0
    %608 = vmatpush1.xpose.msra.mxu0 0.0
    %609 = vmatprep.subr.mxu0 0.0
    %610 = vmatpush1.xpose.msra.mxu0 0.0
    %611 = vmatprep.subr.mxu0 0.0
    %612 = vmatpush1.xpose.msra.mxu0 0.0
    %613 = vmatprep.subr.mxu0 0.0
    %614 = vmatpush1.xpose.msra.mxu0 0.0
    %615 = vmatprep.subr.mxu0 0.0
    %616 = vmatpush1.xpose.msra.mxu0 0.0
    %617 = vmatprep.subr.mxu0 0.0
    %618 = vmatpush1.xpose.msra.mxu0 0.0
    %619 = vmatprep.subr.mxu0 0.0
    %620 = vmatpush1.xpose.msra.mxu0 0.0
    %621 = vmatprep.subr.mxu0 0.0
    %622 = vmatpush1.xpose.msra.mxu0 0.0
    %623 = vmatprep.subr.mxu0 0.0
    %624 = vmatpush1.xpose.msra.mxu0 0.0
    %625 = vmatprep.subr.mxu0 0.0
    %626 = vmatpush1.xpose.msra.mxu0 0.0
    %627 = vmatprep.subr.mxu0 0.0
    %628 = vmatpush1.xpose.msra.mxu0 0.0
    %629 = vmatprep.subr.mxu0 0.0
    %630 = vmatpush1.xpose.msra.mxu0 0.0
    %631 = vmatprep.subr.mxu0 0.0
    %632 = vmatpush1.xpose.msra.mxu0 0.0
    %633 = vmatprep.subr.mxu0 0.0
    %634 = vmatpush1.xpose.msra.mxu0 0.0
    %635 = vmatprep.subr.mxu0 0.0
    %636 = vmatpush1.xpose.msra.mxu0 0.0
    %637 = vmatprep.subr.mxu0 0.0
    %638 = vmatpush1.xpose.msra.mxu0 0.0
    %639 = vmatprep.subr.mxu0 0.0
    %640 = vmatpush1.xpose.msra.mxu0 0.0
    %641 = vmatprep.subr.mxu0 0.0
    %642 = vmatpush1.xpose.msra.mxu0 0.0
    %643 = vmatprep.subr.mxu0 0.0
    %644 = vmatpush1.xpose.msra.mxu0 0.0
    %645 = vmatprep.subr.mxu0 0.0
    %646 = vmatpush1.xpose.msra.mxu0 0.0
    %647 = vmatprep.mubr.f32.mxu0 0.0
    %648 = vmatmul.mubr.f32.gmra.mrb[0].mxu0 %v579
    %v649 = vpop.f32.mrb[0].mxu0
    %v650 = vadd.f32 %v242, %v649
    %v651 = vpop.f32.mrb[0].mxu0
    %652 = vdwg.mxu0
    %653 = vrot.lane.b32.xlu0 %v236, 112
    %v654 = vpop.permute.xlu0 %653
    %655 = vrot.lane.b32.xlu0 %v231, 48
    %v656 = vpop.permute.xlu0 %655
    %v657 = vsel %vm252, %v654, 0
    %v659 = vsel %vm252, %v656, 0
    %661 = vmatprep.subr.mxu0 0.0
    %662 = vmatpush1.xpose.msra.mxu0 %v659
    %663 = vmatprep.subr.mxu0 0.0
    %664 = vmatpush1.xpose.msra.mxu0 0.0
    %665 = vmatprep.subr.mxu0 0.0
    %666 = vmatpush1.xpose.msra.mxu0 0.0
    %667 = vmatprep.subr.mxu0 0.0
    %668 = vmatpush1.xpose.msra.mxu0 0.0
    %669 = vmatprep.subr.mxu0 0.0
    %670 = vmatpush1.xpose.msra.mxu0 0.0
    %671 = vmatprep.subr.mxu0 0.0
    %672 = vmatpush1.xpose.msra.mxu0 0.0
    %673 = vmatprep.subr.mxu0 0.0
    %674 = vmatpush1.xpose.msra.mxu0 0.0
    %675 = vmatprep.subr.mxu0 0.0
    %676 = vmatpush1.xpose.msra.mxu0 0.0
    %677 = vmatprep.subr.mxu0 0.0
    %678 = vmatpush1.xpose.msra.mxu0 0.0
    %679 = vmatprep.subr.mxu0 0.0
    %680 = vmatpush1.xpose.msra.mxu0 0.0
    %681 = vmatprep.subr.mxu0 0.0
    %682 = vmatpush1.xpose.msra.mxu0 0.0
    %683 = vmatprep.subr.mxu0 0.0
    %684 = vmatpush1.xpose.msra.mxu0 0.0
    %685 = vmatprep.subr.mxu0 0.0
    %686 = vmatpush1.xpose.msra.mxu0 0.0
    %687 = vmatprep.subr.mxu0 0.0
    %688 = vmatpush1.xpose.msra.mxu0 0.0
    %689 = vmatprep.subr.mxu0 0.0
    %690 = vmatpush1.xpose.msra.mxu0 0.0
    %691 = vmatprep.subr.mxu0 0.0
    %692 = vmatpush1.xpose.msra.mxu0 0.0
    %693 = vmatprep.subr.mxu0 0.0
    %694 = vmatpush1.xpose.msra.mxu0 0.0
    %695 = vmatprep.subr.mxu0 0.0
    %696 = vmatpush1.xpose.msra.mxu0 0.0
    %697 = vmatprep.subr.mxu0 0.0
    %698 = vmatpush1.xpose.msra.mxu0 0.0
    %699 = vmatprep.subr.mxu0 0.0
    %700 = vmatpush1.xpose.msra.mxu0 0.0
    %701 = vmatprep.subr.mxu0 0.0
    %702 = vmatpush1.xpose.msra.mxu0 0.0
    %703 = vmatprep.subr.mxu0 0.0
    %704 = vmatpush1.xpose.msra.mxu0 0.0
    %705 = vmatprep.subr.mxu0 0.0
    %706 = vmatpush1.xpose.msra.mxu0 0.0
    %707 = vmatprep.subr.mxu0 0.0
    %708 = vmatpush1.xpose.msra.mxu0 0.0
    %709 = vmatprep.subr.mxu0 0.0
    %710 = vmatpush1.xpose.msra.mxu0 0.0
    %711 = vmatprep.subr.mxu0 0.0
    %712 = vmatpush1.xpose.msra.mxu0 0.0
    %713 = vmatprep.subr.mxu0 0.0
    %714 = vmatpush1.xpose.msra.mxu0 0.0
    %715 = vmatprep.subr.mxu0 0.0
    %716 = vmatpush1.xpose.msra.mxu0 0.0
    %717 = vmatprep.subr.mxu0 0.0
    %718 = vmatpush1.xpose.msra.mxu0 0.0
    %719 = vmatprep.subr.mxu0 0.0
    %720 = vmatpush1.xpose.msra.mxu0 0.0
    %721 = vmatprep.subr.mxu0 0.0
    %722 = vmatpush1.xpose.msra.mxu0 0.0
    %723 = vmatprep.subr.mxu0 0.0
    %724 = vmatpush1.xpose.msra.mxu0 0.0
    %725 = vmatprep.mubr.f32.mxu0 0.0
    %726 = vmatmul.mubr.f32.gmra.mrb[0].mxu0 %v657
    %v727 = vpop.f32.mrb[0].mxu0
    %v728 = vadd.f32 %v246, %v727
    %v729 = vpop.f32.mrb[0].mxu0
    %730 = vdwg.mxu0
    %v731 = vsel %vm406, %v650, -inf
    %732 = vmax.xlane.f32.xlu0 %v731
    %v733 = vpop.xlane.xlu0 %732
    %v734 = vsel %vm406, %v728, -inf
    %735 = vmax.xlane.f32.xlu0 %v734
    %v736 = vpop.xlane.xlu0 %735
    %v737 = vsub.f32 %v650, %v733
    %v738 = vsub.f32 %v728, %v736
    %v739 = vmul.f32 %v737, 1.442695
    %v740 = vpow.pop %v739
    %v741 = vmul.f32 %v738, 1.442695
    %v742 = vpow.pop %v741
    %v743 = vsel %vm406, %v740, 0.0
    %744 = vadd.xlane.f32.xlu0 %v743
    %v745 = vpop.xlane.xlu0 %744
    %v746 = vsel %vm406, %v742, 0.0
    %747 = vadd.xlane.f32.xlu0 %v746
    %v748 = vpop.xlane.xlu0 %747
    %v749 = vrcp.pop %v745
    %v750 = vrcp.pop %v748
    %v751 = vmul.f32 %v740, %v749
    %v752 = vmul.f32 %v742, %v750
    %754 = vrot.lane.b32.xlu0 %v227, 112
    %v755 = vpop.permute.xlu0 %754
    %v758 = vsel %vm406, %v751, 0
    %760 = vmatprep.subr.mxu0 0.0
    %761 = vmatpush1.msra.mxu0 %v755
    %762 = vmatprep.subr.mxu0 0.0
    %763 = vmatpush1.msra.mxu0 0.0
    %764 = vmatprep.subr.mxu0 0.0
    %765 = vmatpush1.msra.mxu0 0.0
    %766 = vmatprep.subr.mxu0 0.0
    %767 = vmatpush1.msra.mxu0 0.0
    %768 = vmatprep.subr.mxu0 0.0
    %769 = vmatpush1.msra.mxu0 0.0
    %770 = vmatprep.subr.mxu0 0.0
    %771 = vmatpush1.msra.mxu0 0.0
    %772 = vmatprep.subr.mxu0 0.0
    %773 = vmatpush1.msra.mxu0 0.0
    %774 = vmatprep.subr.mxu0 0.0
    %775 = vmatpush1.msra.mxu0 0.0
    %776 = vmatprep.subr.mxu0 0.0
    %777 = vmatpush1.msra.mxu0 0.0
    %778 = vmatprep.subr.mxu0 0.0
    %779 = vmatpush1.msra.mxu0 0.0
    %780 = vmatprep.subr.mxu0 0.0
    %781 = vmatpush1.msra.mxu0 0.0
    %782 = vmatprep.subr.mxu0 0.0
    %783 = vmatpush1.msra.mxu0 0.0
    %784 = vmatprep.subr.mxu0 0.0
    %785 = vmatpush1.msra.mxu0 0.0
    %786 = vmatprep.subr.mxu0 0.0
    %787 = vmatpush1.msra.mxu0 0.0
    %788 = vmatprep.subr.mxu0 0.0
    %789 = vmatpush1.msra.mxu0 0.0
    %790 = vmatprep.subr.mxu0 0.0
    %791 = vmatpush1.msra.mxu0 0.0
    %792 = vmatprep.subr.mxu0 0.0
    %793 = vmatpush1.msra.mxu0 0.0
    %794 = vmatprep.subr.mxu0 0.0
    %795 = vmatpush1.msra.mxu0 0.0
    %796 = vmatprep.subr.mxu0 0.0
    %797 = vmatpush1.msra.mxu0 0.0
    %798 = vmatprep.subr.mxu0 0.0
    %799 = vmatpush1.msra.mxu0 0.0
    %800 = vmatprep.subr.mxu0 0.0
    %801 = vmatpush1.msra.mxu0 0.0
    %802 = vmatprep.subr.mxu0 0.0
    %803 = vmatpush1.msra.mxu0 0.0
    %804 = vmatprep.subr.mxu0 0.0
    %805 = vmatpush1.msra.mxu0 0.0
    %806 = vmatprep.subr.mxu0 0.0
    %807 = vmatpush1.msra.mxu0 0.0
    %808 = vmatprep.subr.mxu0 0.0
    %809 = vmatpush1.msra.mxu0 0.0
    %810 = vmatprep.subr.mxu0 0.0
    %811 = vmatpush1.msra.mxu0 0.0
    %812 = vmatprep.subr.mxu0 0.0
    %813 = vmatpush1.msra.mxu0 0.0
    %814 = vmatprep.subr.mxu0 0.0
    %815 = vmatpush1.msra.mxu0 0.0
    %816 = vmatprep.subr.mxu0 0.0
    %817 = vmatpush1.msra.mxu0 0.0
    %818 = vmatprep.subr.mxu0 0.0
    %819 = vmatpush1.msra.mxu0 0.0
    %820 = vmatprep.subr.mxu0 0.0
    %821 = vmatpush1.msra.mxu0 0.0
    %822 = vmatprep.subr.mxu0 0.0
    %823 = vmatpush1.msra.mxu0 0.0
    %824 = vmatprep.mubr.f32.mxu0 0.0
    %825 = vmatmul.mubr.f32.gmra.mrb[0].mxu0 %v758
    %v826 = vpop.f32.mrb[0].mxu0
    %v827 = vadd.f32 0.0, %v826
    %v828 = vpop.f32.mrb[0].mxu0
    %829 = vdwg.mxu0
    %831 = vrot.lane.b32.xlu0 %v233, 112
    %v832 = vpop.permute.xlu0 %831
    %v835 = vsel %vm406, %v752, 0
    %837 = vmatprep.subr.mxu0 0.0
    %838 = vmatpush1.msra.mxu0 %v832
    %839 = vmatprep.subr.mxu0 0.0
    %840 = vmatpush1.msra.mxu0 0.0
    %841 = vmatprep.subr.mxu0 0.0
    %842 = vmatpush1.msra.mxu0 0.0
    %843 = vmatprep.subr.mxu0 0.0
    %844 = vmatpush1.msra.mxu0 0.0
    %845 = vmatprep.subr.mxu0 0.0
    %846 = vmatpush1.msra.mxu0 0.0
    %847 = vmatprep.subr.mxu0 0.0
    %848 = vmatpush1.msra.mxu0 0.0
    %849 = vmatprep.subr.mxu0 0.0
    %850 = vmatpush1.msra.mxu0 0.0
    %851 = vmatprep.subr.mxu0 0.0
    %852 = vmatpush1.msra.mxu0 0.0
    %853 = vmatprep.subr.mxu0 0.0
    %854 = vmatpush1.msra.mxu0 0.0
    %855 = vmatprep.subr.mxu0 0.0
    %856 = vmatpush1.msra.mxu0 0.0
    %857 = vmatprep.subr.mxu0 0.0
    %858 = vmatpush1.msra.mxu0 0.0
    %859 = vmatprep.subr.mxu0 0.0
    %860 = vmatpush1.msra.mxu0 0.0
    %861 = vmatprep.subr.mxu0 0.0
    %862 = vmatpush1.msra.mxu0 0.0
    %863 = vmatprep.subr.mxu0 0.0
    %864 = vmatpush1.msra.mxu0 0.0
    %865 = vmatprep.subr.mxu0 0.0
    %866 = vmatpush1.msra.mxu0 0.0
    %867 = vmatprep.subr.mxu0 0.0
    %868 = vmatpush1.msra.mxu0 0.0
    %869 = vmatprep.subr.mxu0 0.0
    %870 = vmatpush1.msra.mxu0 0.0
    %871 = vmatprep.subr.mxu0 0.0
    %872 = vmatpush1.msra.mxu0 0.0
    %873 = vmatprep.subr.mxu0 0.0
    %874 = vmatpush1.msra.mxu0 0.0
    %875 = vmatprep.subr.mxu0 0.0
    %876 = vmatpush1.msra.mxu0 0.0
    %877 = vmatprep.subr.mxu0 0.0
    %878 = vmatpush1.msra.mxu0 0.0
    %879 = vmatprep.subr.mxu0 0.0
    %880 = vmatpush1.msra.mxu0 0.0
    %881 = vmatprep.subr.mxu0 0.0
    %882 = vmatpush1.msra.mxu0 0.0
    %883 = vmatprep.subr.mxu0 0.0
    %884 = vmatpush1.msra.mxu0 0.0
    %885 = vmatprep.subr.mxu0 0.0
    %886 = vmatpush1.msra.mxu0 0.0
    %887 = vmatprep.subr.mxu0 0.0
    %888 = vmatpush1.msra.mxu0 0.0
    %889 = vmatprep.subr.mxu0 0.0
    %890 = vmatpush1.msra.mxu0 0.0
    %891 = vmatprep.subr.mxu0 0.0
    %892 = vmatpush1.msra.mxu0 0.0
    %893 = vmatprep.subr.mxu0 0.0
    %894 = vmatpush1.msra.mxu0 0.0
    %895 = vmatprep.subr.mxu0 0.0
    %896 = vmatpush1.msra.mxu0 0.0
    %897 = vmatprep.subr.mxu0 0.0
    %898 = vmatpush1.msra.mxu0 0.0
    %899 = vmatprep.subr.mxu0 0.0
    %900 = vmatpush1.msra.mxu0 0.0
    %901 = vmatprep.mubr.f32.mxu0 0.0
    %902 = vmatmul.mubr.f32.gmra.mrb[0].mxu0 %v835
    %v903 = vpop.f32.mrb[0].mxu0
    %v904 = vadd.f32 0.0, %v903
    %v905 = vpop.f32.mrb[0].mxu0
    %906 = vdwg.mxu0
    %907 = vrot.lane.b32.xlu0 %v235, 96
    %v908 = vpop.permute.xlu0 %907
    %909 = vrot.lane.b32.xlu0 %v225, 32
    %v910 = vpop.permute.xlu0 %909
    %v911 = vsel %vm252, %v908, 0
    %v913 = vsel %vm252, %v910, 0
    %915 = vmatprep.subr.mxu0 0.0
    %916 = vmatpush1.xpose.msra.mxu0 %v913
    %917 = vmatprep.subr.mxu0 0.0
    %918 = vmatpush1.xpose.msra.mxu0 0.0
    %919 = vmatprep.subr.mxu0 0.0
    %920 = vmatpush1.xpose.msra.mxu0 0.0
    %921 = vmatprep.subr.mxu0 0.0
    %922 = vmatpush1.xpose.msra.mxu0 0.0
    %923 = vmatprep.subr.mxu0 0.0
    %924 = vmatpush1.xpose.msra.mxu0 0.0
    %925 = vmatprep.subr.mxu0 0.0
    %926 = vmatpush1.xpose.msra.mxu0 0.0
    %927 = vmatprep.subr.mxu0 0.0
    %928 = vmatpush1.xpose.msra.mxu0 0.0
    %929 = vmatprep.subr.mxu0 0.0
    %930 = vmatpush1.xpose.msra.mxu0 0.0
    %931 = vmatprep.subr.mxu0 0.0
    %932 = vmatpush1.xpose.msra.mxu0 0.0
    %933 = vmatprep.subr.mxu0 0.0
    %934 = vmatpush1.xpose.msra.mxu0 0.0
    %935 = vmatprep.subr.mxu0 0.0
    %936 = vmatpush1.xpose.msra.mxu0 0.0
    %937 = vmatprep.subr.mxu0 0.0
    %938 = vmatpush1.xpose.msra.mxu0 0.0
    %939 = vmatprep.subr.mxu0 0.0
    %940 = vmatpush1.xpose.msra.mxu0 0.0
    %941 = vmatprep.subr.mxu0 0.0
    %942 = vmatpush1.xpose.msra.mxu0 0.0
    %943 = vmatprep.subr.mxu0 0.0
    %944 = vmatpush1.xpose.msra.mxu0 0.0
    %945 = vmatprep.subr.mxu0 0.0
    %946 = vmatpush1.xpose.msra.mxu0 0.0
    %947 = vmatprep.subr.mxu0 0.0
    %948 = vmatpush1.xpose.msra.mxu0 0.0
    %949 = vmatprep.subr.mxu0 0.0
    %950 = vmatpush1.xpose.msra.mxu0 0.0
    %951 = vmatprep.subr.mxu0 0.0
    %952 = vmatpush1.xpose.msra.mxu0 0.0
    %953 = vmatprep.subr.mxu0 0.0
    %954 = vmatpush1.xpose.msra.mxu0 0.0
    %955 = vmatprep.subr.mxu0 0.0
    %956 = vmatpush1.xpose.msra.mxu0 0.0
    %957 = vmatprep.subr.mxu0 0.0
    %958 = vmatpush1.xpose.msra.mxu0 0.0
    %959 = vmatprep.subr.mxu0 0.0
    %960 = vmatpush1.xpose.msra.mxu0 0.0
    %961 = vmatprep.subr.mxu0 0.0
    %962 = vmatpush1.xpose.msra.mxu0 0.0
    %963 = vmatprep.subr.mxu0 0.0
    %964 = vmatpush1.xpose.msra.mxu0 0.0
    %965 = vmatprep.subr.mxu0 0.0
    %966 = vmatpush1.xpose.msra.mxu0 0.0
    %967 = vmatprep.subr.mxu0 0.0
    %968 = vmatpush1.xpose.msra.mxu0 0.0
    %969 = vmatprep.subr.mxu0 0.0
    %970 = vmatpush1.xpose.msra.mxu0 0.0
    %971 = vmatprep.subr.mxu0 0.0
    %972 = vmatpush1.xpose.msra.mxu0 0.0
    %973 = vmatprep.subr.mxu0 0.0
    %974 = vmatpush1.xpose.msra.mxu0 0.0
    %975 = vmatprep.subr.mxu0 0.0
    %976 = vmatpush1.xpose.msra.mxu0 0.0
    %977 = vmatprep.subr.mxu0 0.0
    %978 = vmatpush1.xpose.msra.mxu0 0.0
    %979 = vmatprep.mubr.f32.mxu0 0.0
    %980 = vmatmul.mubr.f32.gmra.mrb[0].mxu0 %v911
    %v981 = vpop.f32.mrb[0].mxu0
    %v982 = vadd.f32 %v242, %v981
    %v983 = vpop.f32.mrb[0].mxu0
    %984 = vdwg.mxu0
    %985 = vrot.lane.b32.xlu0 %v236, 96
    %v986 = vpop.permute.xlu0 %985
    %987 = vrot.lane.b32.xlu0 %v231, 32
    %v988 = vpop.permute.xlu0 %987
    %v989 = vsel %vm252, %v986, 0
    %v991 = vsel %vm252, %v988, 0
    %993 = vmatprep.subr.mxu0 0.0
    %994 = vmatpush1.xpose.msra.mxu0 %v991
    %995 = vmatprep.subr.mxu0 0.0
    %996 = vmatpush1.xpose.msra.mxu0 0.0
    %997 = vmatprep.subr.mxu0 0.0
    %998 = vmatpush1.xpose.msra.mxu0 0.0
    %999 = vmatprep.subr.mxu0 0.0
    %1000 = vmatpush1.xpose.msra.mxu0 0.0
    %1001 = vmatprep.subr.mxu0 0.0
    %1002 = vmatpush1.xpose.msra.mxu0 0.0
    %1003 = vmatprep.subr.mxu0 0.0
    %1004 = vmatpush1.xpose.msra.mxu0 0.0
    %1005 = vmatprep.subr.mxu0 0.0
    %1006 = vmatpush1.xpose.msra.mxu0 0.0
    %1007 = vmatprep.subr.mxu0 0.0
    %1008 = vmatpush1.xpose.msra.mxu0 0.0
    %1009 = vmatprep.subr.mxu0 0.0
    %1010 = vmatpush1.xpose.msra.mxu0 0.0
    %1011 = vmatprep.subr.mxu0 0.0
    %1012 = vmatpush1.xpose.msra.mxu0 0.0
    %1013 = vmatprep.subr.mxu0 0.0
    %1014 = vmatpush1.xpose.msra.mxu0 0.0
    %1015 = vmatprep.subr.mxu0 0.0
    %1016 = vmatpush1.xpose.msra.mxu0 0.0
    %1017 = vmatprep.subr.mxu0 0.0
    %1018 = vmatpush1.xpose.msra.mxu0 0.0
    %1019 = vmatprep.subr.mxu0 0.0
    %1020 = vmatpush1.xpose.msra.mxu0 0.0
    %1021 = vmatprep.subr.mxu0 0.0
    %1022 = vmatpush1.xpose.msra.mxu0 0.0
    %1023 = vmatprep.subr.mxu0 0.0
    %1024 = vmatpush1.xpose.msra.mxu0 0.0
    %1025 = vmatprep.subr.mxu0 0.0
    %1026 = vmatpush1.xpose.msra.mxu0 0.0
    %1027 = vmatprep.subr.mxu0 0.0
    %1028 = vmatpush1.xpose.msra.mxu0 0.0
    %1029 = vmatprep.subr.mxu0 0.0
    %1030 = vmatpush1.xpose.msra.mxu0 0.0
    %1031 = vmatprep.subr.mxu0 0.0
    %1032 = vmatpush1.xpose.msra.mxu0 0.0
    %1033 = vmatprep.subr.mxu0 0.0
    %1034 = vmatpush1.xpose.msra.mxu0 0.0
    %1035 = vmatprep.subr.mxu0 0.0
    %1036 = vmatpush1.xpose.msra.mxu0 0.0
    %1037 = vmatprep.subr.mxu0 0.0
    %1038 = vmatpush1.xpose.msra.mxu0 0.0
    %1039 = vmatprep.subr.mxu0 0.0
    %1040 = vmatpush1.xpose.msra.mxu0 0.0
    %1041 = vmatprep.subr.mxu0 0.0
    %1042 = vmatpush1.xpose.msra.mxu0 0.0
    %1043 = vmatprep.subr.mxu0 0.0
    %1044 = vmatpush1.xpose.msra.mxu0 0.0
    %1045 = vmatprep.subr.mxu0 0.0
    %1046 = vmatpush1.xpose.msra.mxu0 0.0
    %1047 = vmatprep.subr.mxu0 0.0
    %1048 = vmatpush1.xpose.msra.mxu0 0.0
    %1049 = vmatprep.subr.mxu0 0.0
    %1050 = vmatpush1.xpose.msra.mxu0 0.0
    %1051 = vmatprep.subr.mxu0 0.0
    %1052 = vmatpush1.xpose.msra.mxu0 0.0
    %1053 = vmatprep.subr.mxu0 0.0
    %1054 = vmatpush1.xpose.msra.mxu0 0.0
    %1055 = vmatprep.subr.mxu0 0.0
    %1056 = vmatpush1.xpose.msra.mxu0 0.0
    %1057 = vmatprep.mubr.f32.mxu0 0.0
    %1058 = vmatmul.mubr.f32.gmra.mrb[0].mxu0 %v989
    %v1059 = vpop.f32.mrb[0].mxu0
    %v1060 = vadd.f32 %v246, %v1059
    %v1061 = vpop.f32.mrb[0].mxu0
    %1062 = vdwg.mxu0
    %v1063 = vsel %vm406, %v982, -inf
    %1064 = vmax.xlane.f32.xlu0 %v1063
    %v1065 = vpop.xlane.xlu0 %1064
    %v1066 = vsel %vm406, %v1060, -inf
    %1067 = vmax.xlane.f32.xlu0 %v1066
    %v1068 = vpop.xlane.xlu0 %1067
    %v1069 = vsub.f32 %v982, %v1065
    %v1070 = vsub.f32 %v1060, %v1068
    %v1071 = vmul.f32 %v1069, 1.442695
    %v1072 = vpow.pop %v1071
    %v1073 = vmul.f32 %v1070, 1.442695
    %v1074 = vpow.pop %v1073
    %v1075 = vsel %vm406, %v1072, 0.0
    %1076 = vadd.xlane.f32.xlu0 %v1075
    %v1077 = vpop.xlane.xlu0 %1076
    %v1078 = vsel %vm406, %v1074, 0.0
    %1079 = vadd.xlane.f32.xlu0 %v1078
    %v1080 = vpop.xlane.xlu0 %1079
    %v1081 = vrcp.pop %v1077
    %v1082 = vrcp.pop %v1080
    %v1083 = vmul.f32 %v1072, %v1081
    %v1084 = vmul.f32 %v1074, %v1082
    %1085 = vrot.lane.b32.xlu0 %v227, 96
    %v1086 = vpop.permute.xlu0 %1085
    %v1089 = vsel %vm406, %v1083, 0
    %1091 = vmatprep.subr.mxu0 0.0
    %1092 = vmatpush1.msra.mxu0 %v1086
    %1093 = vmatprep.subr.mxu0 0.0
    %1094 = vmatpush1.msra.mxu0 0.0
    %1095 = vmatprep.subr.mxu0 0.0
    %1096 = vmatpush1.msra.mxu0 0.0
    %1097 = vmatprep.subr.mxu0 0.0
    %1098 = vmatpush1.msra.mxu0 0.0
    %1099 = vmatprep.subr.mxu0 0.0
    %1100 = vmatpush1.msra.mxu0 0.0
    %1101 = vmatprep.subr.mxu0 0.0
    %1102 = vmatpush1.msra.mxu0 0.0
    %1103 = vmatprep.subr.mxu0 0.0
    %1104 = vmatpush1.msra.mxu0 0.0
    %1105 = vmatprep.subr.mxu0 0.0
    %1106 = vmatpush1.msra.mxu0 0.0
    %1107 = vmatprep.subr.mxu0 0.0
    %1108 = vmatpush1.msra.mxu0 0.0
    %1109 = vmatprep.subr.mxu0 0.0
    %1110 = vmatpush1.msra.mxu0 0.0
    %1111 = vmatprep.subr.mxu0 0.0
    %1112 = vmatpush1.msra.mxu0 0.0
    %1113 = vmatprep.subr.mxu0 0.0
    %1114 = vmatpush1.msra.mxu0 0.0
    %1115 = vmatprep.subr.mxu0 0.0
    %1116 = vmatpush1.msra.mxu0 0.0
    %1117 = vmatprep.subr.mxu0 0.0
    %1118 = vmatpush1.msra.mxu0 0.0
    %1119 = vmatprep.subr.mxu0 0.0
    %1120 = vmatpush1.msra.mxu0 0.0
    %1121 = vmatprep.subr.mxu0 0.0
    %1122 = vmatpush1.msra.mxu0 0.0
    %1123 = vmatprep.subr.mxu0 0.0
    %1124 = vmatpush1.msra.mxu0 0.0
    %1125 = vmatprep.subr.mxu0 0.0
    %1126 = vmatpush1.msra.mxu0 0.0
    %1127 = vmatprep.subr.mxu0 0.0
    %1128 = vmatpush1.msra.mxu0 0.0
    %1129 = vmatprep.subr.mxu0 0.0
    %1130 = vmatpush1.msra.mxu0 0.0
    %1131 = vmatprep.subr.mxu0 0.0
    %1132 = vmatpush1.msra.mxu0 0.0
    %1133 = vmatprep.subr.mxu0 0.0
    %1134 = vmatpush1.msra.mxu0 0.0
    %1135 = vmatprep.subr.mxu0 0.0
    %1136 = vmatpush1.msra.mxu0 0.0
    %1137 = vmatprep.subr.mxu0 0.0
    %1138 = vmatpush1.msra.mxu0 0.0
    %1139 = vmatprep.subr.mxu0 0.0
    %1140 = vmatpush1.msra.mxu0 0.0
    %1141 = vmatprep.subr.mxu0 0.0
    %1142 = vmatpush1.msra.mxu0 0.0
    %1143 = vmatprep.subr.mxu0 0.0
    %1144 = vmatpush1.msra.mxu0 0.0
    %1145 = vmatprep.subr.mxu0 0.0
    %1146 = vmatpush1.msra.mxu0 0.0
    %1147 = vmatprep.subr.mxu0 0.0
    %1148 = vmatpush1.msra.mxu0 0.0
    %1149 = vmatprep.subr.mxu0 0.0
    %1150 = vmatpush1.msra.mxu0 0.0
    %1151 = vmatprep.subr.mxu0 0.0
    %1152 = vmatpush1.msra.mxu0 0.0
    %1153 = vmatprep.subr.mxu0 0.0
    %1154 = vmatpush1.msra.mxu0 0.0
    %1155 = vmatprep.mubr.f32.mxu0 0.0
    %1156 = vmatmul.mubr.f32.gmra.mrb[0].mxu0 %v1089
    %v1157 = vpop.f32.mrb[0].mxu0
    %v1158 = vadd.f32 0.0, %v1157
    %v1159 = vpop.f32.mrb[0].mxu0
    %1160 = vdwg.mxu0
    %1161 = vrot.lane.b32.xlu0 %v233, 96
    %v1162 = vpop.permute.xlu0 %1161
    %v1165 = vsel %vm406, %v1084, 0
    %1167 = vmatprep.subr.mxu0 0.0
    %1168 = vmatpush1.msra.mxu0 %v1162
    %1169 = vmatprep.subr.mxu0 0.0
    %1170 = vmatpush1.msra.mxu0 0.0
    %1171 = vmatprep.subr.mxu0 0.0
    %1172 = vmatpush1.msra.mxu0 0.0
    %1173 = vmatprep.subr.mxu0 0.0
    %1174 = vmatpush1.msra.mxu0 0.0
    %1175 = vmatprep.subr.mxu0 0.0
    %1176 = vmatpush1.msra.mxu0 0.0
    %1177 = vmatprep.subr.mxu0 0.0
    %1178 = vmatpush1.msra.mxu0 0.0
    %1179 = vmatprep.subr.mxu0 0.0
    %1180 = vmatpush1.msra.mxu0 0.0
    %1181 = vmatprep.subr.mxu0 0.0
    %1182 = vmatpush1.msra.mxu0 0.0
    %1183 = vmatprep.subr.mxu0 0.0
    %1184 = vmatpush1.msra.mxu0 0.0
    %1185 = vmatprep.subr.mxu0 0.0
    %1186 = vmatpush1.msra.mxu0 0.0
    %1187 = vmatprep.subr.mxu0 0.0
    %1188 = vmatpush1.msra.mxu0 0.0
    %1189 = vmatprep.subr.mxu0 0.0
    %1190 = vmatpush1.msra.mxu0 0.0
    %1191 = vmatprep.subr.mxu0 0.0
    %1192 = vmatpush1.msra.mxu0 0.0
    %1193 = vmatprep.subr.mxu0 0.0
    %1194 = vmatpush1.msra.mxu0 0.0
    %1195 = vmatprep.subr.mxu0 0.0
    %1196 = vmatpush1.msra.mxu0 0.0
    %1197 = vmatprep.subr.mxu0 0.0
    %1198 = vmatpush1.msra.mxu0 0.0
    %1199 = vmatprep.subr.mxu0 0.0
    %1200 = vmatpush1.msra.mxu0 0.0
    %1201 = vmatprep.subr.mxu0 0.0
    %1202 = vmatpush1.msra.mxu0 0.0
    %1203 = vmatprep.subr.mxu0 0.0
    %1204 = vmatpush1.msra.mxu0 0.0
    %1205 = vmatprep.subr.mxu0 0.0
    %1206 = vmatpush1.msra.mxu0 0.0
    %1207 = vmatprep.subr.mxu0 0.0
    %1208 = vmatpush1.msra.mxu0 0.0
    %1209 = vmatprep.subr.mxu0 0.0
    %1210 = vmatpush1.msra.mxu0 0.0
    %1211 = vmatprep.subr.mxu0 0.0
    %1212 = vmatpush1.msra.mxu0 0.0
    %1213 = vmatprep.subr.mxu0 0.0
    %1214 = vmatpush1.msra.mxu0 0.0
    %1215 = vmatprep.subr.mxu0 0.0
    %1216 = vmatpush1.msra.mxu0 0.0
    %1217 = vmatprep.subr.mxu0 0.0
    %1218 = vmatpush1.msra.mxu0 0.0
    %1219 = vmatprep.subr.mxu0 0.0
    %1220 = vmatpush1.msra.mxu0 0.0
    %1221 = vmatprep.subr.mxu0 0.0
    %1222 = vmatpush1.msra.mxu0 0.0
    %1223 = vmatprep.subr.mxu0 0.0
    %1224 = vmatpush1.msra.mxu0 0.0
    %1225 = vmatprep.subr.mxu0 0.0
    %1226 = vmatpush1.msra.mxu0 0.0
    %1227 = vmatprep.subr.mxu0 0.0
    %1228 = vmatpush1.msra.mxu0 0.0
    %1229 = vmatprep.subr.mxu0 0.0
    %1230 = vmatpush1.msra.mxu0 0.0
    %1231 = vmatprep.mubr.f32.mxu0 0.0
    %1232 = vmatmul.mubr.f32.gmra.mrb[0].mxu0 %v1165
    %v1233 = vpop.f32.mrb[0].mxu0
    %v1234 = vadd.f32 0.0, %v1233
    %v1235 = vpop.f32.mrb[0].mxu0
    %1236 = vdwg.mxu0
    %1237 = vrot.lane.b32.xlu0 %v235, 80
    %v1238 = vpop.permute.xlu0 %1237
    %1239 = vrot.lane.b32.xlu0 %v225, 16
    %v1240 = vpop.permute.xlu0 %1239
    %v1241 = vsel %vm252, %v1238, 0
    %v1243 = vsel %vm252, %v1240, 0
    %1245 = vmatprep.subr.mxu0 0.0
    %1246 = vmatpush1.xpose.msra.mxu0 %v1243
    %1247 = vmatprep.subr.mxu0 0.0
    %1248 = vmatpush1.xpose.msra.mxu0 0.0
    %1249 = vmatprep.subr.mxu0 0.0
    %1250 = vmatpush1.xpose.msra.mxu0 0.0
    %1251 = vmatprep.subr.mxu0 0.0
    %1252 = vmatpush1.xpose.msra.mxu0 0.0
    %1253 = vmatprep.subr.mxu0 0.0
    %1254 = vmatpush1.xpose.msra.mxu0 0.0
    %1255 = vmatprep.subr.mxu0 0.0
    %1256 = vmatpush1.xpose.msra.mxu0 0.0
    %1257 = vmatprep.subr.mxu0 0.0
    %1258 = vmatpush1.xpose.msra.mxu0 0.0
    %1259 = vmatprep.subr.mxu0 0.0
    %1260 = vmatpush1.xpose.msra.mxu0 0.0
    %1261 = vmatprep.subr.mxu0 0.0
    %1262 = vmatpush1.xpose.msra.mxu0 0.0
    %1263 = vmatprep.subr.mxu0 0.0
    %1264 = vmatpush1.xpose.msra.mxu0 0.0
    %1265 = vmatprep.subr.mxu0 0.0
    %1266 = vmatpush1.xpose.msra.mxu0 0.0
    %1267 = vmatprep.subr.mxu0 0.0
    %1268 = vmatpush1.xpose.msra.mxu0 0.0
    %1269 = vmatprep.subr.mxu0 0.0
    %1270 = vmatpush1.xpose.msra.mxu0 0.0
    %1271 = vmatprep.subr.mxu0 0.0
    %1272 = vmatpush1.xpose.msra.mxu0 0.0
    %1273 = vmatprep.subr.mxu0 0.0
    %1274 = vmatpush1.xpose.msra.mxu0 0.0
    %1275 = vmatprep.subr.mxu0 0.0
    %1276 = vmatpush1.xpose.msra.mxu0 0.0
    %1277 = vmatprep.subr.mxu0 0.0
    %1278 = vmatpush1.xpose.msra.mxu0 0.0
    %1279 = vmatprep.subr.mxu0 0.0
    %1280 = vmatpush1.xpose.msra.mxu0 0.0
    %1281 = vmatprep.subr.mxu0 0.0
    %1282 = vmatpush1.xpose.msra.mxu0 0.0
    %1283 = vmatprep.subr.mxu0 0.0
    %1284 = vmatpush1.xpose.msra.mxu0 0.0
    %1285 = vmatprep.subr.mxu0 0.0
    %1286 = vmatpush1.xpose.msra.mxu0 0.0
    %1287 = vmatprep.subr.mxu0 0.0
    %1288 = vmatpush1.xpose.msra.mxu0 0.0
    %1289 = vmatprep.subr.mxu0 0.0
    %1290 = vmatpush1.xpose.msra.mxu0 0.0
    %1291 = vmatprep.subr.mxu0 0.0
    %1292 = vmatpush1.xpose.msra.mxu0 0.0
    %1293 = vmatprep.subr.mxu0 0.0
    %1294 = vmatpush1.xpose.msra.mxu0 0.0
    %1295 = vmatprep.subr.mxu0 0.0
    %1296 = vmatpush1.xpose.msra.mxu0 0.0
    %1297 = vmatprep.subr.mxu0 0.0
    %1298 = vmatpush1.xpose.msra.mxu0 0.0
    %1299 = vmatprep.subr.mxu0 0.0
    %1300 = vmatpush1.xpose.msra.mxu0 0.0
    %1301 = vmatprep.subr.mxu0 0.0
    %1302 = vmatpush1.xpose.msra.mxu0 0.0
    %1303 = vmatprep.subr.mxu0 0.0
    %1304 = vmatpush1.xpose.msra.mxu0 0.0
    %1305 = vmatprep.subr.mxu0 0.0
    %1306 = vmatpush1.xpose.msra.mxu0 0.0
    %1307 = vmatprep.subr.mxu0 0.0
    %1308 = vmatpush1.xpose.msra.mxu0 0.0
    %1309 = vmatprep.mubr.f32.mxu0 0.0
    %1310 = vmatmul.mubr.f32.gmra.mrb[0].mxu0 %v1241
    %v1311 = vpop.f32.mrb[0].mxu0
    %v1312 = vadd.f32 %v242, %v1311
    %v1313 = vpop.f32.mrb[0].mxu0
    %1314 = vdwg.mxu0
    %1315 = vrot.lane.b32.xlu0 %v236, 80
    %v1316 = vpop.permute.xlu0 %1315
    %1317 = vrot.lane.b32.xlu0 %v231, 16
    %v1318 = vpop.permute.xlu0 %1317
    %v1319 = vsel %vm252, %v1316, 0
    %v1321 = vsel %vm252, %v1318, 0
    %1323 = vmatprep.subr.mxu0 0.0
    %1324 = vmatpush1.xpose.msra.mxu0 %v1321
    %1325 = vmatprep.subr.mxu0 0.0
    %1326 = vmatpush1.xpose.msra.mxu0 0.0
    %1327 = vmatprep.subr.mxu0 0.0
    %1328 = vmatpush1.xpose.msra.mxu0 0.0
    %1329 = vmatprep.subr.mxu0 0.0
    %1330 = vmatpush1.xpose.msra.mxu0 0.0
    %1331 = vmatprep.subr.mxu0 0.0
    %1332 = vmatpush1.xpose.msra.mxu0 0.0
    %1333 = vmatprep.subr.mxu0 0.0
    %1334 = vmatpush1.xpose.msra.mxu0 0.0
    %1335 = vmatprep.subr.mxu0 0.0
    %1336 = vmatpush1.xpose.msra.mxu0 0.0
    %1337 = vmatprep.subr.mxu0 0.0
    %1338 = vmatpush1.xpose.msra.mxu0 0.0
    %1339 = vmatprep.subr.mxu0 0.0
    %1340 = vmatpush1.xpose.msra.mxu0 0.0
    %1341 = vmatprep.subr.mxu0 0.0
    %1342 = vmatpush1.xpose.msra.mxu0 0.0
    %1343 = vmatprep.subr.mxu0 0.0
    %1344 = vmatpush1.xpose.msra.mxu0 0.0
    %1345 = vmatprep.subr.mxu0 0.0
    %1346 = vmatpush1.xpose.msra.mxu0 0.0
    %1347 = vmatprep.subr.mxu0 0.0
    %1348 = vmatpush1.xpose.msra.mxu0 0.0
    %1349 = vmatprep.subr.mxu0 0.0
    %1350 = vmatpush1.xpose.msra.mxu0 0.0
    %1351 = vmatprep.subr.mxu0 0.0
    %1352 = vmatpush1.xpose.msra.mxu0 0.0
    %1353 = vmatprep.subr.mxu0 0.0
    %1354 = vmatpush1.xpose.msra.mxu0 0.0
    %1355 = vmatprep.subr.mxu0 0.0
    %1356 = vmatpush1.xpose.msra.mxu0 0.0
    %1357 = vmatprep.subr.mxu0 0.0
    %1358 = vmatpush1.xpose.msra.mxu0 0.0
    %1359 = vmatprep.subr.mxu0 0.0
    %1360 = vmatpush1.xpose.msra.mxu0 0.0
    %1361 = vmatprep.subr.mxu0 0.0
    %1362 = vmatpush1.xpose.msra.mxu0 0.0
    %1363 = vmatprep.subr.mxu0 0.0
    %1364 = vmatpush1.xpose.msra.mxu0 0.0
    %1365 = vmatprep.subr.mxu0 0.0
    %1366 = vmatpush1.xpose.msra.mxu0 0.0
    %1367 = vmatprep.subr.mxu0 0.0
    %1368 = vmatpush1.xpose.msra.mxu0 0.0
    %1369 = vmatprep.subr.mxu0 0.0
    %1370 = vmatpush1.xpose.msra.mxu0 0.0
    %1371 = vmatprep.subr.mxu0 0.0
    %1372 = vmatpush1.xpose.msra.mxu0 0.0
    %1373 = vmatprep.subr.mxu0 0.0
    %1374 = vmatpush1.xpose.msra.mxu0 0.0
    %1375 = vmatprep.subr.mxu0 0.0
    %1376 = vmatpush1.xpose.msra.mxu0 0.0
    %1377 = vmatprep.subr.mxu0 0.0
    %1378 = vmatpush1.xpose.msra.mxu0 0.0
    %1379 = vmatprep.subr.mxu0 0.0
    %1380 = vmatpush1.xpose.msra.mxu0 0.0
    %1381 = vmatprep.subr.mxu0 0.0
    %1382 = vmatpush1.xpose.msra.mxu0 0.0
    %1383 = vmatprep.subr.mxu0 0.0
    %1384 = vmatpush1.xpose.msra.mxu0 0.0
    %1385 = vmatprep.subr.mxu0 0.0
    %1386 = vmatpush1.xpose.msra.mxu0 0.0
    %1387 = vmatprep.mubr.f32.mxu0 0.0
    %1388 = vmatmul.mubr.f32.gmra.mrb[0].mxu0 %v1319
    %v1389 = vpop.f32.mrb[0].mxu0
    %v1390 = vadd.f32 %v246, %v1389
    %v1391 = vpop.f32.mrb[0].mxu0
    %1392 = vdwg.mxu0
    %v1393 = vsel %vm406, %v1312, -inf
    %1394 = vmax.xlane.f32.xlu0 %v1393
    %v1395 = vpop.xlane.xlu0 %1394
    %v1396 = vsel %vm406, %v1390, -inf
    %1397 = vmax.xlane.f32.xlu0 %v1396
    %v1398 = vpop.xlane.xlu0 %1397
    %v1399 = vsub.f32 %v1312, %v1395
    %v1400 = vsub.f32 %v1390, %v1398
    %v1401 = vmul.f32 %v1399, 1.442695
    %v1402 = vpow.pop %v1401
    %v1403 = vmul.f32 %v1400, 1.442695
    %v1404 = vpow.pop %v1403
    %v1405 = vsel %vm406, %v1402, 0.0
    %1406 = vadd.xlane.f32.xlu0 %v1405
    %v1407 = vpop.xlane.xlu0 %1406
    %v1408 = vsel %vm406, %v1404, 0.0
    %1409 = vadd.xlane.f32.xlu0 %v1408
    %v1410 = vpop.xlane.xlu0 %1409
    %v1411 = vrcp.pop %v1407
    %v1412 = vrcp.pop %v1410
    %v1413 = vmul.f32 %v1402, %v1411
    %v1414 = vmul.f32 %v1404, %v1412
    %1415 = vrot.lane.b32.xlu0 %v227, 80
    %v1416 = vpop.permute.xlu0 %1415
    %v1419 = vsel %vm406, %v1413, 0
    %1421 = vmatprep.subr.mxu0 0.0
    %1422 = vmatpush1.msra.mxu0 %v1416
    %1423 = vmatprep.subr.mxu0 0.0
    %1424 = vmatpush1.msra.mxu0 0.0
    %1425 = vmatprep.subr.mxu0 0.0
    %1426 = vmatpush1.msra.mxu0 0.0
    %1427 = vmatprep.subr.mxu0 0.0
    %1428 = vmatpush1.msra.mxu0 0.0
    %1429 = vmatprep.subr.mxu0 0.0
    %1430 = vmatpush1.msra.mxu0 0.0
    %1431 = vmatprep.subr.mxu0 0.0
    %1432 = vmatpush1.msra.mxu0 0.0
    %1433 = vmatprep.subr.mxu0 0.0
    %1434 = vmatpush1.msra.mxu0 0.0
    %1435 = vmatprep.subr.mxu0 0.0
    %1436 = vmatpush1.msra.mxu0 0.0
    %1437 = vmatprep.subr.mxu0 0.0
    %1438 = vmatpush1.msra.mxu0 0.0
    %1439 = vmatprep.subr.mxu0 0.0
    %1440 = vmatpush1.msra.mxu0 0.0
    %1441 = vmatprep.subr.mxu0 0.0
    %1442 = vmatpush1.msra.mxu0 0.0
    %1443 = vmatprep.subr.mxu0 0.0
    %1444 = vmatpush1.msra.mxu0 0.0
    %1445 = vmatprep.subr.mxu0 0.0
    %1446 = vmatpush1.msra.mxu0 0.0
    %1447 = vmatprep.subr.mxu0 0.0
    %1448 = vmatpush1.msra.mxu0 0.0
    %1449 = vmatprep.subr.mxu0 0.0
    %1450 = vmatpush1.msra.mxu0 0.0
    %1451 = vmatprep.subr.mxu0 0.0
    %1452 = vmatpush1.msra.mxu0 0.0
    %1453 = vmatprep.subr.mxu0 0.0
    %1454 = vmatpush1.msra.mxu0 0.0
    %1455 = vmatprep.subr.mxu0 0.0
    %1456 = vmatpush1.msra.mxu0 0.0
    %1457 = vmatprep.subr.mxu0 0.0
    %1458 = vmatpush1.msra.mxu0 0.0
    %1459 = vmatprep.subr.mxu0 0.0
    %1460 = vmatpush1.msra.mxu0 0.0
    %1461 = vmatprep.subr.mxu0 0.0
    %1462 = vmatpush1.msra.mxu0 0.0
    %1463 = vmatprep.subr.mxu0 0.0
    %1464 = vmatpush1.msra.mxu0 0.0
    %1465 = vmatprep.subr.mxu0 0.0
    %1466 = vmatpush1.msra.mxu0 0.0
    %1467 = vmatprep.subr.mxu0 0.0
    %1468 = vmatpush1.msra.mxu0 0.0
    %1469 = vmatprep.subr.mxu0 0.0
    %1470 = vmatpush1.msra.mxu0 0.0
    %1471 = vmatprep.subr.mxu0 0.0
    %1472 = vmatpush1.msra.mxu0 0.0
    %1473 = vmatprep.subr.mxu0 0.0
    %1474 = vmatpush1.msra.mxu0 0.0
    %1475 = vmatprep.subr.mxu0 0.0
    %1476 = vmatpush1.msra.mxu0 0.0
    %1477 = vmatprep.subr.mxu0 0.0
    %1478 = vmatpush1.msra.mxu0 0.0
    %1479 = vmatprep.subr.mxu0 0.0
    %1480 = vmatpush1.msra.mxu0 0.0
    %1481 = vmatprep.subr.mxu0 0.0
    %1482 = vmatpush1.msra.mxu0 0.0
    %1483 = vmatprep.subr.mxu0 0.0
    %1484 = vmatpush1.msra.mxu0 0.0
    %1485 = vmatprep.mubr.f32.mxu0 0.0
    %1486 = vmatmul.mubr.f32.gmra.mrb[0].mxu0 %v1419
    %v1487 = vpop.f32.mrb[0].mxu0
    %v1488 = vadd.f32 0.0, %v1487
    %v1489 = vpop.f32.mrb[0].mxu0
    %1490 = vdwg.mxu0
    %1491 = vrot.lane.b32.xlu0 %v233, 80
    %v1492 = vpop.permute.xlu0 %1491
    %v1495 = vsel %vm406, %v1414, 0
    %1497 = vmatprep.subr.mxu0 0.0
    %1498 = vmatpush1.msra.mxu0 %v1492
    %1499 = vmatprep.subr.mxu0 0.0
    %1500 = vmatpush1.msra.mxu0 0.0
    %1501 = vmatprep.subr.mxu0 0.0
    %1502 = vmatpush1.msra.mxu0 0.0
    %1503 = vmatprep.subr.mxu0 0.0
    %1504 = vmatpush1.msra.mxu0 0.0
    %1505 = vmatprep.subr.mxu0 0.0
    %1506 = vmatpush1.msra.mxu0 0.0
    %1507 = vmatprep.subr.mxu0 0.0
    %1508 = vmatpush1.msra.mxu0 0.0
    %1509 = vmatprep.subr.mxu0 0.0
    %1510 = vmatpush1.msra.mxu0 0.0
    %1511 = vmatprep.subr.mxu0 0.0
    %1512 = vmatpush1.msra.mxu0 0.0
    %1513 = vmatprep.subr.mxu0 0.0
    %1514 = vmatpush1.msra.mxu0 0.0
    %1515 = vmatprep.subr.mxu0 0.0
    %1516 = vmatpush1.msra.mxu0 0.0
    %1517 = vmatprep.subr.mxu0 0.0
    %1518 = vmatpush1.msra.mxu0 0.0
    %1519 = vmatprep.subr.mxu0 0.0
    %1520 = vmatpush1.msra.mxu0 0.0
    %1521 = vmatprep.subr.mxu0 0.0
    %1522 = vmatpush1.msra.mxu0 0.0
    %1523 = vmatprep.subr.mxu0 0.0
    %1524 = vmatpush1.msra.mxu0 0.0
    %1525 = vmatprep.subr.mxu0 0.0
    %1526 = vmatpush1.msra.mxu0 0.0
    %1527 = vmatprep.subr.mxu0 0.0
    %1528 = vmatpush1.msra.mxu0 0.0
    %1529 = vmatprep.subr.mxu0 0.0
    %1530 = vmatpush1.msra.mxu0 0.0
    %1531 = vmatprep.subr.mxu0 0.0
    %1532 = vmatpush1.msra.mxu0 0.0
    %1533 = vmatprep.subr.mxu0 0.0
    %1534 = vmatpush1.msra.mxu0 0.0
    %1535 = vmatprep.subr.mxu0 0.0
    %1536 = vmatpush1.msra.mxu0 0.0
    %1537 = vmatprep.subr.mxu0 0.0
    %1538 = vmatpush1.msra.mxu0 0.0
    %1539 = vmatprep.subr.mxu0 0.0
    %1540 = vmatpush1.msra.mxu0 0.0
    %1541 = vmatprep.subr.mxu0 0.0
    %1542 = vmatpush1.msra.mxu0 0.0
    %1543 = vmatprep.subr.mxu0 0.0
    %1544 = vmatpush1.msra.mxu0 0.0
    %1545 = vmatprep.subr.mxu0 0.0
    %1546 = vmatpush1.msra.mxu0 0.0
    %1547 = vmatprep.subr.mxu0 0.0
    %1548 = vmatpush1.msra.mxu0 0.0
    %1549 = vmatprep.subr.mxu0 0.0
    %1550 = vmatpush1.msra.mxu0 0.0
    %1551 = vmatprep.subr.mxu0 0.0
    %1552 = vmatpush1.msra.mxu0 0.0
    %1553 = vmatprep.subr.mxu0 0.0
    %1554 = vmatpush1.msra.mxu0 0.0
    %1555 = vmatprep.subr.mxu0 0.0
    %1556 = vmatpush1.msra.mxu0 0.0
    %1557 = vmatprep.subr.mxu0 0.0
    %1558 = vmatpush1.msra.mxu0 0.0
    %1559 = vmatprep.subr.mxu0 0.0
    %1560 = vmatpush1.msra.mxu0 0.0
    %1561 = vmatprep.mubr.f32.mxu0 0.0
    %1562 = vmatmul.mubr.f32.gmra.mrb[0].mxu0 %v1495
    %v1563 = vpop.f32.mrb[0].mxu0
    %v1564 = vadd.f32 0.0, %v1563
    %v1565 = vpop.f32.mrb[0].mxu0
    %1566 = vdwg.mxu0
    %1569 = vrot.lane.b32.xlu0 %v827, 16
    %v1570 = vpop.permute.xlu0 %1569
    %1571 = vrot.lane.b32.xlu0 %v904, 16
    %v1572 = vpop.permute.xlu0 %1571
    %1577 = vrot.lane.b32.xlu0 %v1158, 32
    %v1578 = vpop.permute.xlu0 %1577
    %1579 = vrot.lane.b32.xlu0 %v1234, 32
    %v1580 = vpop.permute.xlu0 %1579
    %1585 = vrot.lane.b32.xlu0 %v1488, 48
    %v1586 = vpop.permute.xlu0 %1585
    %1587 = vrot.lane.b32.xlu0 %v1564, 48
    %v1588 = vpop.permute.xlu0 %1587
    %v1591 = vsel %vm252, %v499, %v1570
    %v1592 = vsel %vm252, %v572, %v1572
    %vm1593 = vcmask 261120
    %v1594 = vsel %vm1593, %v1591, %v1578
    %v1595 = vsel %vm1593, %v1592, %v1580
    %vm1596 = vcmask 392192
    %v1597 = vsel %vm1596, %v1594, %v1586
    %v1598 = vsel %vm1596, %v1595, %v1588
    %v1600 = vsel %vm45, %v1597, 0
    %v1603 = vsel %vm45, %v1598, 0
    %1605 = vmatprep.subr.mxu0 0.0
    %1606 = vmatpush1.msra.mxu0 %v101
    %1607 = vmatprep.subr.mxu0 0.0
    %1608 = vmatpush1.msra.mxu0 %v102
    %1609 = vmatprep.subr.mxu0 0.0
    %1610 = vmatpush1.msra.mxu0 %v103
    %1611 = vmatprep.subr.mxu0 0.0
    %1612 = vmatpush1.msra.mxu0 %v104
    %1613 = vmatprep.subr.mxu0 0.0
    %1614 = vmatpush1.msra.mxu0 %v105
    %1615 = vmatprep.subr.mxu0 0.0
    %1616 = vmatpush1.msra.mxu0 %v106
    %1617 = vmatprep.subr.mxu0 0.0
    %1618 = vmatpush1.msra.mxu0 %v107
    %1619 = vmatprep.subr.mxu0 0.0
    %1620 = vmatpush1.msra.mxu0 %v108
    %1621 = vmatprep.subr.mxu0 0.0
    %1622 = vmatpush1.msra.mxu0 0.0
    %1623 = vmatprep.subr.mxu0 0.0
    %1624 = vmatpush1.msra.mxu0 0.0
    %1625 = vmatprep.subr.mxu0 0.0
    %1626 = vmatpush1.msra.mxu0 0.0
    %1627 = vmatprep.subr.mxu0 0.0
    %1628 = vmatpush1.msra.mxu0 0.0
    %1629 = vmatprep.subr.mxu0 0.0
    %1630 = vmatpush1.msra.mxu0 0.0
    %1631 = vmatprep.subr.mxu0 0.0
    %1632 = vmatpush1.msra.mxu0 0.0
    %1633 = vmatprep.subr.mxu0 0.0
    %1634 = vmatpush1.msra.mxu0 0.0
    %1635 = vmatprep.subr.mxu0 0.0
    %1636 = vmatpush1.msra.mxu0 0.0
    %1637 = vmatprep.subr.mxu0 0.0
    %1638 = vmatpush1.msra.mxu0 0.0
    %1639 = vmatprep.subr.mxu0 0.0
    %1640 = vmatpush1.msra.mxu0 0.0
    %1641 = vmatprep.subr.mxu0 0.0
    %1642 = vmatpush1.msra.mxu0 0.0
    %1643 = vmatprep.subr.mxu0 0.0
    %1644 = vmatpush1.msra.mxu0 0.0
    %1645 = vmatprep.subr.mxu0 0.0
    %1646 = vmatpush1.msra.mxu0 0.0
    %1647 = vmatprep.subr.mxu0 0.0
    %1648 = vmatpush1.msra.mxu0 0.0
    %1649 = vmatprep.subr.mxu0 0.0
    %1650 = vmatpush1.msra.mxu0 0.0
    %1651 = vmatprep.subr.mxu0 0.0
    %1652 = vmatpush1.msra.mxu0 0.0
    %1653 = vmatprep.subr.mxu0 0.0
    %1654 = vmatpush1.msra.mxu0 0.0
    %1655 = vmatprep.subr.mxu0 0.0
    %1656 = vmatpush1.msra.mxu0 0.0
    %1657 = vmatprep.subr.mxu0 0.0
    %1658 = vmatpush1.msra.mxu0 0.0
    %1659 = vmatprep.subr.mxu0 0.0
    %1660 = vmatpush1.msra.mxu0 0.0
    %1661 = vmatprep.subr.mxu0 0.0
    %1662 = vmatpush1.msra.mxu0 0.0
    %1663 = vmatprep.subr.mxu0 0.0
    %1664 = vmatpush1.msra.mxu0 0.0
    %1665 = vmatprep.subr.mxu0 0.0
    %1666 = vmatpush1.msra.mxu0 0.0
    %1667 = vmatprep.subr.mxu0 0.0
    %1668 = vmatpush1.msra.mxu0 0.0
    %1669 = vmatprep.mubr.f32.mxu0 0.0
    %1670 = vmatmul.mubr.f32.gmra.mrb[0].mxu0 %v1600
    %v1671 = vpop.f32.mrb[0].mxu0
    %v1672 = vadd.f32 %v134, %v1671
    %v1673 = vpop.f32.mrb[0].mxu0
    %1674 = vmatprep.mubr.f32.mxu0 0.0
    %1675 = vmatmul.mubr.f32.gmra.mrb[0].mxu0 %v1603
    %v1676 = vpop.f32.mrb[0].mxu0
    %v1677 = vadd.f32 %v134, %v1676
    %v1678 = vpop.f32.mrb[0].mxu0
    %1679 = vdwg.mxu0
    %v1680 = vadd.f32 %v1672, %v83
    %v1681 = vadd.f32 %v1677, %v84
    %v1682 = vsel %vm45, %v1680, 0.0
    %1683 = vadd.xlane.f32.xlu0 %v1682
    %v1684 = vpop.xlane.xlu0 %1683
    %v1685 = vsel %vm45, %v1681, 0.0
    %1686 = vadd.xlane.f32.xlu0 %v1685
    %v1687 = vpop.xlane.xlu0 %1686
    %v1688 = vmul.f32 %v1684, %v52
    %v1689 = vmul.f32 %v1687, %v52
    %v1690 = vsub.f32 %v1680, %v1688
    %v1691 = vsub.f32 %v1681, %v1689
    %v1692 = vmul.f32 %v1690, %v1690
    %v1693 = vmul.f32 %v1691, %v1691
    %v1694 = vsel %vm45, %v1692, 0.0
    %1695 = vadd.xlane.f32.xlu0 %v1694
    %v1696 = vpop.xlane.xlu0 %1695
    %v1697 = vsel %vm45, %v1693, 0.0
    %1698 = vadd.xlane.f32.xlu0 %v1697
    %v1699 = vpop.xlane.xlu0 %1698
    %v1700 = vmul.f32 %v1696, %v52
    %v1701 = vmul.f32 %v1699, %v52
    %v1702 = vadd.f32 %v1700, 1e-12
    %v1703 = vadd.f32 %v1701, 1e-12
    %v1704 = vrsqrt.pop %v1702
    %v1705 = vrsqrt.pop %v1703
    %v1706 = vmul.f32 %v1690, %v1704
    %v1707 = vmul.f32 %v1691, %v1705
    %v1708 = vmul.f32 %v1706, %v137
    %v1709 = vmul.f32 %v1707, %v137
    %v1710 = vadd.f32 %v1708, %v138
    %v1711 = vadd.f32 %v1709, %v138
    %v1713 = vsel %vm45, %v1710, 0
    %v1716 = vsel %vm45, %v1711, 0
    %1718 = vmatprep.subr.mxu0 0.0
    %1719 = vmatpush1.msra.mxu0 %v109
    %1720 = vmatprep.subr.mxu0 0.0
    %1721 = vmatpush1.msra.mxu0 %v110
    %1722 = vmatprep.subr.mxu0 0.0
    %1723 = vmatpush1.msra.mxu0 %v111
    %1724 = vmatprep.subr.mxu0 0.0
    %1725 = vmatpush1.msra.mxu0 %v112
    %1726 = vmatprep.subr.mxu0 0.0
    %1727 = vmatpush1.msra.mxu0 %v113
    %1728 = vmatprep.subr.mxu0 0.0
    %1729 = vmatpush1.msra.mxu0 %v114
    %1730 = vmatprep.subr.mxu0 0.0
    %1731 = vmatpush1.msra.mxu0 %v115
    %1732 = vmatprep.subr.mxu0 0.0
    %1733 = vmatpush1.msra.mxu0 %v116
    %1734 = vmatprep.subr.mxu0 0.0
    %1735 = vmatpush1.msra.mxu0 0.0
    %1736 = vmatprep.subr.mxu0 0.0
    %1737 = vmatpush1.msra.mxu0 0.0
    %1738 = vmatprep.subr.mxu0 0.0
    %1739 = vmatpush1.msra.mxu0 0.0
    %1740 = vmatprep.subr.mxu0 0.0
    %1741 = vmatpush1.msra.mxu0 0.0
    %1742 = vmatprep.subr.mxu0 0.0
    %1743 = vmatpush1.msra.mxu0 0.0
    %1744 = vmatprep.subr.mxu0 0.0
    %1745 = vmatpush1.msra.mxu0 0.0
    %1746 = vmatprep.subr.mxu0 0.0
    %1747 = vmatpush1.msra.mxu0 0.0
    %1748 = vmatprep.subr.mxu0 0.0
    %1749 = vmatpush1.msra.mxu0 0.0
    %1750 = vmatprep.subr.mxu0 0.0
    %1751 = vmatpush1.msra.mxu0 0.0
    %1752 = vmatprep.subr.mxu0 0.0
    %1753 = vmatpush1.msra.mxu0 0.0
    %1754 = vmatprep.subr.mxu0 0.0
    %1755 = vmatpush1.msra.mxu0 0.0
    %1756 = vmatprep.subr.mxu0 0.0
    %1757 = vmatpush1.msra.mxu0 0.0
    %1758 = vmatprep.subr.mxu0 0.0
    %1759 = vmatpush1.msra.mxu0 0.0
    %1760 = vmatprep.subr.mxu0 0.0
    %1761 = vmatpush1.msra.mxu0 0.0
    %1762 = vmatprep.subr.mxu0 0.0
    %1763 = vmatpush1.msra.mxu0 0.0
    %1764 = vmatprep.subr.mxu0 0.0
    %1765 = vmatpush1.msra.mxu0 0.0
    %1766 = vmatprep.subr.mxu0 0.0
    %1767 = vmatpush1.msra.mxu0 0.0
    %1768 = vmatprep.subr.mxu0 0.0
    %1769 = vmatpush1.msra.mxu0 0.0
    %1770 = vmatprep.subr.mxu0 0.0
    %1771 = vmatpush1.msra.mxu0 0.0
    %1772 = vmatprep.subr.mxu0 0.0
    %1773 = vmatpush1.msra.mxu0 0.0
    %1774 = vmatprep.subr.mxu0 0.0
    %1775 = vmatpush1.msra.mxu0 0.0
    %1776 = vmatprep.subr.mxu0 0.0
    %1777 = vmatpush1.msra.mxu0 0.0
    %1778 = vmatprep.subr.mxu0 0.0
    %1779 = vmatpush1.msra.mxu0 0.0
    %1780 = vmatprep.subr.mxu0 0.0
    %1781 = vmatpush1.msra.mxu0 0.0
    %1782 = vmatprep.mubr.f32.mxu0 0.0
    %1783 = vmatmul.mubr.f32.gmra.mrb[0].mxu0 %v1713
    %v1784 = vpop.f32.mrb[0].mxu0
    %v1785 = vadd.f32 %v135, %v1784
    %v1786 = vpop.f32.mrb[0].mxu0
    %1787 = vmatprep.mubr.f32.mxu0 0.0
    %1788 = vmatmul.mubr.f32.gmra.mrb[0].mxu0 %v1716
    %v1789 = vpop.f32.mrb[0].mxu0
    %v1790 = vadd.f32 %v135, %v1789
    %v1791 = vpop.f32.mrb[0].mxu0
    %1792 = vdwg.mxu0
    %v1793 = vmul.f32 %v1785, 0.5
    %v1794 = vmul.f32 %v1790, 0.5
    %v1795 = vmul.f32 %v1785, 0.70710677
    %v1796 = vmul.f32 %v1790, 0.70710677
    %v1797 = verf.f32.pop %v1795
    %v1798 = verf.f32.pop %v1796
    %v1799 = vadd.f32 %v1797, 1.0
    %v1800 = vadd.f32 %v1798, 1.0
    %v1801 = vmul.f32 %v1793, %v1799
    %v1802 = vmul.f32 %v1794, %v1800
    %1803 = vmatprep.subr.mxu0 0.0
    %1804 = vmatpush1.msra.mxu0 %v117
    %1805 = vmatprep.subr.mxu0 0.0
    %1806 = vmatpush1.msra.mxu0 %v118
    %1807 = vmatprep.subr.mxu0 0.0
    %1808 = vmatpush1.msra.mxu0 %v119
    %1809 = vmatprep.subr.mxu0 0.0
    %1810 = vmatpush1.msra.mxu0 %v120
    %1811 = vmatprep.subr.mxu0 0.0
    %1812 = vmatpush1.msra.mxu0 %v121
    %1813 = vmatprep.subr.mxu0 0.0
    %1814 = vmatpush1.msra.mxu0 %v122
    %1815 = vmatprep.subr.mxu0 0.0
    %1816 = vmatpush1.msra.mxu0 %v123
    %1817 = vmatprep.subr.mxu0 0.0
    %1818 = vmatpush1.msra.mxu0 %v124
    %1819 = vmatprep.subr.mxu0 0.0
    %1820 = vmatpush1.msra.mxu0 %v125
    %1821 = vmatprep.subr.mxu0 0.0
    %1822 = vmatpush1.msra.mxu0 %v126
    %1823 = vmatprep.subr.mxu0 0.0
    %1824 = vmatpush1.msra.mxu0 %v127
    %1825 = vmatprep.subr.mxu0 0.0
    %1826 = vmatpush1.msra.mxu0 %v128
    %1827 = vmatprep.subr.mxu0 0.0
    %1828 = vmatpush1.msra.mxu0 %v129
    %1829 = vmatprep.subr.mxu0 0.0
    %1830 = vmatpush1.msra.mxu0 %v130
    %1831 = vmatprep.subr.mxu0 0.0
    %1832 = vmatpush1.msra.mxu0 %v131
    %1833 = vmatprep.subr.mxu0 0.0
    %1834 = vmatpush1.msra.mxu0 %v132
    %1835 = vmatprep.subr.mxu0 0.0
    %1836 = vmatpush1.msra.mxu0 0.0
    %1837 = vmatprep.subr.mxu0 0.0
    %1838 = vmatpush1.msra.mxu0 0.0
    %1839 = vmatprep.subr.mxu0 0.0
    %1840 = vmatpush1.msra.mxu0 0.0
    %1841 = vmatprep.subr.mxu0 0.0
    %1842 = vmatpush1.msra.mxu0 0.0
    %1843 = vmatprep.subr.mxu0 0.0
    %1844 = vmatpush1.msra.mxu0 0.0
    %1845 = vmatprep.subr.mxu0 0.0
    %1846 = vmatpush1.msra.mxu0 0.0
    %1847 = vmatprep.subr.mxu0 0.0
    %1848 = vmatpush1.msra.mxu0 0.0
    %1849 = vmatprep.subr.mxu0 0.0
    %1850 = vmatpush1.msra.mxu0 0.0
    %1851 = vmatprep.subr.mxu0 0.0
    %1852 = vmatpush1.msra.mxu0 0.0
    %1853 = vmatprep.subr.mxu0 0.0
    %1854 = vmatpush1.msra.mxu0 0.0
    %1855 = vmatprep.subr.mxu0 0.0
    %1856 = vmatpush1.msra.mxu0 0.0
    %1857 = vmatprep.subr.mxu0 0.0
    %1858 = vmatpush1.msra.mxu0 0.0
    %1859 = vmatprep.subr.mxu0 0.0
    %1860 = vmatpush1.msra.mxu0 0.0
    %1861 = vmatprep.subr.mxu0 0.0
    %1862 = vmatpush1.msra.mxu0 0.0
    %1863 = vmatprep.subr.mxu0 0.0
    %1864 = vmatpush1.msra.mxu0 0.0
    %1865 = vmatprep.subr.mxu0 0.0
    %1866 = vmatpush1.msra.mxu0 0.0
    %1867 = vmatprep.mubr.f32.mxu0 0.0
    %1868 = vmatmul.mubr.f32.gmra.mrb[0].mxu0 %v1801
    %v1869 = vpop.f32.mrb[0].mxu0
    %v1870 = vadd.f32 %v136, %v1869
    %v1871 = vpop.f32.mrb[0].mxu0
    %1872 = vmatprep.mubr.f32.mxu0 0.0
    %1873 = vmatmul.mubr.f32.gmra.mrb[0].mxu0 %v1802
    %v1874 = vpop.f32.mrb[0].mxu0
    %v1875 = vadd.f32 %v136, %v1874
    %v1876 = vpop.f32.mrb[0].mxu0
    %1877 = vdwg.mxu0
    %v1878 = vadd.f32 %v1870, %v1710
    %v1879 = vadd.f32 %v1875, %v1711
    %v1880 = vsel %vm45, %v1878, 0.0
    %1881 = vadd.xlane.f32.xlu0 %v1880
    %v1882 = vpop.xlane.xlu0 %1881
    %v1883 = vsel %vm45, %v1879, 0.0
    %1884 = vadd.xlane.f32.xlu0 %v1883
    %v1885 = vpop.xlane.xlu0 %1884
    %v1886 = vmul.f32 %v1882, %v52
    %v1887 = vmul.f32 %v1885, %v52
    %v1888 = vsub.f32 %v1878, %v1886
    %v1889 = vsub.f32 %v1879, %v1887
    %v1890 = vmul.f32 %v1888, %v1888
    %v1891 = vmul.f32 %v1889, %v1889
    %v1892 = vsel %vm45, %v1890, 0.0
    %1893 = vadd.xlane.f32.xlu0 %v1892
    %v1894 = vpop.xlane.xlu0 %1893
    %v1895 = vsel %vm45, %v1891, 0.0
    %1896 = vadd.xlane.f32.xlu0 %v1895
    %v1897 = vpop.xlane.xlu0 %1896
    %v1898 = vmul.f32 %v1894, %v52
    %v1899 = vmul.f32 %v1897, %v52
    %v1900 = vadd.f32 %v1898, 1e-12
    %v1901 = vadd.f32 %v1899, 1e-12
    %v1902 = vrsqrt.pop %v1900
    %v1903 = vrsqrt.pop %v1901
    %v1904 = vmul.f32 %v1888, %v1902
    %v1905 = vmul.f32 %v1889, %v1903
    %v1906 = vmul.f32 %v1904, %v139
    %v1907 = vmul.f32 %v1905, %v139
    %v1908 = vadd.f32 %v1906, %v140
    %v1909 = vadd.f32 %v1907, %v140
    %s1910 = scalar_lea.vmem [#allocation2], 640
    %v1911 = vld [vmem:[%s1910] sm:$0xff]
    %v1912 = vld [vmem:[%s1910 + $0x8] sm:$0xff]
    %v1913 = vld [vmem:[%s1910 + $0x28] sm:$0xff]
    %v1914 = vld [vmem:[%s1910 + $0x30] sm:$0xff]
    %v1915 = vld [vmem:[%s1910 + $0x50] sm:$0xff]
    %v1916 = vld [vmem:[%s1910 + $0x58] sm:$0xff]
    %v1917 = vld [vmem:[%s1910 + $0x78] sm:$0xff]
    %v1918 = vld [vmem:[%s1910 + $0x80] sm:$0xff]
    %v1919 = vld [vmem:[%s1910 + $0xa0] sm:$0xff]
    %v1920 = vld [vmem:[%s1910 + $0xa8] sm:$0xff]
    %v1921 = vld [vmem:[%s1910 + $0xc8] sm:$0xff]
    %v1922 = vld [vmem:[%s1910 + $0xd0] sm:$0xff]
    %v1923 = vld [vmem:[%s1910 + $0xf0] sm:$0xff]
    %v1924 = vld [vmem:[%s1910 + $0xf8] sm:$0xff]
    %v1925 = vld [vmem:[%s1910 + $0x118] sm:$0xff]
    %v1926 = vld [vmem:[%s1910 + $0x120] sm:$0xff]
    %v1927 = vld [vmem:[%s1910 + $0x10] sm:$0xff]
    %v1928 = vld [vmem:[%s1910 + $0x38] sm:$0xff]
    %v1929 = vld [vmem:[%s1910 + $0x60] sm:$0xff]
    %v1930 = vld [vmem:[%s1910 + $0x88] sm:$0xff]
    %v1931 = vld [vmem:[%s1910 + $0xb0] sm:$0xff]
    %v1932 = vld [vmem:[%s1910 + $0xd8] sm:$0xff]
    %v1933 = vld [vmem:[%s1910 + $0x100] sm:$0xff]
    %v1934 = vld [vmem:[%s1910 + $0x128] sm:$0xff]
    %v1935 = vld [vmem:[%s1910 + $0x18] sm:$0xff]
    %v1936 = vld [vmem:[%s1910 + $0x40] sm:$0xff]
    %v1937 = vld [vmem:[%s1910 + $0x68] sm:$0xff]
    %v1938 = vld [vmem:[%s1910 + $0x90] sm:$0xff]
    %v1939 = vld [vmem:[%s1910 + $0xb8] sm:$0xff]
    %v1940 = vld [vmem:[%s1910 + $0xe0] sm:$0xff]
    %v1941 = vld [vmem:[%s1910 + $0x108] sm:$0xff]
    %v1942 = vld [vmem:[%s1910 + $0x130] sm:$0xff]
    %v1943 = vld [vmem:[%s1910 + $0x20] sm:$0xff]
    %v1944 = vld [vmem:[%s1910 + $0x48] sm:$0xff]
    %v1945 = vld [vmem:[%s1910 + $0x70] sm:$0xff]
    %v1946 = vld [vmem:[%s1910 + $0x98] sm:$0xff]
    %v1947 = vld [vmem:[%s1910 + $0xc0] sm:$0xff]
    %v1948 = vld [vmem:[%s1910 + $0xe8] sm:$0xff]
    %v1949 = vld [vmem:[%s1910 + $0x110] sm:$0xff]
    %v1950 = vld [vmem:[%s1910 + $0x138] sm:$0xff]
    %v1951 = vld [vmem:[%s1910 + $0x160] sm:$0xff]
    %v1952 = vld [vmem:[%s1910 + $0x188] sm:$0xff]
    %v1953 = vld [vmem:[%s1910 + $0x1b0] sm:$0xff]
    %v1954 = vld [vmem:[%s1910 + $0x1d8] sm:$0xff]
    %v1955 = vld [vmem:[%s1910 + $0x200] sm:$0xff]
    %v1956 = vld [vmem:[%s1910 + $0x228] sm:$0xff]
    %v1957 = vld [vmem:[%s1910 + $0x250] sm:$0xff]
    %v1958 = vld [vmem:[%s1910 + $0x278] sm:$0xff]
    %s1959 = scalar_lea.vmem %s3, 16
    %v1960 = vld [vmem:[%s1959] ss:$8 sm:$0x3]
    %v1961 = vld [vmem:[%s1959 + $0x1] ss:$0 sm:$0xff]
    %v1962 = vld [vmem:[%s1959 + $0x2] ss:$0 sm:$0xff]
    %v1963 = vld [vmem:[%s1959 + $0x3] ss:$0 sm:$0xff]
    %v1964 = vld [vmem:[%s1959 + $0x4] ss:$0 sm:$0xff]
    %v1965 = vld [vmem:[%s1959 + $0x5] ss:$0 sm:$0xff]
    %v1966 = vld [vmem:[%s1959 + $0x6] ss:$0 sm:$0xff]
    %v1967 = vld [vmem:[%s1959 + $0x7] ss:$0 sm:$0xff]
    %v1969 = vlaneseq
    %v1970 = vshrl.u32 %v1969, 7
    %v1971 = vsub.s32 0, %v1970
    %v1972 = vrot.slane %v1960, %v1971
    %v1973 = vlaneseq
    %v1974 = vshrl.u32 %v1973, 7
    %v1975 = vsub.s32 1, %v1974
    %v1976 = vrot.slane %v1960, %v1975
    %v1980 = vsel %vm45, %v1908, 0
    %v1983 = vsel %vm45, %v1909, 0
    %1985 = vmatprep.subr.mxu0 %v1912
    %1986 = vmatpush1.msra.mxu0 %v1911
    %1987 = vmatprep.subr.mxu0 %v1914
    %1988 = vmatpush1.msra.mxu0 %v1913
    %1989 = vmatprep.subr.mxu0 %v1916
    %1990 = vmatpush1.msra.mxu0 %v1915
    %1991 = vmatprep.subr.mxu0 %v1918
    %1992 = vmatpush1.msra.mxu0 %v1917
    %1993 = vmatprep.subr.mxu0 %v1920
    %1994 = vmatpush1.msra.mxu0 %v1919
    %1995 = vmatprep.subr.mxu0 %v1922
    %1996 = vmatpush1.msra.mxu0 %v1921
    %1997 = vmatprep.subr.mxu0 %v1924
    %1998 = vmatpush1.msra.mxu0 %v1923
    %1999 = vmatprep.subr.mxu0 %v1926
    %2000 = vmatpush1.msra.mxu0 %v1925
    %2001 = vmatprep.subr.mxu0 0.0
    %2002 = vmatpush1.msra.mxu0 0.0
    %2003 = vmatprep.subr.mxu0 0.0
    %2004 = vmatpush1.msra.mxu0 0.0
    %2005 = vmatprep.subr.mxu0 0.0
    %2006 = vmatpush1.msra.mxu0 0.0
    %2007 = vmatprep.subr.mxu0 0.0
    %2008 = vmatpush1.msra.mxu0 0.0
    %2009 = vmatprep.subr.mxu0 0.0
    %2010 = vmatpush1.msra.mxu0 0.0
    %2011 = vmatprep.subr.mxu0 0.0
    %2012 = vmatpush1.msra.mxu0 0.0
    %2013 = vmatprep.subr.mxu0 0.0
    %2014 = vmatpush1.msra.mxu0 0.0
    %2015 = vmatprep.subr.mxu0 0.0
    %2016 = vmatpush1.msra.mxu0 0.0
    %2017 = vmatprep.subr.mxu0 0.0
    %2018 = vmatpush1.msra.mxu0 0.0
    %2019 = vmatprep.subr.mxu0 0.0
    %2020 = vmatpush1.msra.mxu0 0.0
    %2021 = vmatprep.subr.mxu0 0.0
    %2022 = vmatpush1.msra.mxu0 0.0
    %2023 = vmatprep.subr.mxu0 0.0
    %2024 = vmatpush1.msra.mxu0 0.0
    %2025 = vmatprep.subr.mxu0 0.0
    %2026 = vmatpush1.msra.mxu0 0.0
    %2027 = vmatprep.subr.mxu0 0.0
    %2028 = vmatpush1.msra.mxu0 0.0
    %2029 = vmatprep.subr.mxu0 0.0
    %2030 = vmatpush1.msra.mxu0 0.0
    %2031 = vmatprep.subr.mxu0 0.0
    %2032 = vmatpush1.msra.mxu0 0.0
    %2033 = vmatprep.subr.mxu0 0.0
    %2034 = vmatpush1.msra.mxu0 0.0
    %2035 = vmatprep.subr.mxu0 0.0
    %2036 = vmatpush1.msra.mxu0 0.0
    %2037 = vmatprep.subr.mxu0 0.0
    %2038 = vmatpush1.msra.mxu0 0.0
    %2039 = vmatprep.subr.mxu0 0.0
    %2040 = vmatpush1.msra.mxu0 0.0
    %2041 = vmatprep.subr.mxu0 0.0
    %2042 = vmatpush1.msra.mxu0 0.0
    %2043 = vmatprep.subr.mxu0 0.0
    %2044 = vmatpush1.msra.mxu0 0.0
    %2045 = vmatprep.subr.mxu0 0.0
    %2046 = vmatpush1.msra.mxu0 0.0
    %2047 = vmatprep.subr.mxu0 0.0
    %2048 = vmatpush1.msra.mxu0 0.0
    %2049 = vmatprep.mubr.f32.mxu0 0.0
    %2050 = vmatmul.mubr.f32.gmra.mrb[0].mxu0 %v1980
    %v2051 = vpop.f32.mrb[0].mxu0
    %v2052 = vadd.f32 %v1972, %v2051
    %v2053 = vpop.f32.mrb[0].mxu0
    %v2054 = vadd.f32 %v1976, %v2053
    %2055 = vmatprep.mubr.f32.mxu0 0.0
    %2056 = vmatmul.mubr.f32.gmra.mrb[0].mxu0 %v1983
    %v2057 = vpop.f32.mrb[0].mxu0
    %v2058 = vadd.f32 %v1972, %v2057
    %v2059 = vpop.f32.mrb[0].mxu0
    %v2060 = vadd.f32 %v1976, %v2059
    %2061 = vdwg.mxu0
    %v2062 = vmul.f32 %v2052, 0.25
    %v2063 = vmul.f32 %v2058, 0.25
    %2065 = vrot.lane.b32.xlu0 %v2052, 64
    %v2066 = vpop.permute.xlu0 %2065
    %v2068 = vsel %vm252, %v2062, 0
    %v2070 = vsel %vm252, %v2066, 0
    %2072 = vmatprep.subr.mxu0 0.0
    %2073 = vmatpush1.xpose.msra.mxu0 %v2070
    %2074 = vmatprep.subr.mxu0 0.0
    %2075 = vmatpush1.xpose.msra.mxu0 0.0
    %2076 = vmatprep.subr.mxu0 0.0
    %2077 = vmatpush1.xpose.msra.mxu0 0.0
    %2078 = vmatprep.subr.mxu0 0.0
    %2079 = vmatpush1.xpose.msra.mxu0 0.0
    %2080 = vmatprep.subr.mxu0 0.0
    %2081 = vmatpush1.xpose.msra.mxu0 0.0
    %2082 = vmatprep.subr.mxu0 0.0
    %2083 = vmatpush1.xpose.msra.mxu0 0.0
    %2084 = vmatprep.subr.mxu0 0.0
    %2085 = vmatpush1.xpose.msra.mxu0 0.0
    %2086 = vmatprep.subr.mxu0 0.0
    %2087 = vmatpush1.xpose.msra.mxu0 0.0
    %2088 = vmatprep.subr.mxu0 0.0
    %2089 = vmatpush1.xpose.msra.mxu0 0.0
    %2090 = vmatprep.subr.mxu0 0.0
    %2091 = vmatpush1.xpose.msra.mxu0 0.0
    %2092 = vmatprep.subr.mxu0 0.0
    %2093 = vmatpush1.xpose.msra.mxu0 0.0
    %2094 = vmatprep.subr.mxu0 0.0
    %2095 = vmatpush1.xpose.msra.mxu0 0.0
    %2096 = vmatprep.subr.mxu0 0.0
    %2097 = vmatpush1.xpose.msra.mxu0 0.0
    %2098 = vmatprep.subr.mxu0 0.0
    %2099 = vmatpush1.xpose.msra.mxu0 0.0
    %2100 = vmatprep.subr.mxu0 0.0
    %2101 = vmatpush1.xpose.msra.mxu0 0.0
    %2102 = vmatprep.subr.mxu0 0.0
    %2103 = vmatpush1.xpose.msra.mxu0 0.0
    %2104 = vmatprep.subr.mxu0 0.0
    %2105 = vmatpush1.xpose.msra.mxu0 0.0
    %2106 = vmatprep.subr.mxu0 0.0
    %2107 = vmatpush1.xpose.msra.mxu0 0.0
    %2108 = vmatprep.subr.mxu0 0.0
    %2109 = vmatpush1.xpose.msra.mxu0 0.0
    %2110 = vmatprep.subr.mxu0 0.0
    %2111 = vmatpush1.xpose.msra.mxu0 0.0
    %2112 = vmatprep.subr.mxu0 0.0
    %2113 = vmatpush1.xpose.msra.mxu0 0.0
    %2114 = vmatprep.subr.mxu0 0.0
    %2115 = vmatpush1.xpose.msra.mxu0 0.0
    %2116 = vmatprep.subr.mxu0 0.0
    %2117 = vmatpush1.xpose.msra.mxu0 0.0
    %2118 = vmatprep.subr.mxu0 0.0
    %2119 = vmatpush1.xpose.msra.mxu0 0.0
    %2120 = vmatprep.subr.mxu0 0.0
    %2121 = vmatpush1.xpose.msra.mxu0 0.0
    %2122 = vmatprep.subr.mxu0 0.0
    %2123 = vmatpush1.xpose.msra.mxu0 0.0
    %2124 = vmatprep.subr.mxu0 0.0
    %2125 = vmatpush1.xpose.msra.mxu0 0.0
    %2126 = vmatprep.subr.mxu0 0.0
    %2127 = vmatpush1.xpose.msra.mxu0 0.0
    %2128 = vmatprep.subr.mxu0 0.0
    %2129 = vmatpush1.xpose.msra.mxu0 0.0
    %2130 = vmatprep.subr.mxu0 0.0
    %2131 = vmatpush1.xpose.msra.mxu0 0.0
    %2132 = vmatprep.subr.mxu0 0.0
    %2133 = vmatpush1.xpose.msra.mxu0 0.0
    %2134 = vmatprep.subr.mxu0 0.0
    %2135 = vmatpush1.xpose.msra.mxu0 0.0
    %2136 = vmatprep.mubr.f32.mxu0 0.0
    %2137 = vmatmul.mubr.f32.gmra.mrb[0].mxu0 %v2068
    %v2138 = vpop.f32.mrb[0].mxu0
    %v2139 = vadd.f32 %v242, %v2138
    %v2140 = vpop.f32.mrb[0].mxu0
    %2141 = vdwg.mxu0
    %2143 = vrot.lane.b32.xlu0 %v2058, 64
    %v2144 = vpop.permute.xlu0 %2143
    %v2146 = vsel %vm252, %v2063, 0
    %v2148 = vsel %vm252, %v2144, 0
    %2150 = vmatprep.subr.mxu0 0.0
    %2151 = vmatpush1.xpose.msra.mxu0 %v2148
    %2152 = vmatprep.subr.mxu0 0.0
    %2153 = vmatpush1.xpose.msra.mxu0 0.0
    %2154 = vmatprep.subr.mxu0 0.0
    %2155 = vmatpush1.xpose.msra.mxu0 0.0
    %2156 = vmatprep.subr.mxu0 0.0
    %2157 = vmatpush1.xpose.msra.mxu0 0.0
    %2158 = vmatprep.subr.mxu0 0.0
    %2159 = vmatpush1.xpose.msra.mxu0 0.0
    %2160 = vmatprep.subr.mxu0 0.0
    %2161 = vmatpush1.xpose.msra.mxu0 0.0
    %2162 = vmatprep.subr.mxu0 0.0
    %2163 = vmatpush1.xpose.msra.mxu0 0.0
    %2164 = vmatprep.subr.mxu0 0.0
    %2165 = vmatpush1.xpose.msra.mxu0 0.0
    %2166 = vmatprep.subr.mxu0 0.0
    %2167 = vmatpush1.xpose.msra.mxu0 0.0
    %2168 = vmatprep.subr.mxu0 0.0
    %2169 = vmatpush1.xpose.msra.mxu0 0.0
    %2170 = vmatprep.subr.mxu0 0.0
    %2171 = vmatpush1.xpose.msra.mxu0 0.0
    %2172 = vmatprep.subr.mxu0 0.0
    %2173 = vmatpush1.xpose.msra.mxu0 0.0
    %2174 = vmatprep.subr.mxu0 0.0
    %2175 = vmatpush1.xpose.msra.mxu0 0.0
    %2176 = vmatprep.subr.mxu0 0.0
    %2177 = vmatpush1.xpose.msra.mxu0 0.0
    %2178 = vmatprep.subr.mxu0 0.0
    %2179 = vmatpush1.xpose.msra.mxu0 0.0
    %2180 = vmatprep.subr.mxu0 0.0
    %2181 = vmatpush1.xpose.msra.mxu0 0.0
    %2182 = vmatprep.subr.mxu0 0.0
    %2183 = vmatpush1.xpose.msra.mxu0 0.0
    %2184 = vmatprep.subr.mxu0 0.0
    %2185 = vmatpush1.xpose.msra.mxu0 0.0
    %2186 = vmatprep.subr.mxu0 0.0
    %2187 = vmatpush1.xpose.msra.mxu0 0.0
    %2188 = vmatprep.subr.mxu0 0.0
    %2189 = vmatpush1.xpose.msra.mxu0 0.0
    %2190 = vmatprep.subr.mxu0 0.0
    %2191 = vmatpush1.xpose.msra.mxu0 0.0
    %2192 = vmatprep.subr.mxu0 0.0
    %2193 = vmatpush1.xpose.msra.mxu0 0.0
    %2194 = vmatprep.subr.mxu0 0.0
    %2195 = vmatpush1.xpose.msra.mxu0 0.0
    %2196 = vmatprep.subr.mxu0 0.0
    %2197 = vmatpush1.xpose.msra.mxu0 0.0
    %2198 = vmatprep.subr.mxu0 0.0
    %2199 = vmatpush1.xpose.msra.mxu0 0.0
    %2200 = vmatprep.subr.mxu0 0.0
    %2201 = vmatpush1.xpose.msra.mxu0 0.0
    %2202 = vmatprep.subr.mxu0 0.0
    %2203 = vmatpush1.xpose.msra.mxu0 0.0
    %2204 = vmatprep.subr.mxu0 0.0
    %2205 = vmatpush1.xpose.msra.mxu0 0.0
    %2206 = vmatprep.subr.mxu0 0.0
    %2207 = vmatpush1.xpose.msra.mxu0 0.0
    %2208 = vmatprep.subr.mxu0 0.0
    %2209 = vmatpush1.xpose.msra.mxu0 0.0
    %2210 = vmatprep.subr.mxu0 0.0
    %2211 = vmatpush1.xpose.msra.mxu0 0.0
    %2212 = vmatprep.subr.mxu0 0.0
    %2213 = vmatpush1.xpose.msra.mxu0 0.0
    %2214 = vmatprep.mubr.f32.mxu0 0.0
    %2215 = vmatmul.mubr.f32.gmra.mrb[0].mxu0 %v2146
    %v2216 = vpop.f32.mrb[0].mxu0
    %v2217 = vadd.f32 %v246, %v2216
    %v2218 = vpop.f32.mrb[0].mxu0
    %2219 = vdwg.mxu0
    %v2220 = vsel %vm406, %v2139, -inf
    %2221 = vmax.xlane.f32.xlu0 %v2220
    %v2222 = vpop.xlane.xlu0 %2221
    %v2223 = vsel %vm406, %v2217, -inf
    %2224 = vmax.xlane.f32.xlu0 %v2223
    %v2225 = vpop.xlane.xlu0 %2224
    %v2226 = vsub.f32 %v2139, %v2222
    %v2227 = vsub.f32 %v2217, %v2225
    %v2228 = vmul.f32 %v2226, 1.442695
    %v2229 = vpow.pop %v2228
    %v2230 = vmul.f32 %v2227, 1.442695
    %v2231 = vpow.pop %v2230
    %v2232 = vsel %vm406, %v2229, 0.0
    %2233 = vadd.xlane.f32.xlu0 %v2232
    %v2234 = vpop.xlane.xlu0 %2233
    %v2235 = vsel %vm406, %v2231, 0.0
    %2236 = vadd.xlane.f32.xlu0 %v2235
    %v2237 = vpop.xlane.xlu0 %2236
    %v2238 = vrcp.pop %v2234
    %v2239 = vrcp.pop %v2237
    %v2240 = vmul.f32 %v2229, %v2238
    %v2241 = vmul.f32 %v2231, %v2239
    %v2243 = vsel %vm406, %v2240, 0
    %2245 = vmatprep.subr.mxu0 0.0
    %2246 = vmatpush1.msra.mxu0 %v2054
    %2247 = vmatprep.subr.mxu0 0.0
    %2248 = vmatpush1.msra.mxu0 0.0
    %2249 = vmatprep.subr.mxu0 0.0
    %2250 = vmatpush1.msra.mxu0 0.0
    %2251 = vmatprep.subr.mxu0 0.0
    %2252 = vmatpush1.msra.mxu0 0.0
    %2253 = vmatprep.subr.mxu0 0.0
    %2254 = vmatpush1.msra.mxu0 0.0
    %2255 = vmatprep.subr.mxu0 0.0
    %2256 = vmatpush1.msra.mxu0 0.0
    %2257 = vmatprep.subr.mxu0 0.0
    %2258 = vmatpush1.msra.mxu0 0.0
    %2259 = vmatprep.subr.mxu0 0.0
    %2260 = vmatpush1.msra.mxu0 0.0
    %2261 = vmatprep.subr.mxu0 0.0
    %2262 = vmatpush1.msra.mxu0 0.0
    %2263 = vmatprep.subr.mxu0 0.0
    %2264 = vmatpush1.msra.mxu0 0.0
    %2265 = vmatprep.subr.mxu0 0.0
    %2266 = vmatpush1.msra.mxu0 0.0
    %2267 = vmatprep.subr.mxu0 0.0
    %2268 = vmatpush1.msra.mxu0 0.0
    %2269 = vmatprep.subr.mxu0 0.0
    %2270 = vmatpush1.msra.mxu0 0.0
    %2271 = vmatprep.subr.mxu0 0.0
    %2272 = vmatpush1.msra.mxu0 0.0
    %2273 = vmatprep.subr.mxu0 0.0
    %2274 = vmatpush1.msra.mxu0 0.0
    %2275 = vmatprep.subr.mxu0 0.0
    %2276 = vmatpush1.msra.mxu0 0.0
    %2277 = vmatprep.subr.mxu0 0.0
    %2278 = vmatpush1.msra.mxu0 0.0
    %2279 = vmatprep.subr.mxu0 0.0
    %2280 = vmatpush1.msra.mxu0 0.0
    %2281 = vmatprep.subr.mxu0 0.0
    %2282 = vmatpush1.msra.mxu0 0.0
    %2283 = vmatprep.subr.mxu0 0.0
    %2284 = vmatpush1.msra.mxu0 0.0
    %2285 = vmatprep.subr.mxu0 0.0
    %2286 = vmatpush1.msra.mxu0 0.0
    %2287 = vmatprep.subr.mxu0 0.0
    %2288 = vmatpush1.msra.mxu0 0.0
    %2289 = vmatprep.subr.mxu0 0.0
    %2290 = vmatpush1.msra.mxu0 0.0
    %2291 = vmatprep.subr.mxu0 0.0
    %2292 = vmatpush1.msra.mxu0 0.0
    %2293 = vmatprep.subr.mxu0 0.0
    %2294 = vmatpush1.msra.mxu0 0.0
    %2295 = vmatprep.subr.mxu0 0.0
    %2296 = vmatpush1.msra.mxu0 0.0
    %2297 = vmatprep.subr.mxu0 0.0
    %2298 = vmatpush1.msra.mxu0 0.0
    %2299 = vmatprep.subr.mxu0 0.0
    %2300 = vmatpush1.msra.mxu0 0.0
    %2301 = vmatprep.subr.mxu0 0.0
    %2302 = vmatpush1.msra.mxu0 0.0
    %2303 = vmatprep.subr.mxu0 0.0
    %2304 = vmatpush1.msra.mxu0 0.0
    %2305 = vmatprep.subr.mxu0 0.0
    %2306 = vmatpush1.msra.mxu0 0.0
    %2307 = vmatprep.subr.mxu0 0.0
    %2308 = vmatpush1.msra.mxu0 0.0
    %2309 = vmatprep.mubr.f32.mxu0 0.0
    %2310 = vmatmul.mubr.f32.gmra.mrb[0].mxu0 %v2243
    %v2311 = vpop.f32.mrb[0].mxu0
    %v2312 = vadd.f32 0.0, %v2311
    %v2313 = vpop.f32.mrb[0].mxu0
    %2314 = vdwg.mxu0
    %v2316 = vsel %vm406, %v2241, 0
    %2318 = vmatprep.subr.mxu0 0.0
    %2319 = vmatpush1.msra.mxu0 %v2060
    %2320 = vmatprep.subr.mxu0 0.0
    %2321 = vmatpush1.msra.mxu0 0.0
    %2322 = vmatprep.subr.mxu0 0.0
    %2323 = vmatpush1.msra.mxu0 0.0
    %2324 = vmatprep.subr.mxu0 0.0
    %2325 = vmatpush1.msra.mxu0 0.0
    %2326 = vmatprep.subr.mxu0 0.0
    %2327 = vmatpush1.msra.mxu0 0.0
    %2328 = vmatprep.subr.mxu0 0.0
    %2329 = vmatpush1.msra.mxu0 0.0
    %2330 = vmatprep.subr.mxu0 0.0
    %2331 = vmatpush1.msra.mxu0 0.0
    %2332 = vmatprep.subr.mxu0 0.0
    %2333 = vmatpush1.msra.mxu0 0.0
    %2334 = vmatprep.subr.mxu0 0.0
    %2335 = vmatpush1.msra.mxu0 0.0
    %2336 = vmatprep.subr.mxu0 0.0
    %2337 = vmatpush1.msra.mxu0 0.0
    %2338 = vmatprep.subr.mxu0 0.0
    %2339 = vmatpush1.msra.mxu0 0.0
    %2340 = vmatprep.subr.mxu0 0.0
    %2341 = vmatpush1.msra.mxu0 0.0
    %2342 = vmatprep.subr.mxu0 0.0
    %2343 = vmatpush1.msra.mxu0 0.0
    %2344 = vmatprep.subr.mxu0 0.0
    %2345 = vmatpush1.msra.mxu0 0.0
    %2346 = vmatprep.subr.mxu0 0.0
    %2347 = vmatpush1.msra.mxu0 0.0
    %2348 = vmatprep.subr.mxu0 0.0
    %2349 = vmatpush1.msra.mxu0 0.0
    %2350 = vmatprep.subr.mxu0 0.0
    %2351 = vmatpush1.msra.mxu0 0.0
    %2352 = vmatprep.subr.mxu0 0.0
    %2353 = vmatpush1.msra.mxu0 0.0
    %2354 = vmatprep.subr.mxu0 0.0
    %2355 = vmatpush1.msra.mxu0 0.0
    %2356 = vmatprep.subr.mxu0 0.0
    %2357 = vmatpush1.msra.mxu0 0.0
    %2358 = vmatprep.subr.mxu0 0.0
    %2359 = vmatpush1.msra.mxu0 0.0
    %2360 = vmatprep.subr.mxu0 0.0
    %2361 = vmatpush1.msra.mxu0 0.0
    %2362 = vmatprep.subr.mxu0 0.0
    %2363 = vmatpush1.msra.mxu0 0.0
    %2364 = vmatprep.subr.mxu0 0.0
    %2365 = vmatpush1.msra.mxu0 0.0
    %2366 = vmatprep.subr.mxu0 0.0
    %2367 = vmatpush1.msra.mxu0 0.0
    %2368 = vmatprep.subr.mxu0 0.0
    %2369 = vmatpush1.msra.mxu0 0.0
    %2370 = vmatprep.subr.mxu0 0.0
    %2371 = vmatpush1.msra.mxu0 0.0
    %2372 = vmatprep.subr.mxu0 0.0
    %2373 = vmatpush1.msra.mxu0 0.0
    %2374 = vmatprep.subr.mxu0 0.0
    %2375 = vmatpush1.msra.mxu0 0.0
    %2376 = vmatprep.subr.mxu0 0.0
    %2377 = vmatpush1.msra.mxu0 0.0
    %2378 = vmatprep.subr.mxu0 0.0
    %2379 = vmatpush1.msra.mxu0 0.0
    %2380 = vmatprep.subr.mxu0 0.0
    %2381 = vmatpush1.msra.mxu0 0.0
    %2382 = vmatprep.mubr.f32.mxu0 0.0
    %2383 = vmatmul.mubr.f32.gmra.mrb[0].mxu0 %v2316
    %v2384 = vpop.f32.mrb[0].mxu0
    %v2385 = vadd.f32 0.0, %v2384
    %v2386 = vpop.f32.mrb[0].mxu0
    %2387 = vdwg.mxu0
    %2388 = vrot.lane.b32.xlu0 %v2062, 112
    %v2389 = vpop.permute.xlu0 %2388
    %2390 = vrot.lane.b32.xlu0 %v2052, 48
    %v2391 = vpop.permute.xlu0 %2390
    %v2392 = vsel %vm252, %v2389, 0
    %v2394 = vsel %vm252, %v2391, 0
    %2396 = vmatprep.subr.mxu0 0.0
    %2397 = vmatpush1.xpose.msra.mxu0 %v2394
    %2398 = vmatprep.subr.mxu0 0.0
    %2399 = vmatpush1.xpose.msra.mxu0 0.0
    %2400 = vmatprep.subr.mxu0 0.0
    %2401 = vmatpush1.xpose.msra.mxu0 0.0
    %2402 = vmatprep.subr.mxu0 0.0
    %2403 = vmatpush1.xpose.msra.mxu0 0.0
    %2404 = vmatprep.subr.mxu0 0.0
    %2405 = vmatpush1.xpose.msra.mxu0 0.0
    %2406 = vmatprep.subr.mxu0 0.0
    %2407 = vmatpush1.xpose.msra.mxu0 0.0
    %2408 = vmatprep.subr.mxu0 0.0
    %2409 = vmatpush1.xpose.msra.mxu0 0.0
    %2410 = vmatprep.subr.mxu0 0.0
    %2411 = vmatpush1.xpose.msra.mxu0 0.0
    %2412 = vmatprep.subr.mxu0 0.0
    %2413 = vmatpush1.xpose.msra.mxu0 0.0
    %2414 = vmatprep.subr.mxu0 0.0
    %2415 = vmatpush1.xpose.msra.mxu0 0.0
    %2416 = vmatprep.subr.mxu0 0.0
    %2417 = vmatpush1.xpose.msra.mxu0 0.0
    %2418 = vmatprep.subr.mxu0 0.0
    %2419 = vmatpush1.xpose.msra.mxu0 0.0
    %2420 = vmatprep.subr.mxu0 0.0
    %2421 = vmatpush1.xpose.msra.mxu0 0.0
    %2422 = vmatprep.subr.mxu0 0.0
    %2423 = vmatpush1.xpose.msra.mxu0 0.0
    %2424 = vmatprep.subr.mxu0 0.0
    %2425 = vmatpush1.xpose.msra.mxu0 0.0
    %2426 = vmatprep.subr.mxu0 0.0
    %2427 = vmatpush1.xpose.msra.mxu0 0.0
    %2428 = vmatprep.subr.mxu0 0.0
    %2429 = vmatpush1.xpose.msra.mxu0 0.0
    %2430 = vmatprep.subr.mxu0 0.0
    %2431 = vmatpush1.xpose.msra.mxu0 0.0
    %2432 = vmatprep.subr.mxu0 0.0
    %2433 = vmatpush1.xpose.msra.mxu0 0.0
    %2434 = vmatprep.subr.mxu0 0.0
    %2435 = vmatpush1.xpose.msra.mxu0 0.0
    %2436 = vmatprep.subr.mxu0 0.0
    %2437 = vmatpush1.xpose.msra.mxu0 0.0
    %2438 = vmatprep.subr.mxu0 0.0
    %2439 = vmatpush1.xpose.msra.mxu0 0.0
    %2440 = vmatprep.subr.mxu0 0.0
    %2441 = vmatpush1.xpose.msra.mxu0 0.0
    %2442 = vmatprep.subr.mxu0 0.0
    %2443 = vmatpush1.xpose.msra.mxu0 0.0
    %2444 = vmatprep.subr.mxu0 0.0
    %2445 = vmatpush1.xpose.msra.mxu0 0.0
    %2446 = vmatprep.subr.mxu0 0.0
    %2447 = vmatpush1.xpose.msra.mxu0 0.0
    %2448 = vmatprep.subr.mxu0 0.0
    %2449 = vmatpush1.xpose.msra.mxu0 0.0
    %2450 = vmatprep.subr.mxu0 0.0
    %2451 = vmatpush1.xpose.msra.mxu0 0.0
    %2452 = vmatprep.subr.mxu0 0.0
    %2453 = vmatpush1.xpose.msra.mxu0 0.0
    %2454 = vmatprep.subr.mxu0 0.0
    %2455 = vmatpush1.xpose.msra.mxu0 0.0
    %2456 = vmatprep.subr.mxu0 0.0
    %2457 = vmatpush1.xpose.msra.mxu0 0.0
    %2458 = vmatprep.subr.mxu0 0.0
    %2459 = vmatpush1.xpose.msra.mxu0 0.0
    %2460 = vmatprep.mubr.f32.mxu0 0.0
    %2461 = vmatmul.mubr.f32.gmra.mrb[0].mxu0 %v2392
    %v2462 = vpop.f32.mrb[0].mxu0
    %v2463 = vadd.f32 %v242, %v2462
    %v2464 = vpop.f32.mrb[0].mxu0
    %2465 = vdwg.mxu0
    %2466 = vrot.lane.b32.xlu0 %v2063, 112
    %v2467 = vpop.permute.xlu0 %2466
    %2468 = vrot.lane.b32.xlu0 %v2058, 48
    %v2469 = vpop.permute.xlu0 %2468
    %v2470 = vsel %vm252, %v2467, 0
    %v2472 = vsel %vm252, %v2469, 0
    %2474 = vmatprep.subr.mxu0 0.0
    %2475 = vmatpush1.xpose.msra.mxu0 %v2472
    %2476 = vmatprep.subr.mxu0 0.0
    %2477 = vmatpush1.xpose.msra.mxu0 0.0
    %2478 = vmatprep.subr.mxu0 0.0
    %2479 = vmatpush1.xpose.msra.mxu0 0.0
    %2480 = vmatprep.subr.mxu0 0.0
    %2481 = vmatpush1.xpose.msra.mxu0 0.0
    %2482 = vmatprep.subr.mxu0 0.0
    %2483 = vmatpush1.xpose.msra.mxu0 0.0
    %2484 = vmatprep.subr.mxu0 0.0
    %2485 = vmatpush1.xpose.msra.mxu0 0.0
    %2486 = vmatprep.subr.mxu0 0.0
    %2487 = vmatpush1.xpose.msra.mxu0 0.0
    %2488 = vmatprep.subr.mxu0 0.0
    %2489 = vmatpush1.xpose.msra.mxu0 0.0
    %2490 = vmatprep.subr.mxu0 0.0
    %2491 = vmatpush1.xpose.msra.mxu0 0.0
    %2492 = vmatprep.subr.mxu0 0.0
    %2493 = vmatpush1.xpose.msra.mxu0 0.0
    %2494 = vmatprep.subr.mxu0 0.0
    %2495 = vmatpush1.xpose.msra.mxu0 0.0
    %2496 = vmatprep.subr.mxu0 0.0
    %2497 = vmatpush1.xpose.msra.mxu0 0.0
    %2498 = vmatprep.subr.mxu0 0.0
    %2499 = vmatpush1.xpose.msra.mxu0 0.0
    %2500 = vmatprep.subr.mxu0 0.0
    %2501 = vmatpush1.xpose.msra.mxu0 0.0
    %2502 = vmatprep.subr.mxu0 0.0
    %2503 = vmatpush1.xpose.msra.mxu0 0.0
    %2504 = vmatprep.subr.mxu0 0.0
    %2505 = vmatpush1.xpose.msra.mxu0 0.0
    %2506 = vmatprep.subr.mxu0 0.0
    %2507 = vmatpush1.xpose.msra.mxu0 0.0
    %2508 = vmatprep.subr.mxu0 0.0
    %2509 = vmatpush1.xpose.msra.mxu0 0.0
    %2510 = vmatprep.subr.mxu0 0.0
    %2511 = vmatpush1.xpose.msra.mxu0 0.0
    %2512 = vmatprep.subr.mxu0 0.0
    %2513 = vmatpush1.xpose.msra.mxu0 0.0
    %2514 = vmatprep.subr.mxu0 0.0
    %2515 = vmatpush1.xpose.msra.mxu0 0.0
    %2516 = vmatprep.subr.mxu0 0.0
    %2517 = vmatpush1.xpose.msra.mxu0 0.0
    %2518 = vmatprep.subr.mxu0 0.0
    %2519 = vmatpush1.xpose.msra.mxu0 0.0
    %2520 = vmatprep.subr.mxu0 0.0
    %2521 = vmatpush1.xpose.msra.mxu0 0.0
    %2522 = vmatprep.subr.mxu0 0.0
    %2523 = vmatpush1.xpose.msra.mxu0 0.0
    %2524 = vmatprep.subr.mxu0 0.0
    %2525 = vmatpush1.xpose.msra.mxu0 0.0
    %2526 = vmatprep.subr.mxu0 0.0
    %2527 = vmatpush1.xpose.msra.mxu0 0.0
    %2528 = vmatprep.subr.mxu0 0.0
    %2529 = vmatpush1.xpose.msra.mxu0 0.0
    %2530 = vmatprep.subr.mxu0 0.0
    %2531 = vmatpush1.xpose.msra.mxu0 0.0
    %2532 = vmatprep.subr.mxu0 0.0
    %2533 = vmatpush1.xpose.msra.mxu0 0.0
    %2534 = vmatprep.subr.mxu0 0.0
    %2535 = vmatpush1.xpose.msra.mxu0 0.0
    %2536 = vmatprep.subr.mxu0 0.0
    %2537 = vmatpush1.xpose.msra.mxu0 0.0
    %2538 = vmatprep.mubr.f32.mxu0 0.0
    %2539 = vmatmul.mubr.f32.gmra.mrb[0].mxu0 %v2470
    %v2540 = vpop.f32.mrb[0].mxu0
    %v2541 = vadd.f32 %v246, %v2540
    %v2542 = vpop.f32.mrb[0].mxu0
    %2543 = vdwg.mxu0
    %v2544 = vsel %vm406, %v2463, -inf
    %2545 = vmax.xlane.f32.xlu0 %v2544
    %v2546 = vpop.xlane.xlu0 %2545
    %v2547 = vsel %vm406, %v2541, -inf
    %2548 = vmax.xlane.f32.xlu0 %v2547
    %v2549 = vpop.xlane.xlu0 %2548
    %v2550 = vsub.f32 %v2463, %v2546
    %v2551 = vsub.f32 %v2541, %v2549
    %v2552 = vmul.f32 %v2550, 1.442695
    %v2553 = vpow.pop %v2552
    %v2554 = vmul.f32 %v2551, 1.442695
    %v2555 = vpow.pop %v2554
    %v2556 = vsel %vm406, %v2553, 0.0
    %2557 = vadd.xlane.f32.xlu0 %v2556
    %v2558 = vpop.xlane.xlu0 %2557
    %v2559 = vsel %vm406, %v2555, 0.0
    %2560 = vadd.xlane.f32.xlu0 %v2559
    %v2561 = vpop.xlane.xlu0 %2560
    %v2562 = vrcp.pop %v2558
    %v2563 = vrcp.pop %v2561
    %v2564 = vmul.f32 %v2553, %v2562
    %v2565 = vmul.f32 %v2555, %v2563
    %2567 = vrot.lane.b32.xlu0 %v2054, 112
    %v2568 = vpop.permute.xlu0 %2567
    %v2571 = vsel %vm406, %v2564, 0
    %2573 = vmatprep.subr.mxu0 0.0
    %2574 = vmatpush1.msra.mxu0 %v2568
    %2575 = vmatprep.subr.mxu0 0.0
    %2576 = vmatpush1.msra.mxu0 0.0
    %2577 = vmatprep.subr.mxu0 0.0
    %2578 = vmatpush1.msra.mxu0 0.0
    %2579 = vmatprep.subr.mxu0 0.0
    %2580 = vmatpush1.msra.mxu0 0.0
    %2581 = vmatprep.subr.mxu0 0.0
    %2582 = vmatpush1.msra.mxu0 0.0
    %2583 = vmatprep.subr.mxu0 0.0
    %2584 = vmatpush1.msra.mxu0 0.0
    %2585 = vmatprep.subr.mxu0 0.0
    %2586 = vmatpush1.msra.mxu0 0.0
    %2587 = vmatprep.subr.mxu0 0.0
    %2588 = vmatpush1.msra.mxu0 0.0
    %2589 = vmatprep.subr.mxu0 0.0
    %2590 = vmatpush1.msra.mxu0 0.0
    %2591 = vmatprep.subr.mxu0 0.0
    %2592 = vmatpush1.msra.mxu0 0.0
    %2593 = vmatprep.subr.mxu0 0.0
    %2594 = vmatpush1.msra.mxu0 0.0
    %2595 = vmatprep.subr.mxu0 0.0
    %2596 = vmatpush1.msra.mxu0 0.0
    %2597 = vmatprep.subr.mxu0 0.0
    %2598 = vmatpush1.msra.mxu0 0.0
    %2599 = vmatprep.subr.mxu0 0.0
    %2600 = vmatpush1.msra.mxu0 0.0
    %2601 = vmatprep.subr.mxu0 0.0
    %2602 = vmatpush1.msra.mxu0 0.0
    %2603 = vmatprep.subr.mxu0 0.0
    %2604 = vmatpush1.msra.mxu0 0.0
    %2605 = vmatprep.subr.mxu0 0.0
    %2606 = vmatpush1.msra.mxu0 0.0
    %2607 = vmatprep.subr.mxu0 0.0
    %2608 = vmatpush1.msra.mxu0 0.0
    %2609 = vmatprep.subr.mxu0 0.0
    %2610 = vmatpush1.msra.mxu0 0.0
    %2611 = vmatprep.subr.mxu0 0.0
    %2612 = vmatpush1.msra.mxu0 0.0
    %2613 = vmatprep.subr.mxu0 0.0
    %2614 = vmatpush1.msra.mxu0 0.0
    %2615 = vmatprep.subr.mxu0 0.0
    %2616 = vmatpush1.msra.mxu0 0.0
    %2617 = vmatprep.subr.mxu0 0.0
    %2618 = vmatpush1.msra.mxu0 0.0
    %2619 = vmatprep.subr.mxu0 0.0
    %2620 = vmatpush1.msra.mxu0 0.0
    %2621 = vmatprep.subr.mxu0 0.0
    %2622 = vmatpush1.msra.mxu0 0.0
    %2623 = vmatprep.subr.mxu0 0.0
    %2624 = vmatpush1.msra.mxu0 0.0
    %2625 = vmatprep.subr.mxu0 0.0
    %2626 = vmatpush1.msra.mxu0 0.0
    %2627 = vmatprep.subr.mxu0 0.0
    %2628 = vmatpush1.msra.mxu0 0.0
    %2629 = vmatprep.subr.mxu0 0.0
    %2630 = vmatpush1.msra.mxu0 0.0
    %2631 = vmatprep.subr.mxu0 0.0
    %2632 = vmatpush1.msra.mxu0 0.0
    %2633 = vmatprep.subr.mxu0 0.0
    %2634 = vmatpush1.msra.mxu0 0.0
    %2635 = vmatprep.subr.mxu0 0.0
    %2636 = vmatpush1.msra.mxu0 0.0
    %2637 = vmatprep.mubr.f32.mxu0 0.0
    %2638 = vmatmul.mubr.f32.gmra.mrb[0].mxu0 %v2571
    %v2639 = vpop.f32.mrb[0].mxu0
    %v2640 = vadd.f32 0.0, %v2639
    %v2641 = vpop.f32.mrb[0].mxu0
    %2642 = vdwg.mxu0
    %2644 = vrot.lane.b32.xlu0 %v2060, 112
    %v2645 = vpop.permute.xlu0 %2644
    %v2648 = vsel %vm406, %v2565, 0
    %2650 = vmatprep.subr.mxu0 0.0
    %2651 = vmatpush1.msra.mxu0 %v2645
    %2652 = vmatprep.subr.mxu0 0.0
    %2653 = vmatpush1.msra.mxu0 0.0
    %2654 = vmatprep.subr.mxu0 0.0
    %2655 = vmatpush1.msra.mxu0 0.0
    %2656 = vmatprep.subr.mxu0 0.0
    %2657 = vmatpush1.msra.mxu0 0.0
    %2658 = vmatprep.subr.mxu0 0.0
    %2659 = vmatpush1.msra.mxu0 0.0
    %2660 = vmatprep.subr.mxu0 0.0
    %2661 = vmatpush1.msra.mxu0 0.0
    %2662 = vmatprep.subr.mxu0 0.0
    %2663 = vmatpush1.msra.mxu0 0.0
    %2664 = vmatprep.subr.mxu0 0.0
    %2665 = vmatpush1.msra.mxu0 0.0
    %2666 = vmatprep.subr.mxu0 0.0
    %2667 = vmatpush1.msra.mxu0 0.0
    %2668 = vmatprep.subr.mxu0 0.0
    %2669 = vmatpush1.msra.mxu0 0.0
    %2670 = vmatprep.subr.mxu0 0.0
    %2671 = vmatpush1.msra.mxu0 0.0
    %2672 = vmatprep.subr.mxu0 0.0
    %2673 = vmatpush1.msra.mxu0 0.0
    %2674 = vmatprep.subr.mxu0 0.0
    %2675 = vmatpush1.msra.mxu0 0.0
    %2676 = vmatprep.subr.mxu0 0.0
    %2677 = vmatpush1.msra.mxu0 0.0
    %2678 = vmatprep.subr.mxu0 0.0
    %2679 = vmatpush1.msra.mxu0 0.0
    %2680 = vmatprep.subr.mxu0 0.0
    %2681 = vmatpush1.msra.mxu0 0.0
    %2682 = vmatprep.subr.mxu0 0.0
    %2683 = vmatpush1.msra.mxu0 0.0
    %2684 = vmatprep.subr.mxu0 0.0
    %2685 = vmatpush1.msra.mxu0 0.0
    %2686 = vmatprep.subr.mxu0 0.0
    %2687 = vmatpush1.msra.mxu0 0.0
    %2688 = vmatprep.subr.mxu0 0.0
    %2689 = vmatpush1.msra.mxu0 0.0
    %2690 = vmatprep.subr.mxu0 0.0
    %2691 = vmatpush1.msra.mxu0 0.0
    %2692 = vmatprep.subr.mxu0 0.0
    %2693 = vmatpush1.msra.mxu0 0.0
    %2694 = vmatprep.subr.mxu0 0.0
    %2695 = vmatpush1.msra.mxu0 0.0
    %2696 = vmatprep.subr.mxu0 0.0
    %2697 = vmatpush1.msra.mxu0 0.0
    %2698 = vmatprep.subr.mxu0 0.0
    %2699 = vmatpush1.msra.mxu0 0.0
    %2700 = vmatprep.subr.mxu0 0.0
    %2701 = vmatpush1.msra.mxu0 0.0
    %2702 = vmatprep.subr.mxu0 0.0
    %2703 = vmatpush1.msra.mxu0 0.0
    %2704 = vmatprep.subr.mxu0 0.0
    %2705 = vmatpush1.msra.mxu0 0.0
    %2706 = vmatprep.subr.mxu0 0.0
    %2707 = vmatpush1.msra.mxu0 0.0
    %2708 = vmatprep.subr.mxu0 0.0
    %2709 = vmatpush1.msra.mxu0 0.0
    %2710 = vmatprep.subr.mxu0 0.0
    %2711 = vmatpush1.msra.mxu0 0.0
    %2712 = vmatprep.subr.mxu0 0.0
    %2713 = vmatpush1.msra.mxu0 0.0
    %2714 = vmatprep.mubr.f32.mxu0 0.0
    %2715 = vmatmul.mubr.f32.gmra.mrb[0].mxu0 %v2648
    %v2716 = vpop.f32.mrb[0].mxu0
    %v2717 = vadd.f32 0.0, %v2716
    %v2718 = vpop.f32.mrb[0].mxu0
    %2719 = vdwg.mxu0
    %2720 = vrot.lane.b32.xlu0 %v2062, 96
    %v2721 = vpop.permute.xlu0 %2720
    %2722 = vrot.lane.b32.xlu0 %v2052, 32
    %v2723 = vpop.permute.xlu0 %2722
    %v2724 = vsel %vm252, %v2721, 0
    %v2726 = vsel %vm252, %v2723, 0
    %2728 = vmatprep.subr.mxu0 0.0
    %2729 = vmatpush1.xpose.msra.mxu0 %v2726
    %2730 = vmatprep.subr.mxu0 0.0
    %2731 = vmatpush1.xpose.msra.mxu0 0.0
    %2732 = vmatprep.subr.mxu0 0.0
    %2733 = vmatpush1.xpose.msra.mxu0 0.0
    %2734 = vmatprep.subr.mxu0 0.0
    %2735 = vmatpush1.xpose.msra.mxu0 0.0
    %2736 = vmatprep.subr.mxu0 0.0
    %2737 = vmatpush1.xpose.msra.mxu0 0.0
    %2738 = vmatprep.subr.mxu0 0.0
    %2739 = vmatpush1.xpose.msra.mxu0 0.0
    %2740 = vmatprep.subr.mxu0 0.0
    %2741 = vmatpush1.xpose.msra.mxu0 0.0
    %2742 = vmatprep.subr.mxu0 0.0
    %2743 = vmatpush1.xpose.msra.mxu0 0.0
    %2744 = vmatprep.subr.mxu0 0.0
    %2745 = vmatpush1.xpose.msra.mxu0 0.0
    %2746 = vmatprep.subr.mxu0 0.0
    %2747 = vmatpush1.xpose.msra.mxu0 0.0
    %2748 = vmatprep.subr.mxu0 0.0
    %2749 = vmatpush1.xpose.msra.mxu0 0.0
    %2750 = vmatprep.subr.mxu0 0.0
    %2751 = vmatpush1.xpose.msra.mxu0 0.0
    %2752 = vmatprep.subr.mxu0 0.0
    %2753 = vmatpush1.xpose.msra.mxu0 0.0
    %2754 = vmatprep.subr.mxu0 0.0
    %2755 = vmatpush1.xpose.msra.mxu0 0.0
    %2756 = vmatprep.subr.mxu0 0.0
    %2757 = vmatpush1.xpose.msra.mxu0 0.0
    %2758 = vmatprep.subr.mxu0 0.0
    %2759 = vmatpush1.xpose.msra.mxu0 0.0
    %2760 = vmatprep.subr.mxu0 0.0
    %2761 = vmatpush1.xpose.msra.mxu0 0.0
    %2762 = vmatprep.subr.mxu0 0.0
    %2763 = vmatpush1.xpose.msra.mxu0 0.0
    %2764 = vmatprep.subr.mxu0 0.0
    %2765 = vmatpush1.xpose.msra.mxu0 0.0
    %2766 = vmatprep.subr.mxu0 0.0
    %2767 = vmatpush1.xpose.msra.mxu0 0.0
    %2768 = vmatprep.subr.mxu0 0.0
    %2769 = vmatpush1.xpose.msra.mxu0 0.0
    %2770 = vmatprep.subr.mxu0 0.0
    %2771 = vmatpush1.xpose.msra.mxu0 0.0
    %2772 = vmatprep.subr.mxu0 0.0
    %2773 = vmatpush1.xpose.msra.mxu0 0.0
    %2774 = vmatprep.subr.mxu0 0.0
    %2775 = vmatpush1.xpose.msra.mxu0 0.0
    %2776 = vmatprep.subr.mxu0 0.0
    %2777 = vmatpush1.xpose.msra.mxu0 0.0
    %2778 = vmatprep.subr.mxu0 0.0
    %2779 = vmatpush1.xpose.msra.mxu0 0.0
    %2780 = vmatprep.subr.mxu0 0.0
    %2781 = vmatpush1.xpose.msra.mxu0 0.0
    %2782 = vmatprep.subr.mxu0 0.0
    %2783 = vmatpush1.xpose.msra.mxu0 0.0
    %2784 = vmatprep.subr.mxu0 0.0
    %2785 = vmatpush1.xpose.msra.mxu0 0.0
    %2786 = vmatprep.subr.mxu0 0.0
    %2787 = vmatpush1.xpose.msra.mxu0 0.0
    %2788 = vmatprep.subr.mxu0 0.0
    %2789 = vmatpush1.xpose.msra.mxu0 0.0
    %2790 = vmatprep.subr.mxu0 0.0
    %2791 = vmatpush1.xpose.msra.mxu0 0.0
    %2792 = vmatprep.mubr.f32.mxu0 0.0
    %2793 = vmatmul.mubr.f32.gmra.mrb[0].mxu0 %v2724
    %v2794 = vpop.f32.mrb[0].mxu0
    %v2795 = vadd.f32 %v242, %v2794
    %v2796 = vpop.f32.mrb[0].mxu0
    %2797 = vdwg.mxu0
    %2798 = vrot.lane.b32.xlu0 %v2063, 96
    %v2799 = vpop.permute.xlu0 %2798
    %2800 = vrot.lane.b32.xlu0 %v2058, 32
    %v2801 = vpop.permute.xlu0 %2800
    %v2802 = vsel %vm252, %v2799, 0
    %v2804 = vsel %vm252, %v2801, 0
    %2806 = vmatprep.subr.mxu0 0.0
    %2807 = vmatpush1.xpose.msra.mxu0 %v2804
    %2808 = vmatprep.subr.mxu0 0.0
    %2809 = vmatpush1.xpose.msra.mxu0 0.0
    %2810 = vmatprep.subr.mxu0 0.0
    %2811 = vmatpush1.xpose.msra.mxu0 0.0
    %2812 = vmatprep.subr.mxu0 0.0
    %2813 = vmatpush1.xpose.msra.mxu0 0.0
    %2814 = vmatprep.subr.mxu0 0.0
    %2815 = vmatpush1.xpose.msra.mxu0 0.0
    %2816 = vmatprep.subr.mxu0 0.0
    %2817 = vmatpush1.xpose.msra.mxu0 0.0
    %2818 = vmatprep.subr.mxu0 0.0
    %2819 = vmatpush1.xpose.msra.mxu0 0.0
    %2820 = vmatprep.subr.mxu0 0.0
    %2821 = vmatpush1.xpose.msra.mxu0 0.0
    %2822 = vmatprep.subr.mxu0 0.0
    %2823 = vmatpush1.xpose.msra.mxu0 0.0
    %2824 = vmatprep.subr.mxu0 0.0
    %2825 = vmatpush1.xpose.msra.mxu0 0.0
    %2826 = vmatprep.subr.mxu0 0.0
    %2827 = vmatpush1.xpose.msra.mxu0 0.0
    %2828 = vmatprep.subr.mxu0 0.0
    %2829 = vmatpush1.xpose.msra.mxu0 0.0
    %2830 = vmatprep.subr.mxu0 0.0
    %2831 = vmatpush1.xpose.msra.mxu0 0.0
    %2832 = vmatprep.subr.mxu0 0.0
    %2833 = vmatpush1.xpose.msra.mxu0 0.0
    %2834 = vmatprep.subr.mxu0 0.0
    %2835 = vmatpush1.xpose.msra.mxu0 0.0
    %2836 = vmatprep.subr.mxu0 0.0
    %2837 = vmatpush1.xpose.msra.mxu0 0.0
    %2838 = vmatprep.subr.mxu0 0.0
    %2839 = vmatpush1.xpose.msra.mxu0 0.0
    %2840 = vmatprep.subr.mxu0 0.0
    %2841 = vmatpush1.xpose.msra.mxu0 0.0
    %2842 = vmatprep.subr.mxu0 0.0
    %2843 = vmatpush1.xpose.msra.mxu0 0.0
    %2844 = vmatprep.subr.mxu0 0.0
    %2845 = vmatpush1.xpose.msra.mxu0 0.0
    %2846 = vmatprep.subr.mxu0 0.0
    %2847 = vmatpush1.xpose.msra.mxu0 0.0
    %2848 = vmatprep.subr.mxu0 0.0
    %2849 = vmatpush1.xpose.msra.mxu0 0.0
    %2850 = vmatprep.subr.mxu0 0.0
    %2851 = vmatpush1.xpose.msra.mxu0 0.0
    %2852 = vmatprep.subr.mxu0 0.0
    %2853 = vmatpush1.xpose.msra.mxu0 0.0
    %2854 = vmatprep.subr.mxu0 0.0
    %2855 = vmatpush1.xpose.msra.mxu0 0.0
    %2856 = vmatprep.subr.mxu0 0.0
    %2857 = vmatpush1.xpose.msra.mxu0 0.0
    %2858 = vmatprep.subr.mxu0 0.0
    %2859 = vmatpush1.xpose.msra.mxu0 0.0
    %2860 = vmatprep.subr.mxu0 0.0
    %2861 = vmatpush1.xpose.msra.mxu0 0.0
    %2862 = vmatprep.subr.mxu0 0.0
    %2863 = vmatpush1.xpose.msra.mxu0 0.0
    %2864 = vmatprep.subr.mxu0 0.0
    %2865 = vmatpush1.xpose.msra.mxu0 0.0
    %2866 = vmatprep.subr.mxu0 0.0
    %2867 = vmatpush1.xpose.msra.mxu0 0.0
    %2868 = vmatprep.subr.mxu0 0.0
    %2869 = vmatpush1.xpose.msra.mxu0 0.0
    %2870 = vmatprep.mubr.f32.mxu0 0.0
    %2871 = vmatmul.mubr.f32.gmra.mrb[0].mxu0 %v2802
    %v2872 = vpop.f32.mrb[0].mxu0
    %v2873 = vadd.f32 %v246, %v2872
    %v2874 = vpop.f32.mrb[0].mxu0
    %2875 = vdwg.mxu0
    %v2876 = vsel %vm406, %v2795, -inf
    %2877 = vmax.xlane.f32.xlu0 %v2876
    %v2878 = vpop.xlane.xlu0 %2877
    %v2879 = vsel %vm406, %v2873, -inf
    %2880 = vmax.xlane.f32.xlu0 %v2879
    %v2881 = vpop.xlane.xlu0 %2880
    %v2882 = vsub.f32 %v2795, %v2878
    %v2883 = vsub.f32 %v2873, %v2881
    %v2884 = vmul.f32 %v2882, 1.442695
    %v2885 = vpow.pop %v2884
    %v2886 = vmul.f32 %v2883, 1.442695
    %v2887 = vpow.pop %v2886
    %v2888 = vsel %vm406, %v2885, 0.0
    %2889 = vadd.xlane.f32.xlu0 %v2888
    %v2890 = vpop.xlane.xlu0 %2889
    %v2891 = vsel %vm406, %v2887, 0.0
    %2892 = vadd.xlane.f32.xlu0 %v2891
    %v2893 = vpop.xlane.xlu0 %2892
    %v2894 = vrcp.pop %v2890
    %v2895 = vrcp.pop %v2893
    %v2896 = vmul.f32 %v2885, %v2894
    %v2897 = vmul.f32 %v2887, %v2895
    %2898 = vrot.lane.b32.xlu0 %v2054, 96
    %v2899 = vpop.permute.xlu0 %2898
    %v2902 = vsel %vm406, %v2896, 0
    %2904 = vmatprep.subr.mxu0 0.0
    %2905 = vmatpush1.msra.mxu0 %v2899
    %2906 = vmatprep.subr.mxu0 0.0
    %2907 = vmatpush1.msra.mxu0 0.0
    %2908 = vmatprep.subr.mxu0 0.0
    %2909 = vmatpush1.msra.mxu0 0.0
    %2910 = vmatprep.subr.mxu0 0.0
    %2911 = vmatpush1.msra.mxu0 0.0
    %2912 = vmatprep.subr.mxu0 0.0
    %2913 = vmatpush1.msra.mxu0 0.0
    %2914 = vmatprep.subr.mxu0 0.0
    %2915 = vmatpush1.msra.mxu0 0.0
    %2916 = vmatprep.subr.mxu0 0.0
    %2917 = vmatpush1.msra.mxu0 0.0
    %2918 = vmatprep.subr.mxu0 0.0
    %2919 = vmatpush1.msra.mxu0 0.0
    %2920 = vmatprep.subr.mxu0 0.0
    %2921 = vmatpush1.msra.mxu0 0.0
    %2922 = vmatprep.subr.mxu0 0.0
    %2923 = vmatpush1.msra.mxu0 0.0
    %2924 = vmatprep.subr.mxu0 0.0
    %2925 = vmatpush1.msra.mxu0 0.0
    %2926 = vmatprep.subr.mxu0 0.0
    %2927 = vmatpush1.msra.mxu0 0.0
    %2928 = vmatprep.subr.mxu0 0.0
    %2929 = vmatpush1.msra.mxu0 0.0
    %2930 = vmatprep.subr.mxu0 0.0
    %2931 = vmatpush1.msra.mxu0 0.0
    %2932 = vmatprep.subr.mxu0 0.0
    %2933 = vmatpush1.msra.mxu0 0.0
    %2934 = vmatprep.subr.mxu0 0.0
    %2935 = vmatpush1.msra.mxu0 0.0
    %2936 = vmatprep.subr.mxu0 0.0
    %2937 = vmatpush1.msra.mxu0 0.0
    %2938 = vmatprep.subr.mxu0 0.0
    %2939 = vmatpush1.msra.mxu0 0.0
    %2940 = vmatprep.subr.mxu0 0.0
    %2941 = vmatpush1.msra.mxu0 0.0
    %2942 = vmatprep.subr.mxu0 0.0
    %2943 = vmatpush1.msra.mxu0 0.0
    %2944 = vmatprep.subr.mxu0 0.0
    %2945 = vmatpush1.msra.mxu0 0.0
    %2946 = vmatprep.subr.mxu0 0.0
    %2947 = vmatpush1.msra.mxu0 0.0
    %2948 = vmatprep.subr.mxu0 0.0
    %2949 = vmatpush1.msra.mxu0 0.0
    %2950 = vmatprep.subr.mxu0 0.0
    %2951 = vmatpush1.msra.mxu0 0.0
    %2952 = vmatprep.subr.mxu0 0.0
    %2953 = vmatpush1.msra.mxu0 0.0
    %2954 = vmatprep.subr.mxu0 0.0
    %2955 = vmatpush1.msra.mxu0 0.0
    %2956 = vmatprep.subr.mxu0 0.0
    %2957 = vmatpush1.msra.mxu0 0.0
    %2958 = vmatprep.subr.mxu0 0.0
    %2959 = vmatpush1.msra.mxu0 0.0
    %2960 = vmatprep.subr.mxu0 0.0
    %2961 = vmatpush1.msra.mxu0 0.0
    %2962 = vmatprep.subr.mxu0 0.0
    %2963 = vmatpush1.msra.mxu0 0.0
    %2964 = vmatprep.subr.mxu0 0.0
    %2965 = vmatpush1.msra.mxu0 0.0
    %2966 = vmatprep.subr.mxu0 0.0
    %2967 = vmatpush1.msra.mxu0 0.0
    %2968 = vmatprep.mubr.f32.mxu0 0.0
    %2969 = vmatmul.mubr.f32.gmra.mrb[0].mxu0 %v2902
    %v2970 = vpop.f32.mrb[0].mxu0
    %v2971 = vadd.f32 0.0, %v2970
    %v2972 = vpop.f32.mrb[0].mxu0
    %2973 = vdwg.mxu0
    %2974 = vrot.lane.b32.xlu0 %v2060, 96
    %v2975 = vpop.permute.xlu0 %2974
    %v2978 = vsel %vm406, %v2897, 0
    %2980 = vmatprep.subr.mxu0 0.0
    %2981 = vmatpush1.msra.mxu0 %v2975
    %2982 = vmatprep.subr.mxu0 0.0
    %2983 = vmatpush1.msra.mxu0 0.0
    %2984 = vmatprep.subr.mxu0 0.0
    %2985 = vmatpush1.msra.mxu0 0.0
    %2986 = vmatprep.subr.mxu0 0.0
    %2987 = vmatpush1.msra.mxu0 0.0
    %2988 = vmatprep.subr.mxu0 0.0
    %2989 = vmatpush1.msra.mxu0 0.0
    %2990 = vmatprep.subr.mxu0 0.0
    %2991 = vmatpush1.msra.mxu0 0.0
    %2992 = vmatprep.subr.mxu0 0.0
    %2993 = vmatpush1.msra.mxu0 0.0
    %2994 = vmatprep.subr.mxu0 0.0
    %2995 = vmatpush1.msra.mxu0 0.0
    %2996 = vmatprep.subr.mxu0 0.0
    %2997 = vmatpush1.msra.mxu0 0.0
    %2998 = vmatprep.subr.mxu0 0.0
    %2999 = vmatpush1.msra.mxu0 0.0
    %3000 = vmatprep.subr.mxu0 0.0
    %3001 = vmatpush1.msra.mxu0 0.0
    %3002 = vmatprep.subr.mxu0 0.0
    %3003 = vmatpush1.msra.mxu0 0.0
    %3004 = vmatprep.subr.mxu0 0.0
    %3005 = vmatpush1.msra.mxu0 0.0
    %3006 = vmatprep.subr.mxu0 0.0
    %3007 = vmatpush1.msra.mxu0 0.0
    %3008 = vmatprep.subr.mxu0 0.0
    %3009 = vmatpush1.msra.mxu0 0.0
    %3010 = vmatprep.subr.mxu0 0.0
    %3011 = vmatpush1.msra.mxu0 0.0
    %3012 = vmatprep.subr.mxu0 0.0
    %3013 = vmatpush1.msra.mxu0 0.0
    %3014 = vmatprep.subr.mxu0 0.0
    %3015 = vmatpush1.msra.mxu0 0.0
    %3016 = vmatprep.subr.mxu0 0.0
    %3017 = vmatpush1.msra.mxu0 0.0
    %3018 = vmatprep.subr.mxu0 0.0
    %3019 = vmatpush1.msra.mxu0 0.0
    %3020 = vmatprep.subr.mxu0 0.0
    %3021 = vmatpush1.msra.mxu0 0.0
    %3022 = vmatprep.subr.mxu0 0.0
    %3023 = vmatpush1.msra.mxu0 0.0
    %3024 = vmatprep.subr.mxu0 0.0
    %3025 = vmatpush1.msra.mxu0 0.0
    %3026 = vmatprep.subr.mxu0 0.0
    %3027 = vmatpush1.msra.mxu0 0.0
    %3028 = vmatprep.subr.mxu0 0.0
    %3029 = vmatpush1.msra.mxu0 0.0
    %3030 = vmatprep.subr.mxu0 0.0
    %3031 = vmatpush1.msra.mxu0 0.0
    %3032 = vmatprep.subr.mxu0 0.0
    %3033 = vmatpush1.msra.mxu0 0.0
    %3034 = vmatprep.subr.mxu0 0.0
    %3035 = vmatpush1.msra.mxu0 0.0
    %3036 = vmatprep.subr.mxu0 0.0
    %3037 = vmatpush1.msra.mxu0 0.0
    %3038 = vmatprep.subr.mxu0 0.0
    %3039 = vmatpush1.msra.mxu0 0.0
    %3040 = vmatprep.subr.mxu0 0.0
    %3041 = vmatpush1.msra.mxu0 0.0
    %3042 = vmatprep.subr.mxu0 0.0
    %3043 = vmatpush1.msra.mxu0 0.0
    %3044 = vmatprep.mubr.f32.mxu0 0.0
    %3045 = vmatmul.mubr.f32.gmra.mrb[0].mxu0 %v2978
    %v3046 = vpop.f32.mrb[0].mxu0
    %v3047 = vadd.f32 0.0, %v3046
    %v3048 = vpop.f32.mrb[0].mxu0
    %3049 = vdwg.mxu0
    %3050 = vrot.lane.b32.xlu0 %v2062, 80
    %v3051 = vpop.permute.xlu0 %3050
    %3052 = vrot.lane.b32.xlu0 %v2052, 16
    %v3053 = vpop.permute.xlu0 %3052
    %v3054 = vsel %vm252, %v3051, 0
    %v3056 = vsel %vm252, %v3053, 0
    %3058 = vmatprep.subr.mxu0 0.0
    %3059 = vmatpush1.xpose.msra.mxu0 %v3056
    %3060 = vmatprep.subr.mxu0 0.0
    %3061 = vmatpush1.xpose.msra.mxu0 0.0
    %3062 = vmatprep.subr.mxu0 0.0
    %3063 = vmatpush1.xpose.msra.mxu0 0.0
    %3064 = vmatprep.subr.mxu0 0.0
    %3065 = vmatpush1.xpose.msra.mxu0 0.0
    %3066 = vmatprep.subr.mxu0 0.0
    %3067 = vmatpush1.xpose.msra.mxu0 0.0
    %3068 = vmatprep.subr.mxu0 0.0
    %3069 = vmatpush1.xpose.msra.mxu0 0.0
    %3070 = vmatprep.subr.mxu0 0.0
    %3071 = vmatpush1.xpose.msra.mxu0 0.0
    %3072 = vmatprep.subr.mxu0 0.0
    %3073 = vmatpush1.xpose.msra.mxu0 0.0
    %3074 = vmatprep.subr.mxu0 0.0
    %3075 = vmatpush1.xpose.msra.mxu0 0.0
    %3076 = vmatprep.subr.mxu0 0.0
    %3077 = vmatpush1.xpose.msra.mxu0 0.0
    %3078 = vmatprep.subr.mxu0 0.0
    %3079 = vmatpush1.xpose.msra.mxu0 0.0
    %3080 = vmatprep.subr.mxu0 0.0
    %3081 = vmatpush1.xpose.msra.mxu0 0.0
    %3082 = vmatprep.subr.mxu0 0.0
    %3083 = vmatpush1.xpose.msra.mxu0 0.0
    %3084 = vmatprep.subr.mxu0 0.0
    %3085 = vmatpush1.xpose.msra.mxu0 0.0
    %3086 = vmatprep.subr.mxu0 0.0
    %3087 = vmatpush1.xpose.msra.mxu0 0.0
    %3088 = vmatprep.subr.mxu0 0.0
    %3089 = vmatpush1.xpose.msra.mxu0 0.0
    %3090 = vmatprep.subr.mxu0 0.0
    %3091 = vmatpush1.xpose.msra.mxu0 0.0
    %3092 = vmatprep.subr.mxu0 0.0
    %3093 = vmatpush1.xpose.msra.mxu0 0.0
    %3094 = vmatprep.subr.mxu0 0.0
    %3095 = vmatpush1.xpose.msra.mxu0 0.0
    %3096 = vmatprep.subr.mxu0 0.0
    %3097 = vmatpush1.xpose.msra.mxu0 0.0
    %3098 = vmatprep.subr.mxu0 0.0
    %3099 = vmatpush1.xpose.msra.mxu0 0.0
    %3100 = vmatprep.subr.mxu0 0.0
    %3101 = vmatpush1.xpose.msra.mxu0 0.0
    %3102 = vmatprep.subr.mxu0 0.0
    %3103 = vmatpush1.xpose.msra.mxu0 0.0
    %3104 = vmatprep.subr.mxu0 0.0
    %3105 = vmatpush1.xpose.msra.mxu0 0.0
    %3106 = vmatprep.subr.mxu0 0.0
    %3107 = vmatpush1.xpose.msra.mxu0 0.0
    %3108 = vmatprep.subr.mxu0 0.0
    %3109 = vmatpush1.xpose.msra.mxu0 0.0
    %3110 = vmatprep.subr.mxu0 0.0
    %3111 = vmatpush1.xpose.msra.mxu0 0.0
    %3112 = vmatprep.subr.mxu0 0.0
    %3113 = vmatpush1.xpose.msra.mxu0 0.0
    %3114 = vmatprep.subr.mxu0 0.0
    %3115 = vmatpush1.xpose.msra.mxu0 0.0
    %3116 = vmatprep.subr.mxu0 0.0
    %3117 = vmatpush1.xpose.msra.mxu0 0.0
    %3118 = vmatprep.subr.mxu0 0.0
    %3119 = vmatpush1.xpose.msra.mxu0 0.0
    %3120 = vmatprep.subr.mxu0 0.0
    %3121 = vmatpush1.xpose.msra.mxu0 0.0
    %3122 = vmatprep.mubr.f32.mxu0 0.0
    %3123 = vmatmul.mubr.f32.gmra.mrb[0].mxu0 %v3054
    %v3124 = vpop.f32.mrb[0].mxu0
    %v3125 = vadd.f32 %v242, %v3124
    %v3126 = vpop.f32.mrb[0].mxu0
    %3127 = vdwg.mxu0
    %3128 = vrot.lane.b32.xlu0 %v2063, 80
    %v3129 = vpop.permute.xlu0 %3128
    %3130 = vrot.lane.b32.xlu0 %v2058, 16
    %v3131 = vpop.permute.xlu0 %3130
    %v3132 = vsel %vm252, %v3129, 0
    %v3134 = vsel %vm252, %v3131, 0
    %3136 = vmatprep.subr.mxu0 0.0
    %3137 = vmatpush1.xpose.msra.mxu0 %v3134
    %3138 = vmatprep.subr.mxu0 0.0
    %3139 = vmatpush1.xpose.msra.mxu0 0.0
    %3140 = vmatprep.subr.mxu0 0.0
    %3141 = vmatpush1.xpose.msra.mxu0 0.0
    %3142 = vmatprep.subr.mxu0 0.0
    %3143 = vmatpush1.xpose.msra.mxu0 0.0
    %3144 = vmatprep.subr.mxu0 0.0
    %3145 = vmatpush1.xpose.msra.mxu0 0.0
    %3146 = vmatprep.subr.mxu0 0.0
    %3147 = vmatpush1.xpose.msra.mxu0 0.0
    %3148 = vmatprep.subr.mxu0 0.0
    %3149 = vmatpush1.xpose.msra.mxu0 0.0
    %3150 = vmatprep.subr.mxu0 0.0
    %3151 = vmatpush1.xpose.msra.mxu0 0.0
    %3152 = vmatprep.subr.mxu0 0.0
    %3153 = vmatpush1.xpose.msra.mxu0 0.0
    %3154 = vmatprep.subr.mxu0 0.0
    %3155 = vmatpush1.xpose.msra.mxu0 0.0
    %3156 = vmatprep.subr.mxu0 0.0
    %3157 = vmatpush1.xpose.msra.mxu0 0.0
    %3158 = vmatprep.subr.mxu0 0.0
    %3159 = vmatpush1.xpose.msra.mxu0 0.0
    %3160 = vmatprep.subr.mxu0 0.0
    %3161 = vmatpush1.xpose.msra.mxu0 0.0
    %3162 = vmatprep.subr.mxu0 0.0
    %3163 = vmatpush1.xpose.msra.mxu0 0.0
    %3164 = vmatprep.subr.mxu0 0.0
    %3165 = vmatpush1.xpose.msra.mxu0 0.0
    %3166 = vmatprep.subr.mxu0 0.0
    %3167 = vmatpush1.xpose.msra.mxu0 0.0
    %3168 = vmatprep.subr.mxu0 0.0
    %3169 = vmatpush1.xpose.msra.mxu0 0.0
    %3170 = vmatprep.subr.mxu0 0.0
    %3171 = vmatpush1.xpose.msra.mxu0 0.0
    %3172 = vmatprep.subr.mxu0 0.0
    %3173 = vmatpush1.xpose.msra.mxu0 0.0
    %3174 = vmatprep.subr.mxu0 0.0
    %3175 = vmatpush1.xpose.msra.mxu0 0.0
    %3176 = vmatprep.subr.mxu0 0.0
    %3177 = vmatpush1.xpose.msra.mxu0 0.0
    %3178 = vmatprep.subr.mxu0 0.0
    %3179 = vmatpush1.xpose.msra.mxu0 0.0
    %3180 = vmatprep.subr.mxu0 0.0
    %3181 = vmatpush1.xpose.msra.mxu0 0.0
    %3182 = vmatprep.subr.mxu0 0.0
    %3183 = vmatpush1.xpose.msra.mxu0 0.0
    %3184 = vmatprep.subr.mxu0 0.0
    %3185 = vmatpush1.xpose.msra.mxu0 0.0
    %3186 = vmatprep.subr.mxu0 0.0
    %3187 = vmatpush1.xpose.msra.mxu0 0.0
    %3188 = vmatprep.subr.mxu0 0.0
    %3189 = vmatpush1.xpose.msra.mxu0 0.0
    %3190 = vmatprep.subr.mxu0 0.0
    %3191 = vmatpush1.xpose.msra.mxu0 0.0
    %3192 = vmatprep.subr.mxu0 0.0
    %3193 = vmatpush1.xpose.msra.mxu0 0.0
    %3194 = vmatprep.subr.mxu0 0.0
    %3195 = vmatpush1.xpose.msra.mxu0 0.0
    %3196 = vmatprep.subr.mxu0 0.0
    %3197 = vmatpush1.xpose.msra.mxu0 0.0
    %3198 = vmatprep.subr.mxu0 0.0
    %3199 = vmatpush1.xpose.msra.mxu0 0.0
    %3200 = vmatprep.mubr.f32.mxu0 0.0
    %3201 = vmatmul.mubr.f32.gmra.mrb[0].mxu0 %v3132
    %v3202 = vpop.f32.mrb[0].mxu0
    %v3203 = vadd.f32 %v246, %v3202
    %v3204 = vpop.f32.mrb[0].mxu0
    %3205 = vdwg.mxu0
    %v3206 = vsel %vm406, %v3125, -inf
    %3207 = vmax.xlane.f32.xlu0 %v3206
    %v3208 = vpop.xlane.xlu0 %3207
    %v3209 = vsel %vm406, %v3203, -inf
    %3210 = vmax.xlane.f32.xlu0 %v3209
    %v3211 = vpop.xlane.xlu0 %3210
    %v3212 = vsub.f32 %v3125, %v3208
    %v3213 = vsub.f32 %v3203, %v3211
    %v3214 = vmul.f32 %v3212, 1.442695
    %v3215 = vpow.pop %v3214
    %v3216 = vmul.f32 %v3213, 1.442695
    %v3217 = vpow.pop %v3216
    %v3218 = vsel %vm406, %v3215, 0.0
    %3219 = vadd.xlane.f32.xlu0 %v3218
    %v3220 = vpop.xlane.xlu0 %3219
    %v3221 = vsel %vm406, %v3217, 0.0
    %3222 = vadd.xlane.f32.xlu0 %v3221
    %v3223 = vpop.xlane.xlu0 %3222
    %v3224 = vrcp.pop %v3220
    %v3225 = vrcp.pop %v3223
    %v3226 = vmul.f32 %v3215, %v3224
    %v3227 = vmul.f32 %v3217, %v3225
    %3228 = vrot.lane.b32.xlu0 %v2054, 80
    %v3229 = vpop.permute.xlu0 %3228
    %v3232 = vsel %vm406, %v3226, 0
    %3234 = vmatprep.subr.mxu0 0.0
    %3235 = vmatpush1.msra.mxu0 %v3229
    %3236 = vmatprep.subr.mxu0 0.0
    %3237 = vmatpush1.msra.mxu0 0.0
    %3238 = vmatprep.subr.mxu0 0.0
    %3239 = vmatpush1.msra.mxu0 0.0
    %3240 = vmatprep.subr.mxu0 0.0
    %3241 = vmatpush1.msra.mxu0 0.0
    %3242 = vmatprep.subr.mxu0 0.0
    %3243 = vmatpush1.msra.mxu0 0.0
    %3244 = vmatprep.subr.mxu0 0.0
    %3245 = vmatpush1.msra.mxu0 0.0
    %3246 = vmatprep.subr.mxu0 0.0
    %3247 = vmatpush1.msra.mxu0 0.0
    %3248 = vmatprep.subr.mxu0 0.0
    %3249 = vmatpush1.msra.mxu0 0.0
    %3250 = vmatprep.subr.mxu0 0.0
    %3251 = vmatpush1.msra.mxu0 0.0
    %3252 = vmatprep.subr.mxu0 0.0
    %3253 = vmatpush1.msra.mxu0 0.0
    %3254 = vmatprep.subr.mxu0 0.0
    %3255 = vmatpush1.msra.mxu0 0.0
    %3256 = vmatprep.subr.mxu0 0.0
    %3257 = vmatpush1.msra.mxu0 0.0
    %3258 = vmatprep.subr.mxu0 0.0
    %3259 = vmatpush1.msra.mxu0 0.0
    %3260 = vmatprep.subr.mxu0 0.0
    %3261 = vmatpush1.msra.mxu0 0.0
    %3262 = vmatprep.subr.mxu0 0.0
    %3263 = vmatpush1.msra.mxu0 0.0
    %3264 = vmatprep.subr.mxu0 0.0
    %3265 = vmatpush1.msra.mxu0 0.0
    %3266 = vmatprep.subr.mxu0 0.0
    %3267 = vmatpush1.msra.mxu0 0.0
    %3268 = vmatprep.subr.mxu0 0.0
    %3269 = vmatpush1.msra.mxu0 0.0
    %3270 = vmatprep.subr.mxu0 0.0
    %3271 = vmatpush1.msra.mxu0 0.0
    %3272 = vmatprep.subr.mxu0 0.0
    %3273 = vmatpush1.msra.mxu0 0.0
    %3274 = vmatprep.subr.mxu0 0.0
    %3275 = vmatpush1.msra.mxu0 0.0
    %3276 = vmatprep.subr.mxu0 0.0
    %3277 = vmatpush1.msra.mxu0 0.0
    %3278 = vmatprep.subr.mxu0 0.0
    %3279 = vmatpush1.msra.mxu0 0.0
    %3280 = vmatprep.subr.mxu0 0.0
    %3281 = vmatpush1.msra.mxu0 0.0
    %3282 = vmatprep.subr.mxu0 0.0
    %3283 = vmatpush1.msra.mxu0 0.0
    %3284 = vmatprep.subr.mxu0 0.0
    %3285 = vmatpush1.msra.mxu0 0.0
    %3286 = vmatprep.subr.mxu0 0.0
    %3287 = vmatpush1.msra.mxu0 0.0
    %3288 = vmatprep.subr.mxu0 0.0
    %3289 = vmatpush1.msra.mxu0 0.0
    %3290 = vmatprep.subr.mxu0 0.0
    %3291 = vmatpush1.msra.mxu0 0.0
    %3292 = vmatprep.subr.mxu0 0.0
    %3293 = vmatpush1.msra.mxu0 0.0
    %3294 = vmatprep.subr.mxu0 0.0
    %3295 = vmatpush1.msra.mxu0 0.0
    %3296 = vmatprep.subr.mxu0 0.0
    %3297 = vmatpush1.msra.mxu0 0.0
    %3298 = vmatprep.mubr.f32.mxu0 0.0
    %3299 = vmatmul.mubr.f32.gmra.mrb[0].mxu0 %v3232
    %v3300 = vpop.f32.mrb[0].mxu0
    %v3301 = vadd.f32 0.0, %v3300
    %v3302 = vpop.f32.mrb[0].mxu0
    %3303 = vdwg.mxu0
    %3304 = vrot.lane.b32.xlu0 %v2060, 80
    %v3305 = vpop.permute.xlu0 %3304
    %v3308 = vsel %vm406, %v3227, 0
    %3310 = vmatprep.subr.mxu0 0.0
    %3311 = vmatpush1.msra.mxu0 %v3305
    %3312 = vmatprep.subr.mxu0 0.0
    %3313 = vmatpush1.msra.mxu0 0.0
    %3314 = vmatprep.subr.mxu0 0.0
    %3315 = vmatpush1.msra.mxu0 0.0
    %3316 = vmatprep.subr.mxu0 0.0
    %3317 = vmatpush1.msra.mxu0 0.0
    %3318 = vmatprep.subr.mxu0 0.0
    %3319 = vmatpush1.msra.mxu0 0.0
    %3320 = vmatprep.subr.mxu0 0.0
    %3321 = vmatpush1.msra.mxu0 0.0
    %3322 = vmatprep.subr.mxu0 0.0
    %3323 = vmatpush1.msra.mxu0 0.0
    %3324 = vmatprep.subr.mxu0 0.0
    %3325 = vmatpush1.msra.mxu0 0.0
    %3326 = vmatprep.subr.mxu0 0.0
    %3327 = vmatpush1.msra.mxu0 0.0
    %3328 = vmatprep.subr.mxu0 0.0
    %3329 = vmatpush1.msra.mxu0 0.0
    %3330 = vmatprep.subr.mxu0 0.0
    %3331 = vmatpush1.msra.mxu0 0.0
    %3332 = vmatprep.subr.mxu0 0.0
    %3333 = vmatpush1.msra.mxu0 0.0
    %3334 = vmatprep.subr.mxu0 0.0
    %3335 = vmatpush1.msra.mxu0 0.0
    %3336 = vmatprep.subr.mxu0 0.0
    %3337 = vmatpush1.msra.mxu0 0.0
    %3338 = vmatprep.subr.mxu0 0.0
    %3339 = vmatpush1.msra.mxu0 0.0
    %3340 = vmatprep.subr.mxu0 0.0
    %3341 = vmatpush1.msra.mxu0 0.0
    %3342 = vmatprep.subr.mxu0 0.0
    %3343 = vmatpush1.msra.mxu0 0.0
    %3344 = vmatprep.subr.mxu0 0.0
    %3345 = vmatpush1.msra.mxu0 0.0
    %3346 = vmatprep.subr.mxu0 0.0
    %3347 = vmatpush1.msra.mxu0 0.0
    %3348 = vmatprep.subr.mxu0 0.0
    %3349 = vmatpush1.msra.mxu0 0.0
    %3350 = vmatprep.subr.mxu0 0.0
    %3351 = vmatpush1.msra.mxu0 0.0
    %3352 = vmatprep.subr.mxu0 0.0
    %3353 = vmatpush1.msra.mxu0 0.0
    %3354 = vmatprep.subr.mxu0 0.0
    %3355 = vmatpush1.msra.mxu0 0.0
    %3356 = vmatprep.subr.mxu0 0.0
    %3357 = vmatpush1.msra.mxu0 0.0
    %3358 = vmatprep.subr.mxu0 0.0
    %3359 = vmatpush1.msra.mxu0 0.0
    %3360 = vmatprep.subr.mxu0 0.0
    %3361 = vmatpush1.msra.mxu0 0.0
    %3362 = vmatprep.subr.mxu0 0.0
    %3363 = vmatpush1.msra.mxu0 0.0
    %3364 = vmatprep.subr.mxu0 0.0
    %3365 = vmatpush1.msra.mxu0 0.0
    %3366 = vmatprep.subr.mxu0 0.0
    %3367 = vmatpush1.msra.mxu0 0.0
    %3368 = vmatprep.subr.mxu0 0.0
    %3369 = vmatpush1.msra.mxu0 0.0
    %3370 = vmatprep.subr.mxu0 0.0
    %3371 = vmatpush1.msra.mxu0 0.0
    %3372 = vmatprep.subr.mxu0 0.0
    %3373 = vmatpush1.msra.mxu0 0.0
    %3374 = vmatprep.mubr.f32.mxu0 0.0
    %3375 = vmatmul.mubr.f32.gmra.mrb[0].mxu0 %v3308
    %v3376 = vpop.f32.mrb[0].mxu0
    %v3377 = vadd.f32 0.0, %v3376
    %v3378 = vpop.f32.mrb[0].mxu0
    %3379 = vdwg.mxu0
    %3382 = vrot.lane.b32.xlu0 %v2640, 16
    %v3383 = vpop.permute.xlu0 %3382
    %3384 = vrot.lane.b32.xlu0 %v2717, 16
    %v3385 = vpop.permute.xlu0 %3384
    %3390 = vrot.lane.b32.xlu0 %v2971, 32
    %v3391 = vpop.permute.xlu0 %3390
    %3392 = vrot.lane.b32.xlu0 %v3047, 32
    %v3393 = vpop.permute.xlu0 %3392
    %3398 = vrot.lane.b32.xlu0 %v3301, 48
    %v3399 = vpop.permute.xlu0 %3398
    %3400 = vrot.lane.b32.xlu0 %v3377, 48
    %v3401 = vpop.permute.xlu0 %3400
    %v3404 = vsel %vm252, %v2312, %v3383
    %v3405 = vsel %vm252, %v2385, %v3385
    %v3406 = vsel %vm1593, %v3404, %v3391
    %v3407 = vsel %vm1593, %v3405, %v3393
    %v3408 = vsel %vm1596, %v3406, %v3399
    %v3409 = vsel %vm1596, %v3407, %v3401
    %v3411 = vsel %vm45, %v3408, 0
    %v3414 = vsel %vm45, %v3409, 0
    %3416 = vmatprep.subr.mxu0 0.0
    %3417 = vmatpush1.msra.mxu0 %v1927
    %3418 = vmatprep.subr.mxu0 0.0
    %3419 = vmatpush1.msra.mxu0 %v1928
    %3420 = vmatprep.subr.mxu0 0.0
    %3421 = vmatpush1.msra.mxu0 %v1929
    %3422 = vmatprep.subr.mxu0 0.0
    %3423 = vmatpush1.msra.mxu0 %v1930
    %3424 = vmatprep.subr.mxu0 0.0
    %3425 = vmatpush1.msra.mxu0 %v1931
    %3426 = vmatprep.subr.mxu0 0.0
    %3427 = vmatpush1.msra.mxu0 %v1932
    %3428 = vmatprep.subr.mxu0 0.0
    %3429 = vmatpush1.msra.mxu0 %v1933
    %3430 = vmatprep.subr.mxu0 0.0
    %3431 = vmatpush1.msra.mxu0 %v1934
    %3432 = vmatprep.subr.mxu0 0.0
    %3433 = vmatpush1.msra.mxu0 0.0
    %3434 = vmatprep.subr.mxu0 0.0
    %3435 = vmatpush1.msra.mxu0 0.0
    %3436 = vmatprep.subr.mxu0 0.0
    %3437 = vmatpush1.msra.mxu0 0.0
    %3438 = vmatprep.subr.mxu0 0.0
    %3439 = vmatpush1.msra.mxu0 0.0
    %3440 = vmatprep.subr.mxu0 0.0
    %3441 = vmatpush1.msra.mxu0 0.0
    %3442 = vmatprep.subr.mxu0 0.0
    %3443 = vmatpush1.msra.mxu0 0.0
    %3444 = vmatprep.subr.mxu0 0.0
    %3445 = vmatpush1.msra.mxu0 0.0
    %3446 = vmatprep.subr.mxu0 0.0
    %3447 = vmatpush1.msra.mxu0 0.0
    %3448 = vmatprep.subr.mxu0 0.0
    %3449 = vmatpush1.msra.mxu0 0.0
    %3450 = vmatprep.subr.mxu0 0.0
    %3451 = vmatpush1.msra.mxu0 0.0
    %3452 = vmatprep.subr.mxu0 0.0
    %3453 = vmatpush1.msra.mxu0 0.0
    %3454 = vmatprep.subr.mxu0 0.0
    %3455 = vmatpush1.msra.mxu0 0.0
    %3456 = vmatprep.subr.mxu0 0.0
    %3457 = vmatpush1.msra.mxu0 0.0
    %3458 = vmatprep.subr.mxu0 0.0
    %3459 = vmatpush1.msra.mxu0 0.0
    %3460 = vmatprep.subr.mxu0 0.0
    %3461 = vmatpush1.msra.mxu0 0.0
    %3462 = vmatprep.subr.mxu0 0.0
    %3463 = vmatpush1.msra.mxu0 0.0
    %3464 = vmatprep.subr.mxu0 0.0
    %3465 = vmatpush1.msra.mxu0 0.0
    %3466 = vmatprep.subr.mxu0 0.0
    %3467 = vmatpush1.msra.mxu0 0.0
    %3468 = vmatprep.subr.mxu0 0.0
    %3469 = vmatpush1.msra.mxu0 0.0
    %3470 = vmatprep.subr.mxu0 0.0
    %3471 = vmatpush1.msra.mxu0 0.0
    %3472 = vmatprep.subr.mxu0 0.0
    %3473 = vmatpush1.msra.mxu0 0.0
    %3474 = vmatprep.subr.mxu0 0.0
    %3475 = vmatpush1.msra.mxu0 0.0
    %3476 = vmatprep.subr.mxu0 0.0
    %3477 = vmatpush1.msra.mxu0 0.0
    %3478 = vmatprep.subr.mxu0 0.0
    %3479 = vmatpush1.msra.mxu0 0.0
    %3480 = vmatprep.mubr.f32.mxu0 0.0
    %3481 = vmatmul.mubr.f32.gmra.mrb[0].mxu0 %v3411
    %v3482 = vpop.f32.mrb[0].mxu0
    %v3483 = vadd.f32 %v1961, %v3482
    %v3484 = vpop.f32.mrb[0].mxu0
    %3485 = vmatprep.mubr.f32.mxu0 0.0
    %3486 = vmatmul.mubr.f32.gmra.mrb[0].mxu0 %v3414
    %v3487 = vpop.f32.mrb[0].mxu0
    %v3488 = vadd.f32 %v1961, %v3487
    %v3489 = vpop.f32.mrb[0].mxu0
    %3490 = vdwg.mxu0
    %v3491 = vadd.f32 %v3483, %v1908
    %v3492 = vadd.f32 %v3488, %v1909
    %v3493 = vsel %vm45, %v3491, 0.0
    %3494 = vadd.xlane.f32.xlu0 %v3493
    %v3495 = vpop.xlane.xlu0 %3494
    %v3496 = vsel %vm45, %v3492, 0.0
    %3497 = vadd.xlane.f32.xlu0 %v3496
    %v3498 = vpop.xlane.xlu0 %3497
    %v3499 = vmul.f32 %v3495, %v52
    %v3500 = vmul.f32 %v3498, %v52
    %v3501 = vsub.f32 %v3491, %v3499
    %v3502 = vsub.f32 %v3492, %v3500
    %v3503 = vmul.f32 %v3501, %v3501
    %v3504 = vmul.f32 %v3502, %v3502
    %v3505 = vsel %vm45, %v3503, 0.0
    %3506 = vadd.xlane.f32.xlu0 %v3505
    %v3507 = vpop.xlane.xlu0 %3506
    %v3508 = vsel %vm45, %v3504, 0.0
    %3509 = vadd.xlane.f32.xlu0 %v3508
    %v3510 = vpop.xlane.xlu0 %3509
    %v3511 = vmul.f32 %v3507, %v52
    %v3512 = vmul.f32 %v3510, %v52
    %v3513 = vadd.f32 %v3511, 1e-12
    %v3514 = vadd.f32 %v3512, 1e-12
    %v3515 = vrsqrt.pop %v3513
    %v3516 = vrsqrt.pop %v3514
    %v3517 = vmul.f32 %v3501, %v3515
    %v3518 = vmul.f32 %v3502, %v3516
    %v3519 = vmul.f32 %v3517, %v1964
    %v3520 = vmul.f32 %v3518, %v1964
    %v3521 = vadd.f32 %v3519, %v1965
    %v3522 = vadd.f32 %v3520, %v1965
    %v3524 = vsel %vm45, %v3521, 0
    %v3527 = vsel %vm45, %v3522, 0
    %3529 = vmatprep.subr.mxu0 0.0
    %3530 = vmatpush1.msra.mxu0 %v1935
    %3531 = vmatprep.subr.mxu0 0.0
    %3532 = vmatpush1.msra.mxu0 %v1936
    %3533 = vmatprep.subr.mxu0 0.0
    %3534 = vmatpush1.msra.mxu0 %v1937
    %3535 = vmatprep.subr.mxu0 0.0
    %3536 = vmatpush1.msra.mxu0 %v1938
    %3537 = vmatprep.subr.mxu0 0.0
    %3538 = vmatpush1.msra.mxu0 %v1939
    %3539 = vmatprep.subr.mxu0 0.0
    %3540 = vmatpush1.msra.mxu0 %v1940
    %3541 = vmatprep.subr.mxu0 0.0
    %3542 = vmatpush1.msra.mxu0 %v1941
    %3543 = vmatprep.subr.mxu0 0.0
    %3544 = vmatpush1.msra.mxu0 %v1942
    %3545 = vmatprep.subr.mxu0 0.0
    %3546 = vmatpush1.msra.mxu0 0.0
    %3547 = vmatprep.subr.mxu0 0.0
    %3548 = vmatpush1.msra.mxu0 0.0
    %3549 = vmatprep.subr.mxu0 0.0
    %3550 = vmatpush1.msra.mxu0 0.0
    %3551 = vmatprep.subr.mxu0 0.0
    %3552 = vmatpush1.msra.mxu0 0.0
    %3553 = vmatprep.subr.mxu0 0.0
    %3554 = vmatpush1.msra.mxu0 0.0
    %3555 = vmatprep.subr.mxu0 0.0
    %3556 = vmatpush1.msra.mxu0 0.0
    %3557 = vmatprep.subr.mxu0 0.0
    %3558 = vmatpush1.msra.mxu0 0.0
    %3559 = vmatprep.subr.mxu0 0.0
    %3560 = vmatpush1.msra.mxu0 0.0
    %3561 = vmatprep.subr.mxu0 0.0
    %3562 = vmatpush1.msra.mxu0 0.0
    %3563 = vmatprep.subr.mxu0 0.0
    %3564 = vmatpush1.msra.mxu0 0.0
    %3565 = vmatprep.subr.mxu0 0.0
    %3566 = vmatpush1.msra.mxu0 0.0
    %3567 = vmatprep.subr.mxu0 0.0
    %3568 = vmatpush1.msra.mxu0 0.0
    %3569 = vmatprep.subr.mxu0 0.0
    %3570 = vmatpush1.msra.mxu0 0.0
    %3571 = vmatprep.subr.mxu0 0.0
    %3572 = vmatpush1.msra.mxu0 0.0
    %3573 = vmatprep.subr.mxu0 0.0
    %3574 = vmatpush1.msra.mxu0 0.0
    %3575 = vmatprep.subr.mxu0 0.0
    %3576 = vmatpush1.msra.mxu0 0.0
    %3577 = vmatprep.subr.mxu0 0.0
    %3578 = vmatpush1.msra.mxu0 0.0
    %3579 = vmatprep.subr.mxu0 0.0
    %3580 = vmatpush1.msra.mxu0 0.0
    %3581 = vmatprep.subr.mxu0 0.0
    %3582 = vmatpush1.msra.mxu0 0.0
    %3583 = vmatprep.subr.mxu0 0.0
    %3584 = vmatpush1.msra.mxu0 0.0
    %3585 = vmatprep.subr.mxu0 0.0
    %3586 = vmatpush1.msra.mxu0 0.0
    %3587 = vmatprep.subr.mxu0 0.0
    %3588 = vmatpush1.msra.mxu0 0.0
    %3589 = vmatprep.subr.mxu0 0.0
    %3590 = vmatpush1.msra.mxu0 0.0
    %3591 = vmatprep.subr.mxu0 0.0
    %3592 = vmatpush1.msra.mxu0 0.0
    %3593 = vmatprep.mubr.f32.mxu0 0.0
    %3594 = vmatmul.mubr.f32.gmra.mrb[0].mxu0 %v3524
    %v3595 = vpop.f32.mrb[0].mxu0
    %v3596 = vadd.f32 %v1962, %v3595
    %v3597 = vpop.f32.mrb[0].mxu0
    %3598 = vmatprep.mubr.f32.mxu0 0.0
    %3599 = vmatmul.mubr.f32.gmra.mrb[0].mxu0 %v3527
    %v3600 = vpop.f32.mrb[0].mxu0
    %v3601 = vadd.f32 %v1962, %v3600
    %v3602 = vpop.f32.mrb[0].mxu0
    %3603 = vdwg.mxu0
    %v3604 = vmul.f32 %v3596, 0.5
    %v3605 = vmul.f32 %v3601, 0.5
    %v3606 = vmul.f32 %v3596, 0.70710677
    %v3607 = vmul.f32 %v3601, 0.70710677
    %v3608 = verf.f32.pop %v3606
    %v3609 = verf.f32.pop %v3607
    %v3610 = vadd.f32 %v3608, 1.0
    %v3611 = vadd.f32 %v3609, 1.0
    %v3612 = vmul.f32 %v3604, %v3610
    %v3613 = vmul.f32 %v3605, %v3611
    %3614 = vmatprep.subr.mxu0 0.0
    %3615 = vmatpush1.msra.mxu0 %v1943
    %3616 = vmatprep.subr.mxu0 0.0
    %3617 = vmatpush1.msra.mxu0 %v1944
    %3618 = vmatprep.subr.mxu0 0.0
    %3619 = vmatpush1.msra.mxu0 %v1945
    %3620 = vmatprep.subr.mxu0 0.0
    %3621 = vmatpush1.msra.mxu0 %v1946
    %3622 = vmatprep.subr.mxu0 0.0
    %3623 = vmatpush1.msra.mxu0 %v1947
    %3624 = vmatprep.subr.mxu0 0.0
    %3625 = vmatpush1.msra.mxu0 %v1948
    %3626 = vmatprep.subr.mxu0 0.0
    %3627 = vmatpush1.msra.mxu0 %v1949
    %3628 = vmatprep.subr.mxu0 0.0
    %3629 = vmatpush1.msra.mxu0 %v1950
    %3630 = vmatprep.subr.mxu0 0.0
    %3631 = vmatpush1.msra.mxu0 %v1951
    %3632 = vmatprep.subr.mxu0 0.0
    %3633 = vmatpush1.msra.mxu0 %v1952
    %3634 = vmatprep.subr.mxu0 0.0
    %3635 = vmatpush1.msra.mxu0 %v1953
    %3636 = vmatprep.subr.mxu0 0.0
    %3637 = vmatpush1.msra.mxu0 %v1954
    %3638 = vmatprep.subr.mxu0 0.0
    %3639 = vmatpush1.msra.mxu0 %v1955
    %3640 = vmatprep.subr.mxu0 0.0
    %3641 = vmatpush1.msra.mxu0 %v1956
    %3642 = vmatprep.subr.mxu0 0.0
    %3643 = vmatpush1.msra.mxu0 %v1957
    %3644 = vmatprep.subr.mxu0 0.0
    %3645 = vmatpush1.msra.mxu0 %v1958
    %3646 = vmatprep.subr.mxu0 0.0
    %3647 = vmatpush1.msra.mxu0 0.0
    %3648 = vmatprep.subr.mxu0 0.0
    %3649 = vmatpush1.msra.mxu0 0.0
    %3650 = vmatprep.subr.mxu0 0.0
    %3651 = vmatpush1.msra.mxu0 0.0
    %3652 = vmatprep.subr.mxu0 0.0
    %3653 = vmatpush1.msra.mxu0 0.0
    %3654 = vmatprep.subr.mxu0 0.0
    %3655 = vmatpush1.msra.mxu0 0.0
    %3656 = vmatprep.subr.mxu0 0.0
    %3657 = vmatpush1.msra.mxu0 0.0
    %3658 = vmatprep.subr.mxu0 0.0
    %3659 = vmatpush1.msra.mxu0 0.0
    %3660 = vmatprep.subr.mxu0 0.0
    %3661 = vmatpush1.msra.mxu0 0.0
    %3662 = vmatprep.subr.mxu0 0.0
    %3663 = vmatpush1.msra.mxu0 0.0
    %3664 = vmatprep.subr.mxu0 0.0
    %3665 = vmatpush1.msra.mxu0 0.0
    %3666 = vmatprep.subr.mxu0 0.0
    %3667 = vmatpush1.msra.mxu0 0.0
    %3668 = vmatprep.subr.mxu0 0.0
    %3669 = vmatpush1.msra.mxu0 0.0
    %3670 = vmatprep.subr.mxu0 0.0
    %3671 = vmatpush1.msra.mxu0 0.0
    %3672 = vmatprep.subr.mxu0 0.0
    %3673 = vmatpush1.msra.mxu0 0.0
    %3674 = vmatprep.subr.mxu0 0.0
    %3675 = vmatpush1.msra.mxu0 0.0
    %3676 = vmatprep.subr.mxu0 0.0
    %3677 = vmatpush1.msra.mxu0 0.0
    %3678 = vmatprep.mubr.f32.mxu0 0.0
    %3679 = vmatmul.mubr.f32.gmra.mrb[0].mxu0 %v3612
    %v3680 = vpop.f32.mrb[0].mxu0
    %v3681 = vadd.f32 %v1963, %v3680
    %v3682 = vpop.f32.mrb[0].mxu0
    %3683 = vmatprep.mubr.f32.mxu0 0.0
    %3684 = vmatmul.mubr.f32.gmra.mrb[0].mxu0 %v3613
    %v3685 = vpop.f32.mrb[0].mxu0
    %v3686 = vadd.f32 %v1963, %v3685
    %v3687 = vpop.f32.mrb[0].mxu0
    %3688 = vdwg.mxu0
    %v3689 = vadd.f32 %v3681, %v3521
    %v3690 = vadd.f32 %v3686, %v3522
    %v3691 = vsel %vm45, %v3689, 0.0
    %3692 = vadd.xlane.f32.xlu0 %v3691
    %v3693 = vpop.xlane.xlu0 %3692
    %v3694 = vsel %vm45, %v3690, 0.0
    %3695 = vadd.xlane.f32.xlu0 %v3694
    %v3696 = vpop.xlane.xlu0 %3695
    %v3697 = vmul.f32 %v3693, %v52
    %v3698 = vmul.f32 %v3696, %v52
    %v3699 = vsub.f32 %v3689, %v3697
    %v3700 = vsub.f32 %v3690, %v3698
    %v3701 = vmul.f32 %v3699, %v3699
    %v3702 = vmul.f32 %v3700, %v3700
    %v3703 = vsel %vm45, %v3701, 0.0
    %3704 = vadd.xlane.f32.xlu0 %v3703
    %v3705 = vpop.xlane.xlu0 %3704
    %v3706 = vsel %vm45, %v3702, 0.0
    %3707 = vadd.xlane.f32.xlu0 %v3706
    %v3708 = vpop.xlane.xlu0 %3707
    %v3709 = vmul.f32 %v3705, %v52
    %v3710 = vmul.f32 %v3708, %v52
    %v3711 = vadd.f32 %v3709, 1e-12
    %v3712 = vadd.f32 %v3710, 1e-12
    %v3713 = vrsqrt.pop %v3711
    %v3714 = vrsqrt.pop %v3712
    %v3715 = vmul.f32 %v3699, %v3713
    %v3716 = vmul.f32 %v3700, %v3714
    %v3717 = vmul.f32 %v3715, %v1966
    %v3718 = vmul.f32 %v3716, %v1966
    %v3719 = vadd.f32 %v3717, %v1967
    %v3720 = vadd.f32 %v3718, %v1967
    %v3722 = vrot.slane %v3720, 7
    %vm3724 = vcmask 1040384
    %v3725 = vsel %vm3724, %v3719, %v3722
    %v3726 = vld [vmem:[%s4] sm:$0xff]
    %v3727 = vld [vmem:[%s4 + $0x8] sm:$0xff]
    %v3728 = vld [vmem:[%s4 + $0x10] sm:$0xff]
    %v3729 = vld [vmem:[%s4 + $0x18] sm:$0xff]
    %v3730 = vld [vmem:[%s4 + $0x20] sm:$0xff]
    %v3731 = vld [vmem:[%s4 + $0x28] sm:$0xff]
    %v3732 = vld [vmem:[%s4 + $0x30] sm:$0xff]
    %v3733 = vld [vmem:[%s4 + $0x38] sm:$0xff]
    %v3734 = vld [vmem:[%s4 + $0x82] sm:$0x1]
    %v3735 = vld [vmem:[%s4 + $0x40] sm:$0xff]
    %v3736 = vld [vmem:[%s4 + $0x48] sm:$0xff]
    %v3737 = vld [vmem:[%s4 + $0x50] sm:$0xff]
    %v3738 = vld [vmem:[%s4 + $0x58] sm:$0xff]
    %v3739 = vld [vmem:[%s4 + $0x60] sm:$0xff]
    %v3740 = vld [vmem:[%s4 + $0x68] sm:$0xff]
    %v3741 = vld [vmem:[%s4 + $0x70] sm:$0xff]
    %v3742 = vld [vmem:[%s4 + $0x78] sm:$0xff]
    %v3743 = vld [vmem:[%s4 + $0x83] sm:$0x1]
    %v3744 = vlaneseq
    %v3745 = vshrl.u32 %v3744, 7
    %v3746 = vsub.s32 0, %v3745
    %v3747 = vrot.slane %v3734, %v3746
    %v3749 = vsel %vm45, %v3725, 0
    %3751 = vmatprep.subr.mxu0 0.0
    %3752 = vmatpush1.msra.mxu0 %v3726
    %3753 = vmatprep.subr.mxu0 0.0
    %3754 = vmatpush1.msra.mxu0 %v3727
    %3755 = vmatprep.subr.mxu0 0.0
    %3756 = vmatpush1.msra.mxu0 %v3728
    %3757 = vmatprep.subr.mxu0 0.0
    %3758 = vmatpush1.msra.mxu0 %v3729
    %3759 = vmatprep.subr.mxu0 0.0
    %3760 = vmatpush1.msra.mxu0 %v3730
    %3761 = vmatprep.subr.mxu0 0.0
    %3762 = vmatpush1.msra.mxu0 %v3731
    %3763 = vmatprep.subr.mxu0 0.0
    %3764 = vmatpush1.msra.mxu0 %v3732
    %3765 = vmatprep.subr.mxu0 0.0
    %3766 = vmatpush1.msra.mxu0 %v3733
    %3767 = vmatprep.subr.mxu0 0.0
    %3768 = vmatpush1.msra.mxu0 0.0
    %3769 = vmatprep.subr.mxu0 0.0
    %3770 = vmatpush1.msra.mxu0 0.0
    %3771 = vmatprep.subr.mxu0 0.0
    %3772 = vmatpush1.msra.mxu0 0.0
    %3773 = vmatprep.subr.mxu0 0.0
    %3774 = vmatpush1.msra.mxu0 0.0
    %3775 = vmatprep.subr.mxu0 0.0
    %3776 = vmatpush1.msra.mxu0 0.0
    %3777 = vmatprep.subr.mxu0 0.0
    %3778 = vmatpush1.msra.mxu0 0.0
    %3779 = vmatprep.subr.mxu0 0.0
    %3780 = vmatpush1.msra.mxu0 0.0
    %3781 = vmatprep.subr.mxu0 0.0
    %3782 = vmatpush1.msra.mxu0 0.0
    %3783 = vmatprep.subr.mxu0 0.0
    %3784 = vmatpush1.msra.mxu0 0.0
    %3785 = vmatprep.subr.mxu0 0.0
    %3786 = vmatpush1.msra.mxu0 0.0
    %3787 = vmatprep.subr.mxu0 0.0
    %3788 = vmatpush1.msra.mxu0 0.0
    %3789 = vmatprep.subr.mxu0 0.0
    %3790 = vmatpush1.msra.mxu0 0.0
    %3791 = vmatprep.subr.mxu0 0.0
    %3792 = vmatpush1.msra.mxu0 0.0
    %3793 = vmatprep.subr.mxu0 0.0
    %3794 = vmatpush1.msra.mxu0 0.0
    %3795 = vmatprep.subr.mxu0 0.0
    %3796 = vmatpush1.msra.mxu0 0.0
    %3797 = vmatprep.subr.mxu0 0.0
    %3798 = vmatpush1.msra.mxu0 0.0
    %3799 = vmatprep.subr.mxu0 0.0
    %3800 = vmatpush1.msra.mxu0 0.0
    %3801 = vmatprep.subr.mxu0 0.0
    %3802 = vmatpush1.msra.mxu0 0.0
    %3803 = vmatprep.subr.mxu0 0.0
    %3804 = vmatpush1.msra.mxu0 0.0
    %3805 = vmatprep.subr.mxu0 0.0
    %3806 = vmatpush1.msra.mxu0 0.0
    %3807 = vmatprep.subr.mxu0 0.0
    %3808 = vmatpush1.msra.mxu0 0.0
    %3809 = vmatprep.subr.mxu0 0.0
    %3810 = vmatpush1.msra.mxu0 0.0
    %3811 = vmatprep.subr.mxu0 0.0
    %3812 = vmatpush1.msra.mxu0 0.0
    %3813 = vmatprep.subr.mxu0 0.0
    %3814 = vmatpush1.msra.mxu0 0.0
    %3815 = vmatprep.mubr.f32.mxu0 0.0
    %3816 = vmatmul.mubr.f32.gmra.mrb[0].mxu0 %v3749
    %v3817 = vpop.f32.mrb[0].mxu0
    %v3818 = vadd.f32 %v3747, %v3817
    %v3819 = vpop.f32.mrb[0].mxu0
    %3820 = vdwg.mxu0
    %v3821 = vmax.f32 %v3818, 0.0
    %v3822 = vlaneseq
    %v3823 = vshrl.u32 %v3822, 7
    %v3824 = vsub.s32 0, %v3823
    %v3825 = vrot.slane %v3743, %v3824
    %v3827 = vsel %vm45, %v3821, 0
    %3829 = vmatprep.subr.mxu0 0.0
    %3830 = vmatpush1.msra.mxu0 %v3735
    %3831 = vmatprep.subr.mxu0 0.0
    %3832 = vmatpush1.msra.mxu0 %v3736
    %3833 = vmatprep.subr.mxu0 0.0
    %3834 = vmatpush1.msra.mxu0 %v3737
    %3835 = vmatprep.subr.mxu0 0.0
    %3836 = vmatpush1.msra.mxu0 %v3738
    %3837 = vmatprep.subr.mxu0 0.0
    %3838 = vmatpush1.msra.mxu0 %v3739
    %3839 = vmatprep.subr.mxu0 0.0
    %3840 = vmatpush1.msra.mxu0 %v3740
    %3841 = vmatprep.subr.mxu0 0.0
    %3842 = vmatpush1.msra.mxu0 %v3741
    %3843 = vmatprep.subr.mxu0 0.0
    %3844 = vmatpush1.msra.mxu0 %v3742
    %3845 = vmatprep.subr.mxu0 0.0
    %3846 = vmatpush1.msra.mxu0 0.0
    %3847 = vmatprep.subr.mxu0 0.0
    %3848 = vmatpush1.msra.mxu0 0.0
    %3849 = vmatprep.subr.mxu0 0.0
    %3850 = vmatpush1.msra.mxu0 0.0
    %3851 = vmatprep.subr.mxu0 0.0
    %3852 = vmatpush1.msra.mxu0 0.0
    %3853 = vmatprep.subr.mxu0 0.0
    %3854 = vmatpush1.msra.mxu0 0.0
    %3855 = vmatprep.subr.mxu0 0.0
    %3856 = vmatpush1.msra.mxu0 0.0
    %3857 = vmatprep.subr.mxu0 0.0
    %3858 = vmatpush1.msra.mxu0 0.0
    %3859 = vmatprep.subr.mxu0 0.0
    %3860 = vmatpush1.msra.mxu0 0.0
    %3861 = vmatprep.subr.mxu0 0.0
    %3862 = vmatpush1.msra.mxu0 0.0
    %3863 = vmatprep.subr.mxu0 0.0
    %3864 = vmatpush1.msra.mxu0 0.0
    %3865 = vmatprep.subr.mxu0 0.0
    %3866 = vmatpush1.msra.mxu0 0.0
    %3867 = vmatprep.subr.mxu0 0.0
    %3868 = vmatpush1.msra.mxu0 0.0
    %3869 = vmatprep.subr.mxu0 0.0
    %3870 = vmatpush1.msra.mxu0 0.0
    %3871 = vmatprep.subr.mxu0 0.0
    %3872 = vmatpush1.msra.mxu0 0.0
    %3873 = vmatprep.subr.mxu0 0.0
    %3874 = vmatpush1.msra.mxu0 0.0
    %3875 = vmatprep.subr.mxu0 0.0
    %3876 = vmatpush1.msra.mxu0 0.0
    %3877 = vmatprep.subr.mxu0 0.0
    %3878 = vmatpush1.msra.mxu0 0.0
    %3879 = vmatprep.subr.mxu0 0.0
    %3880 = vmatpush1.msra.mxu0 0.0
    %3881 = vmatprep.subr.mxu0 0.0
    %3882 = vmatpush1.msra.mxu0 0.0
    %3883 = vmatprep.subr.mxu0 0.0
    %3884 = vmatpush1.msra.mxu0 0.0
    %3885 = vmatprep.subr.mxu0 0.0
    %3886 = vmatpush1.msra.mxu0 0.0
    %3887 = vmatprep.subr.mxu0 0.0
    %3888 = vmatpush1.msra.mxu0 0.0
    %3889 = vmatprep.subr.mxu0 0.0
    %3890 = vmatpush1.msra.mxu0 0.0
    %3891 = vmatprep.subr.mxu0 0.0
    %3892 = vmatpush1.msra.mxu0 0.0
    %3893 = vmatprep.mubr.f32.mxu0 0.0
    %3894 = vmatmul.mubr.f32.gmra.mrb[0].mxu0 %v3827
    %v3895 = vpop.f32.mrb[0].mxu0
    %v3896 = vadd.f32 %v3825, %v3895
    %v3897 = vpop.f32.mrb[0].mxu0
    %3898 = vdwg.mxu0
    %3899 = vst [vmem:[#allocation5] sm:$0x3] %v3896
    // Predicated region
    $region26: #{distilbert_router_forward.1} parent=1 // pred_check
      _
    $region27: #{distilbert_router_forward.1} parent=1 // pred_check_branch
      %3901 = sbr.rel (0) target = $region29
    $region28: #{distilbert_router_forward.1} parent=1 // pred_region
      %s3903 = ssub.s32 32, 32
      %3904 = vsyncadd [#allocation4], %s3903
      %s3906 = sshll.u32 [#allocation5], 4
      %s3907 = int_to_ptr.vmem [resolvable:$true] %s3906
      %3909 = dma.vmem_to_hbm [thread:$0]  %s3907, 32, %s5, [#allocation4]
    $region29: #{distilbert_router_forward.1} parent=1 // pred_fallthru
      _
    // Predicated region
    $region30: #{distilbert_router_forward.1} parent=1 // pred_check
      _
    $region31: #{distilbert_router_forward.1} parent=1 // pred_check_branch
      %3911 = sbr.rel (0) target = $region33
    $region32: #{distilbert_router_forward.1} parent=1 // pred_region
      %3912 = dma.done [#allocation4], 32
    $region33: #{distilbert_router_forward.1} parent=1 // pred_fallthru
      _
    %3913 = vsyncpa [#allocation3], 1
    %3914 = vsyncpa [#allocation4], 1

</llo_original>
